<compile_context>
chip_gen: v7x
topology: tpu7x:2x2x1
jax: 0.10.0
libtpu: 0.0.40
codegen_flags: <defaults>
</compile_context>

<pallas_src>
import jax
import jax.numpy as jnp
from jax import lax
from jax.experimental import pallas as pl
from jax.experimental.pallas import tpu as pltpu


_UNROLL_MAX_T = 32  # fully unroll the recurrence for small static T
_LANE = 128


def _round_up(x, m):
    return ((x + m - 1) // m) * m


def _pad2(a, rows, cols):
    r, c = a.shape
    if r == rows and c == cols:
        return a
    return jnp.pad(a, ((0, rows - r), (0, cols - c)))


def _pad1(a, n):
    if a.shape[0] == n:
        return a
    return jnp.pad(a, ((0, n - a.shape[0]),))


def _param_spec(shape):
    """Grid-invariant parameter BlockSpec; single-buffered when supported."""
    nd = len(shape)
    idx = lambda i, _nd=nd: (0,) * _nd
    try:
        return pl.BlockSpec(shape, idx, pipeline_mode=pl.Buffered(1))
    except TypeError:  # older API without pipeline_mode / Buffered
        return pl.BlockSpec(shape, idx)


def _make_kernel(num_layers, T, b_tile, Hp, compute_dtype, unroll_t):
    """Kernel closure over static problem sizes."""
    n_w = 4  # refs per GRU layer: w_i (F,3Hp), w_h (Hp,3Hp), b_proj, b_hn

    def kernel(*refs):
        # ---- unpack (inputs..., outputs..., scratch...) --------------------
        x_ref = refs[0]                                     # (T*b_tile, F)
        layer_refs = refs[1:1 + n_w * num_layers]
        lin_w_ref = refs[1 + n_w * num_layers]              # (Hp, OUTp) bf16
        lin_b_ref = refs[2 + n_w * num_layers]              # (1, OUTp)  f32
        out_ref = refs[3 + n_w * num_layers]                # (b_tile, OUTp)
        gi_ref = refs[4 + n_w * num_layers]                 # (T*b_tile, 3Hp) f32
        seq_ref = refs[5 + n_w * num_layers] if num_layers > 1 else None

        def run_layer(inp2d, w_i_ref, w_h_ref, b_proj_ref, b_hn_ref, write_seq):
            # Hoisted, fused input projection: one big matmul over all T time
            # steps and all 3 gates at once (fills the MXU instead of 3*T tiny
            # latency-bound dots on the serial path).  Biases pre-folded.
            gi_ref[...] = (jnp.dot(inp2d, w_i_ref[...],
                                   preferred_element_type=jnp.float32)
                           + b_proj_ref[...])

            # Keep the layer's recurrent weights resident for the whole loop.
            w_h = w_h_ref[...]                              # (Hp, 3Hp) bf16
            b_hn = b_hn_ref[...]                            # (1, Hp)   f32

            def step(row, h_f32, h_lp):
                # One contiguous lane-dense load of all 3 precomputed gates.
                g = gi_ref[pl.ds(row, b_tile), :]           # (b_tile, 3Hp)
                # One fused recurrent matmul per step (was three).
                gh = jnp.dot(h_lp, w_h, preferred_element_type=jnp.float32)
                r = jax.nn.sigmoid(g[:, :Hp] + gh[:, :Hp])
                z = jax.nn.sigmoid(g[:, Hp:2 * Hp] + gh[:, Hp:2 * Hp])
                n = jnp.tanh(g[:, 2 * Hp:] + r * (gh[:, 2 * Hp:] + b_hn))
                h_new = (1.0 - z) * n + z * h_f32
                h_new_lp = h_new.astype(compute_dtype)
                if write_seq:   # static python bool (only non-top layers)
                    seq_ref[pl.ds(row, b_tile), :] = h_new_lp
                return h_new, h_new_lp

            h0 = jnp.zeros((b_tile, Hp), jnp.float32)       # PyTorch h_0 = 0
            h0_lp = jnp.zeros((b_tile, Hp), compute_dtype)
            if T <= unroll_t:
                # Fully unrolled: static row offsets, maximum LLO visibility.
                h, h_lp = h0, h0_lp
                for t in range(T):
                    h, h_lp = step(t * b_tile, h, h_lp)
            else:
                def body(t, carry):
                    h, h_lp = carry
                    return step(pl.multiple_of(t * b_tile, b_tile), h, h_lp)
                h, h_lp = lax.fori_loop(0, T, body, (h0, h0_lp), unroll=2)
            return h_lp

        # ---- layer stack ----------------------------------------------------
        h_lp = None
        for layer in range(num_layers):
            w_i_ref, w_h_ref, b_proj_ref, b_hn_ref = \
                layer_refs[n_w * layer:n_w * (layer + 1)]
            if layer == 0:
                inp2d = x_ref[...].astype(compute_dtype)    # already 2D slab
            else:
                inp2d = seq_ref[...]
            h_lp = run_layer(inp2d, w_i_ref, w_h_ref, b_proj_ref, b_hn_ref,
                             write_seq=(layer < num_layers - 1))

        # Head on the last time step's hidden state (feature[:, -1, :]).
        # Output lanes padded to a multiple of 128 -> unmasked vst.
        out_ref[...] = (jnp.dot(h_lp, lin_w_ref[...],
                                preferred_element_type=jnp.float32)
                        + lin_b_ref[...]).astype(out_ref.dtype)

    return kernel


def temporal_encoder_pallas(x, layers, lin_w, lin_b, *, b_tile=None,
                            compute_dtype=jnp.bfloat16, unroll_t=_UNROLL_MAX_T):
    """GRU temporal encoder + last-step linear head.

    x:      (B, T, input_size) batch-first, like the PyTorch module's input.
    layers: list of (w_ih (3H,F), w_hh (3H,H), b_ih (3H,), b_hh (3H,)) per
            GRU layer, PyTorch shapes / [r, z, n] gate order.
    lin_w:  (OUT, H), lin_b: (OUT,)  head weights.
    """
    B, T, I = x.shape
    OUT, H = lin_w.shape
    num_layers = len(layers)

    Hp = _round_up(H, _LANE)        # lane-padded hidden dim
    OUTp = _round_up(OUT, _LANE)    # lane-padded head output dim

    # ---- generation-aware batch tile ----------------------------------------
    if b_tile is None:
        kind = ""
        try:
            kind = jax.devices()[0].device_kind.lower()
        except Exception:
            pass
        two_tc = "v7" in kind       # v7x has 2 TensorCores per chip
        if two_tc and B % 2 == 0 and (B // 2) % 8 == 0:
            b_tile = B // 2         # one batch tile per TensorCore
        else:
            b_tile = B              # single TC: grid is a serial loop, keep 1
        # Only split huge batches (beyond MXU row capacity); splitting further
        # on a single TC just adds ~0.35us/step of serial grid overhead.
        while b_tile > 256 and b_tile % 2 == 0 and (b_tile // 2) % 8 == 0:
            b_tile //= 2
    assert B % b_tile == 0, "batch must be divisible by the batch tile"
    num_tiles = B // b_tile
    if num_tiles > 1:
        assert b_tile % 8 == 0, "batch tile must be sublane-aligned"

    # ---- input prep (host-side rearrange; no in-kernel reshape) -------------
    x_c = x.astype(compute_dtype)
    x_tbi = jnp.swapaxes(x_c, 0, 1)                        # (T, B, F) time-major
    if num_tiles == 1:
        x_arg = x_tbi.reshape(T * B, I)                    # (T*B, F) 2D slab
        x_spec = pl.BlockSpec((T * B, I), lambda i: (0, 0))
    else:
        x_arg = (x_tbi.reshape(T, num_tiles, b_tile, I)
                 .transpose(1, 0, 2, 3)
                 .reshape(num_tiles, T * b_tile, I))       # per-tile 2D slabs
        x_spec = pl.BlockSpec((None, T * b_tile, I), lambda i: (i, 0, 0))

    args = [x_arg]
    in_specs = [x_spec]

    def add_param(a):
        args.append(a)
        in_specs.append(_param_spec(a.shape))

    # ---- fused, gate-concatenated, lane-padded, low-precision weights -------
    for li, (w_ih, w_hh, b_ih, b_hh) in enumerate(layers):
        f_in = w_ih.shape[1]
        f_in_p = f_in if li == 0 else Hp                   # layer>0 reads padded seq
        w_i = jnp.concatenate(
            [_pad2(w_ih[g * H:(g + 1) * H, :].T, f_in_p, Hp) for g in range(3)],
            axis=1)                                        # (F_in, 3Hp)
        w_h = jnp.concatenate(
            [_pad2(w_hh[g * H:(g + 1) * H, :].T, Hp, Hp) for g in range(3)],
            axis=1)                                        # (Hp, 3Hp)
        add_param(w_i.astype(compute_dtype))
        add_param(w_h.astype(compute_dtype))
        # Bias folding: r/z gates get (b_ih + b_hh); n gate folds only b_in
        # (b_hn stays on the recurrent path because it is gated by r).
        b_proj = jnp.concatenate(
            [_pad1(b_ih[0:H] + b_hh[0:H], Hp),
             _pad1(b_ih[H:2 * H] + b_hh[H:2 * H], Hp),
             _pad1(b_ih[2 * H:3 * H], Hp)]).reshape(1, 3 * Hp)
        add_param(b_proj.astype(jnp.float32))
        add_param(_pad1(b_hh[2 * H:3 * H], Hp).reshape(1, Hp).astype(jnp.float32))

    add_param(_pad2(lin_w.T, Hp, OUTp).astype(compute_dtype))    # (Hp, OUTp)
    add_param(_pad1(lin_b, OUTp).reshape(1, OUTp).astype(jnp.float32))

    # ---- scratch -------------------------------------------------------------
    scratch_shapes = [pltpu.VMEM((T * b_tile, 3 * Hp), jnp.float32)]  # fused gi
    if num_layers > 1:
        scratch_shapes.append(pltpu.VMEM((T * b_tile, Hp), compute_dtype))

    # ---- VMEM budget: params (single-buffered) + IO blocks + scratch --------
    cd = jnp.dtype(compute_dtype).itemsize
    need = sum(int(a.size) * a.dtype.itemsize for a in args[1:])
    need += 2 * (T * b_tile * I * cd + b_tile * OUTp * 4)
    need += T * b_tile * 3 * Hp * 4
    if num_layers > 1:
        need += T * b_tile * Hp * cd
    try:
        cap = int(pltpu.get_tpu_info().vmem_capacity_bytes)
    except Exception:
        cap = 64 << 20            # conservative (v7x physical VMEM per TC)
    vmem_limit = max(int(need) + (8 << 20), 32 << 20)
    vmem_limit = min(vmem_limit, int(cap * 0.85))

    kernel = _make_kernel(num_layers, T, b_tile, Hp, compute_dtype, unroll_t)

    out_padded = pl.pallas_call(
        kernel,
        out_shape=jax.ShapeDtypeStruct((B, OUTp), jnp.float32),
        grid=(num_tiles,),
        in_specs=in_specs,
        out_specs=pl.BlockSpec((b_tile, OUTp), lambda i: (i, 0)),
        scratch_shapes=scratch_shapes,
        compiler_params=pltpu.CompilerParams(
            dimension_semantics=("parallel",),
            vmem_limit_bytes=int(vmem_limit)),
    )(*args)
    return out_padded[:, :OUT]


# -----------------------------------------------------------------------------
# Deterministic parameter init (PyTorch GRU/Linear uniform(-1/sqrt(H), 1/sqrt(H)))
# -----------------------------------------------------------------------------
def init_params(key, input_size, hidden_size, out_size, num_layers):
    scale = 1.0 / (hidden_size ** 0.5)
    layers = []
    for layer in range(num_layers):
        in_l = input_size if layer == 0 else hidden_size
        key, k1, k2, k3, k4 = jax.random.split(key, 5)
        w_ih = jax.random.uniform(k1, (3 * hidden_size, in_l), jnp.float32, -scale, scale)
        w_hh = jax.random.uniform(k2, (3 * hidden_size, hidden_size), jnp.float32, -scale, scale)
        b_ih = jax.random.uniform(k3, (3 * hidden_size,), jnp.float32, -scale, scale)
        b_hh = jax.random.uniform(k4, (3 * hidden_size,), jnp.float32, -scale, scale)
        layers.append((w_ih, w_hh, b_ih, b_hh))
    key, k1, k2 = jax.random.split(key, 3)
    lin_w = jax.random.uniform(k1, (out_size, hidden_size), jnp.float32, -scale, scale)
    lin_b = jax.random.uniform(k2, (out_size,), jnp.float32, -scale, scale)
    return layers, lin_w, lin_b


# -----------------------------------------------------------------------------
# Pure-JAX reference mirroring torch.nn.GRU (+ Linear on the last step).
# `dot_dtype` lets us mirror the kernel's bf16-matmul / f32-accumulate policy.
# -----------------------------------------------------------------------------
def gru_head_ref(x, layers, lin_w, lin_b, dot_dtype=jnp.float32):
    def cdot(a, b):
        return jnp.dot(a.astype(dot_dtype), b.astype(dot_dtype),
                       preferred_element_type=jnp.float32)

    B = x.shape[0]
    seq = jnp.swapaxes(x, 0, 1)                        # time-major, like the module
    for (w_ih, w_hh, b_ih, b_hh) in layers:
        H = w_hh.shape[1]

        def step(h, x_t, w_ih=w_ih, w_hh=w_hh, b_ih=b_ih, b_hh=b_hh, H=H):
            gi = cdot(x_t, w_ih.T) + b_ih
            gh = cdot(h, w_hh.T) + b_hh
            r = jax.nn.sigmoid(gi[:, :H] + gh[:, :H])
            z = jax.nn.sigmoid(gi[:, H:2 * H] + gh[:, H:2 * H])
            n = jnp.tanh(gi[:, 2 * H:] + r * gh[:, 2 * H:])
            h_new = (1.0 - z) * n + z * h
            return h_new, h_new

        _, seq = lax.scan(step, jnp.zeros((B, H), jnp.float32), seq)
    return cdot(seq[-1], lin_w.T) + lin_b


# TODO(synk): VPoser pose encoder (vposer_model.VPoser) is an external VAE; its
#             output features are taken directly as the kernel's input sequence.
# TODO(synk): spin.Regressor (iterative SMPL regression + SMPL body model) has
#             no clean Pallas equivalent; a linear head on the last-time-step
#             feature stands in for its input projection.
# TODO(synk): TemporalEncoder's bidirectional / add_linear / residual branches
#             are not implemented (module defaults: bidirectional=False,
#             add_linear=False; residual only fires when feature dim == 2048).

if __name__ == "__main__":
    # Small shapes consistent with the module's forward:
    #   batch=16, seq=8, encoder feature dim=32, GRU hidden=32, 2 layers, head out=16.
    B, T = 16, 8
    INPUT_SIZE, HIDDEN_SIZE, OUT_SIZE, NUM_LAYERS = 32, 32, 16, 2

    key = jax.random.PRNGKey(0)
    key, kx = jax.random.split(key)
    x = jax.random.normal(kx, (B, T, INPUT_SIZE), jnp.float32)

    layers, lin_w, lin_b = init_params(key, INPUT_SIZE, HIDDEN_SIZE, OUT_SIZE, NUM_LAYERS)

    y = temporal_encoder_pallas(x, layers, lin_w, lin_b)
    y = jax.block_until_ready(y)
    assert y.shape == (B, OUT_SIZE)

    # Tight check vs. a reference using the kernel's precision policy
    # (bf16 matmul operands, f32 accumulation and gate math).
    y_ref_bf16 = gru_head_ref(x, layers, lin_w, lin_b, dot_dtype=jnp.bfloat16)
    assert jnp.allclose(y, y_ref_bf16, rtol=2e-3, atol=2e-3), \
        "Pallas kernel mismatch vs matched-precision JAX reference"

    # Loose sanity bound vs. the full-f32 (PyTorch-semantics) reference.
    y_ref_f32 = gru_head_ref(x, layers, lin_w, lin_b, dot_dtype=jnp.float32)
    assert jnp.max(jnp.abs(y - y_ref_f32)) < 1e-1, \
        "excessive bf16 drift vs f32 reference"

    print("KERNEL_OK")
</pallas_src>

<mosaic_0001>
module attributes {stable_mosaic.version = 11 : i64} {
  func.func @kernel(%arg0: i32, %arg1: memref<128x32xbf16, #tpu.memory_space<vmem>>, %arg2: memref<32x384xbf16, #tpu.memory_space<vmem>>, %arg3: memref<128x384xbf16, #tpu.memory_space<vmem>>, %arg4: memref<1x384xf32, #tpu.memory_space<vmem>>, %arg5: memref<1x128xf32, #tpu.memory_space<vmem>>, %arg6: memref<128x384xbf16, #tpu.memory_space<vmem>>, %arg7: memref<128x384xbf16, #tpu.memory_space<vmem>>, %arg8: memref<1x384xf32, #tpu.memory_space<vmem>>, %arg9: memref<1x128xf32, #tpu.memory_space<vmem>>, %arg10: memref<128x128xbf16, #tpu.memory_space<vmem>>, %arg11: memref<1x128xf32, #tpu.memory_space<vmem>>, %arg12: memref<16x128xf32, #tpu.memory_space<vmem>>, %arg13: memref<128x384xf32, #tpu.memory_space<vmem>>, %arg14: memref<128x128xbf16, #tpu.memory_space<vmem>>) attributes {dimension_semantics = [#tpu.dimension_semantics<parallel>], iteration_bounds = array<i64: 1>, scalar_prefetch = 0 : i64, scratch_operands = 2 : i64, tpu.core_type = #tpu.core_type<tc>, window_params = [{pipeline_mode = #tpu.pipeline_mode<synchronous>, transform_indices = @transform_0, window_bounds = array<i64: 128, 32>}, {pipeline_mode = #tpu.pipeline_mode<synchronous>, transform_indices = @transform_1, window_bounds = array<i64: 32, 384>}, {pipeline_mode = #tpu.pipeline_mode<synchronous>, transform_indices = @transform_2, window_bounds = array<i64: 128, 384>}, {pipeline_mode = #tpu.pipeline_mode<synchronous>, transform_indices = @transform_3, window_bounds = array<i64: 1, 384>}, {pipeline_mode = #tpu.pipeline_mode<synchronous>, transform_indices = @transform_4, window_bounds = array<i64: 1, 128>}, {pipeline_mode = #tpu.pipeline_mode<synchronous>, transform_indices = @transform_5, window_bounds = array<i64: 128, 384>}, {pipeline_mode = #tpu.pipeline_mode<synchronous>, transform_indices = @transform_6, window_bounds = array<i64: 128, 384>}, {pipeline_mode = #tpu.pipeline_mode<synchronous>, transform_indices = @transform_7, window_bounds = array<i64: 1, 384>}, {pipeline_mode = #tpu.pipeline_mode<synchronous>, transform_indices = @transform_8, window_bounds = array<i64: 1, 128>}, {pipeline_mode = #tpu.pipeline_mode<synchronous>, transform_indices = @transform_9, window_bounds = array<i64: 128, 128>}, {pipeline_mode = #tpu.pipeline_mode<synchronous>, transform_indices = @transform_10, window_bounds = array<i64: 1, 128>}, {transform_indices = @transform_11, window_bounds = array<i64: 16, 128>}]} {
    %c0 = arith.constant 0 : index
    %c0_0 = arith.constant 0 : index
    %0 = vector.load %arg1[%c0, %c0_0] : memref<128x32xbf16, #tpu.memory_space<vmem>>, vector<128x32xbf16>
    %c0_1 = arith.constant 0 : index
    %c0_2 = arith.constant 0 : index
    %1 = vector.load %arg2[%c0_1, %c0_2] : memref<32x384xbf16, #tpu.memory_space<vmem>>, vector<32x384xbf16>
    %cst = arith.constant dense<0.000000e+00> : vector<128x384xf32>
    %2 = tpu.matmul %0, %1, %cst {dimension_numbers = #tpu.dot_dimension_numbers<[1], [0], [0], [1], [0, 0, 1, 1], [], []>} : vector<128x32xbf16>, vector<32x384xbf16>, vector<128x384xf32> -> vector<128x384xf32>
    %c0_3 = arith.constant 0 : index
    %c0_4 = arith.constant 0 : index
    %3 = vector.load %arg4[%c0_3, %c0_4] : memref<1x384xf32, #tpu.memory_space<vmem>>, vector<1x384xf32>
    %4 = vector.broadcast %3 : vector<1x384xf32> to vector<128x384xf32>
    %5 = arith.addf %2, %4 : vector<128x384xf32>
    %c0_5 = arith.constant 0 : index
    %c0_6 = arith.constant 0 : index
    %6 = vector.load %arg13[%c0_5, %c0_6] : memref<128x384xf32, #tpu.memory_space<vmem>>, vector<128x384xf32>
    tpu.vector_store %arg13[%c0_5, %c0_6], %5 {strides = array<i32>} : memref<128x384xf32, #tpu.memory_space<vmem>>, vector<128x384xf32>,
    %c0_7 = arith.constant 0 : index
    %c0_8 = arith.constant 0 : index
    %7 = vector.load %arg3[%c0_7, %c0_8] : memref<128x384xbf16, #tpu.memory_space<vmem>>, vector<128x384xbf16>
    %c0_9 = arith.constant 0 : index
    %c0_10 = arith.constant 0 : index
    %8 = vector.load %arg5[%c0_9, %c0_10] : memref<1x128xf32, #tpu.memory_space<vmem>>, vector<1x128xf32>
    %cst_11 = arith.constant 0.000000e+00 : f32
    %9 = vector.broadcast %cst_11 : f32 to vector<16x128xf32>
    %cst_12 = arith.constant 0.000000e+00 : bf16
    %10 = vector.broadcast %cst_12 : bf16 to vector<16x128xbf16>
    %c0_13 = arith.constant 0 : index
    %c0_14 = arith.constant 0 : index
    %11 = vector.load %arg13[%c0_13, %c0_14] : memref<128x384xf32, #tpu.memory_space<vmem>>, vector<16x384xf32>
    %cst_15 = arith.constant dense<0.000000e+00> : vector<16x384xf32>
    %12 = tpu.matmul %10, %7, %cst_15 {dimension_numbers = #tpu.dot_dimension_numbers<[1], [0], [0], [1], [0, 0, 1, 1], [], []>} : vector<16x128xbf16>, vector<128x384xbf16>, vector<16x384xf32> -> vector<16x384xf32>
    %13 = vector.extract_strided_slice %11 {offsets = [0, 0], sizes = [16, 128], strides = [1, 1]} : vector<16x384xf32> to vector<16x128xf32>
    %14 = vector.extract_strided_slice %12 {offsets = [0, 0], sizes = [16, 128], strides = [1, 1]} : vector<16x384xf32> to vector<16x128xf32>
    %15 = arith.addf %13, %14 : vector<16x128xf32>
    %16 = arith.negf %15 : vector<16x128xf32>
    %17 = math.exp %16 : vector<16x128xf32>
    %cst_16 = arith.constant 1.000000e+00 : f32
    %18 = vector.broadcast %cst_16 : f32 to vector<16x128xf32>
    %19 = arith.addf %18, %17 : vector<16x128xf32>
    %20 = arith.divf %18, %19 : vector<16x128xf32>
    %21 = vector.extract_strided_slice %11 {offsets = [0, 128], sizes = [16, 128], strides = [1, 1]} : vector<16x384xf32> to vector<16x128xf32>
    %22 = vector.extract_strided_slice %12 {offsets = [0, 128], sizes = [16, 128], strides = [1, 1]} : vector<16x384xf32> to vector<16x128xf32>
    %23 = arith.addf %21, %22 : vector<16x128xf32>
    %24 = arith.negf %23 : vector<16x128xf32>
    %25 = math.exp %24 : vector<16x128xf32>
    %cst_17 = arith.constant 1.000000e+00 : f32
    %26 = vector.broadcast %cst_17 : f32 to vector<16x128xf32>
    %27 = arith.addf %26, %25 : vector<16x128xf32>
    %28 = arith.divf %26, %27 : vector<16x128xf32>
    %29 = vector.extract_strided_slice %11 {offsets = [0, 256], sizes = [16, 128], strides = [1, 1]} : vector<16x384xf32> to vector<16x128xf32>
    %30 = vector.extract_strided_slice %12 {offsets = [0, 256], sizes = [16, 128], strides = [1, 1]} : vector<16x384xf32> to vector<16x128xf32>
    %31 = vector.broadcast %8 : vector<1x128xf32> to vector<16x128xf32>
    %32 = arith.addf %30, %31 : vector<16x128xf32>
    %33 = arith.mulf %20, %32 : vector<16x128xf32>
    %34 = arith.addf %29, %33 : vector<16x128xf32>
    %35 = math.tanh %34 : vector<16x128xf32>
    %cst_18 = arith.constant 1.000000e+00 : f32
    %36 = vector.broadcast %cst_18 : f32 to vector<16x128xf32>
    %37 = arith.subf %36, %28 : vector<16x128xf32>
    %38 = arith.mulf %37, %35 : vector<16x128xf32>
    %39 = arith.mulf %28, %9 : vector<16x128xf32>
    %40 = arith.addf %38, %39 : vector<16x128xf32>
    %41 = arith.truncf %40 : vector<16x128xf32> to vector<16x128xbf16>
    %c0_19 = arith.constant 0 : index
    %c0_20 = arith.constant 0 : index
    %42 = vector.load %arg14[%c0_19, %c0_20] : memref<128x128xbf16, #tpu.memory_space<vmem>>, vector<16x128xbf16>
    tpu.vector_store %arg14[%c0_19, %c0_20], %41 {strides = array<i32>} : memref<128x128xbf16, #tpu.memory_space<vmem>>, vector<16x128xbf16>,
    %c16 = arith.constant 16 : index
    %c0_21 = arith.constant 0 : index
    %43 = vector.load %arg13[%c16, %c0_21] : memref<128x384xf32, #tpu.memory_space<vmem>>, vector<16x384xf32>
    %cst_22 = arith.constant dense<0.000000e+00> : vector<16x384xf32>
    %44 = tpu.matmul %41, %7, %cst_22 {dimension_numbers = #tpu.dot_dimension_numbers<[1], [0], [0], [1], [0, 0, 1, 1], [], []>} : vector<16x128xbf16>, vector<128x384xbf16>, vector<16x384xf32> -> vector<16x384xf32>
    %45 = vector.extract_strided_slice %43 {offsets = [0, 0], sizes = [16, 128], strides = [1, 1]} : vector<16x384xf32> to vector<16x128xf32>
    %46 = vector.extract_strided_slice %44 {offsets = [0, 0], sizes = [16, 128], strides = [1, 1]} : vector<16x384xf32> to vector<16x128xf32>
    %47 = arith.addf %45, %46 : vector<16x128xf32>
    %48 = arith.negf %47 : vector<16x128xf32>
    %49 = math.exp %48 : vector<16x128xf32>
    %cst_23 = arith.constant 1.000000e+00 : f32
    %50 = vector.broadcast %cst_23 : f32 to vector<16x128xf32>
    %51 = arith.addf %50, %49 : vector<16x128xf32>
    %52 = arith.divf %50, %51 : vector<16x128xf32>
    %53 = vector.extract_strided_slice %43 {offsets = [0, 128], sizes = [16, 128], strides = [1, 1]} : vector<16x384xf32> to vector<16x128xf32>
    %54 = vector.extract_strided_slice %44 {offsets = [0, 128], sizes = [16, 128], strides = [1, 1]} : vector<16x384xf32> to vector<16x128xf32>
    %55 = arith.addf %53, %54 : vector<16x128xf32>
    %56 = arith.negf %55 : vector<16x128xf32>
    %57 = math.exp %56 : vector<16x128xf32>
    %cst_24 = arith.constant 1.000000e+00 : f32
    %58 = vector.broadcast %cst_24 : f32 to vector<16x128xf32>
    %59 = arith.addf %58, %57 : vector<16x128xf32>
    %60 = arith.divf %58, %59 : vector<16x128xf32>
    %61 = vector.extract_strided_slice %43 {offsets = [0, 256], sizes = [16, 128], strides = [1, 1]} : vector<16x384xf32> to vector<16x128xf32>
    %62 = vector.extract_strided_slice %44 {offsets = [0, 256], sizes = [16, 128], strides = [1, 1]} : vector<16x384xf32> to vector<16x128xf32>
    %63 = vector.broadcast %8 : vector<1x128xf32> to vector<16x128xf32>
    %64 = arith.addf %62, %63 : vector<16x128xf32>
    %65 = arith.mulf %52, %64 : vector<16x128xf32>
    %66 = arith.addf %61, %65 : vector<16x128xf32>
    %67 = math.tanh %66 : vector<16x128xf32>
    %cst_25 = arith.constant 1.000000e+00 : f32
    %68 = vector.broadcast %cst_25 : f32 to vector<16x128xf32>
    %69 = arith.subf %68, %60 : vector<16x128xf32>
    %70 = arith.mulf %69, %67 : vector<16x128xf32>
    %71 = arith.mulf %60, %40 : vector<16x128xf32>
    %72 = arith.addf %70, %71 : vector<16x128xf32>
    %73 = arith.truncf %72 : vector<16x128xf32> to vector<16x128xbf16>
    %c16_26 = arith.constant 16 : index
    %c0_27 = arith.constant 0 : index
    %74 = vector.load %arg14[%c16_26, %c0_27] : memref<128x128xbf16, #tpu.memory_space<vmem>>, vector<16x128xbf16>
    tpu.vector_store %arg14[%c16_26, %c0_27], %73 {strides = array<i32>} : memref<128x128xbf16, #tpu.memory_space<vmem>>, vector<16x128xbf16>,
    %c32 = arith.constant 32 : index
    %c0_28 = arith.constant 0 : index
    %75 = vector.load %arg13[%c32, %c0_28] : memref<128x384xf32, #tpu.memory_space<vmem>>, vector<16x384xf32>
    %cst_29 = arith.constant dense<0.000000e+00> : vector<16x384xf32>
    %76 = tpu.matmul %73, %7, %cst_29 {dimension_numbers = #tpu.dot_dimension_numbers<[1], [0], [0], [1], [0, 0, 1, 1], [], []>} : vector<16x128xbf16>, vector<128x384xbf16>, vector<16x384xf32> -> vector<16x384xf32>
    %77 = vector.extract_strided_slice %75 {offsets = [0, 0], sizes = [16, 128], strides = [1, 1]} : vector<16x384xf32> to vector<16x128xf32>
    %78 = vector.extract_strided_slice %76 {offsets = [0, 0], sizes = [16, 128], strides = [1, 1]} : vector<16x384xf32> to vector<16x128xf32>
    %79 = arith.addf %77, %78 : vector<16x128xf32>
    %80 = arith.negf %79 : vector<16x128xf32>
    %81 = math.exp %80 : vector<16x128xf32>
    %cst_30 = arith.constant 1.000000e+00 : f32
    %82 = vector.broadcast %cst_30 : f32 to vector<16x128xf32>
    %83 = arith.addf %82, %81 : vector<16x128xf32>
    %84 = arith.divf %82, %83 : vector<16x128xf32>
    %85 = vector.extract_strided_slice %75 {offsets = [0, 128], sizes = [16, 128], strides = [1, 1]} : vector<16x384xf32> to vector<16x128xf32>
    %86 = vector.extract_strided_slice %76 {offsets = [0, 128], sizes = [16, 128], strides = [1, 1]} : vector<16x384xf32> to vector<16x128xf32>
    %87 = arith.addf %85, %86 : vector<16x128xf32>
    %88 = arith.negf %87 : vector<16x128xf32>
    %89 = math.exp %88 : vector<16x128xf32>
    %cst_31 = arith.constant 1.000000e+00 : f32
    %90 = vector.broadcast %cst_31 : f32 to vector<16x128xf32>
    %91 = arith.addf %90, %89 : vector<16x128xf32>
    %92 = arith.divf %90, %91 : vector<16x128xf32>
    %93 = vector.extract_strided_slice %75 {offsets = [0, 256], sizes = [16, 128], strides = [1, 1]} : vector<16x384xf32> to vector<16x128xf32>
    %94 = vector.extract_strided_slice %76 {offsets = [0, 256], sizes = [16, 128], strides = [1, 1]} : vector<16x384xf32> to vector<16x128xf32>
    %95 = vector.broadcast %8 : vector<1x128xf32> to vector<16x128xf32>
    %96 = arith.addf %94, %95 : vector<16x128xf32>
    %97 = arith.mulf %84, %96 : vector<16x128xf32>
    %98 = arith.addf %93, %97 : vector<16x128xf32>
    %99 = math.tanh %98 : vector<16x128xf32>
    %cst_32 = arith.constant 1.000000e+00 : f32
    %100 = vector.broadcast %cst_32 : f32 to vector<16x128xf32>
    %101 = arith.subf %100, %92 : vector<16x128xf32>
    %102 = arith.mulf %101, %99 : vector<16x128xf32>
    %103 = arith.mulf %92, %72 : vector<16x128xf32>
    %104 = arith.addf %102, %103 : vector<16x128xf32>
    %105 = arith.truncf %104 : vector<16x128xf32> to vector<16x128xbf16>
    %c32_33 = arith.constant 32 : index
    %c0_34 = arith.constant 0 : index
    %106 = vector.load %arg14[%c32_33, %c0_34] : memref<128x128xbf16, #tpu.memory_space<vmem>>, vector<16x128xbf16>
    tpu.vector_store %arg14[%c32_33, %c0_34], %105 {strides = array<i32>} : memref<128x128xbf16, #tpu.memory_space<vmem>>, vector<16x128xbf16>,
    %c48 = arith.constant 48 : index
    %c0_35 = arith.constant 0 : index
    %107 = vector.load %arg13[%c48, %c0_35] : memref<128x384xf32, #tpu.memory_space<vmem>>, vector<16x384xf32>
    %cst_36 = arith.constant dense<0.000000e+00> : vector<16x384xf32>
    %108 = tpu.matmul %105, %7, %cst_36 {dimension_numbers = #tpu.dot_dimension_numbers<[1], [0], [0], [1], [0, 0, 1, 1], [], []>} : vector<16x128xbf16>, vector<128x384xbf16>, vector<16x384xf32> -> vector<16x384xf32>
    %109 = vector.extract_strided_slice %107 {offsets = [0, 0], sizes = [16, 128], strides = [1, 1]} : vector<16x384xf32> to vector<16x128xf32>
    %110 = vector.extract_strided_slice %108 {offsets = [0, 0], sizes = [16, 128], strides = [1, 1]} : vector<16x384xf32> to vector<16x128xf32>
    %111 = arith.addf %109, %110 : vector<16x128xf32>
    %112 = arith.negf %111 : vector<16x128xf32>
    %113 = math.exp %112 : vector<16x128xf32>
    %cst_37 = arith.constant 1.000000e+00 : f32
    %114 = vector.broadcast %cst_37 : f32 to vector<16x128xf32>
    %115 = arith.addf %114, %113 : vector<16x128xf32>
    %116 = arith.divf %114, %115 : vector<16x128xf32>
    %117 = vector.extract_strided_slice %107 {offsets = [0, 128], sizes = [16, 128], strides = [1, 1]} : vector<16x384xf32> to vector<16x128xf32>
    %118 = vector.extract_strided_slice %108 {offsets = [0, 128], sizes = [16, 128], strides = [1, 1]} : vector<16x384xf32> to vector<16x128xf32>
    %119 = arith.addf %117, %118 : vector<16x128xf32>
    %120 = arith.negf %119 : vector<16x128xf32>
    %121 = math.exp %120 : vector<16x128xf32>
    %cst_38 = arith.constant 1.000000e+00 : f32
    %122 = vector.broadcast %cst_38 : f32 to vector<16x128xf32>
    %123 = arith.addf %122, %121 : vector<16x128xf32>
    %124 = arith.divf %122, %123 : vector<16x128xf32>
    %125 = vector.extract_strided_slice %107 {offsets = [0, 256], sizes = [16, 128], strides = [1, 1]} : vector<16x384xf32> to vector<16x128xf32>
    %126 = vector.extract_strided_slice %108 {offsets = [0, 256], sizes = [16, 128], strides = [1, 1]} : vector<16x384xf32> to vector<16x128xf32>
    %127 = vector.broadcast %8 : vector<1x128xf32> to vector<16x128xf32>
    %128 = arith.addf %126, %127 : vector<16x128xf32>
    %129 = arith.mulf %116, %128 : vector<16x128xf32>
    %130 = arith.addf %125, %129 : vector<16x128xf32>
    %131 = math.tanh %130 : vector<16x128xf32>
    %cst_39 = arith.constant 1.000000e+00 : f32
    %132 = vector.broadcast %cst_39 : f32 to vector<16x128xf32>
    %133 = arith.subf %132, %124 : vector<16x128xf32>
    %134 = arith.mulf %133, %131 : vector<16x128xf32>
    %135 = arith.mulf %124, %104 : vector<16x128xf32>
    %136 = arith.addf %134, %135 : vector<16x128xf32>
    %137 = arith.truncf %136 : vector<16x128xf32> to vector<16x128xbf16>
    %c48_40 = arith.constant 48 : index
    %c0_41 = arith.constant 0 : index
    %138 = vector.load %arg14[%c48_40, %c0_41] : memref<128x128xbf16, #tpu.memory_space<vmem>>, vector<16x128xbf16>
    tpu.vector_store %arg14[%c48_40, %c0_41], %137 {strides = array<i32>} : memref<128x128xbf16, #tpu.memory_space<vmem>>, vector<16x128xbf16>,
    %c64 = arith.constant 64 : index
    %c0_42 = arith.constant 0 : index
    %139 = vector.load %arg13[%c64, %c0_42] : memref<128x384xf32, #tpu.memory_space<vmem>>, vector<16x384xf32>
    %cst_43 = arith.constant dense<0.000000e+00> : vector<16x384xf32>
    %140 = tpu.matmul %137, %7, %cst_43 {dimension_numbers = #tpu.dot_dimension_numbers<[1], [0], [0], [1], [0, 0, 1, 1], [], []>} : vector<16x128xbf16>, vector<128x384xbf16>, vector<16x384xf32> -> vector<16x384xf32>
    %141 = vector.extract_strided_slice %139 {offsets = [0, 0], sizes = [16, 128], strides = [1, 1]} : vector<16x384xf32> to vector<16x128xf32>
    %142 = vector.extract_strided_slice %140 {offsets = [0, 0], sizes = [16, 128], strides = [1, 1]} : vector<16x384xf32> to vector<16x128xf32>
    %143 = arith.addf %141, %142 : vector<16x128xf32>
    %144 = arith.negf %143 : vector<16x128xf32>
    %145 = math.exp %144 : vector<16x128xf32>
    %cst_44 = arith.constant 1.000000e+00 : f32
    %146 = vector.broadcast %cst_44 : f32 to vector<16x128xf32>
    %147 = arith.addf %146, %145 : vector<16x128xf32>
    %148 = arith.divf %146, %147 : vector<16x128xf32>
    %149 = vector.extract_strided_slice %139 {offsets = [0, 128], sizes = [16, 128], strides = [1, 1]} : vector<16x384xf32> to vector<16x128xf32>
    %150 = vector.extract_strided_slice %140 {offsets = [0, 128], sizes = [16, 128], strides = [1, 1]} : vector<16x384xf32> to vector<16x128xf32>
    %151 = arith.addf %149, %150 : vector<16x128xf32>
    %152 = arith.negf %151 : vector<16x128xf32>
    %153 = math.exp %152 : vector<16x128xf32>
    %cst_45 = arith.constant 1.000000e+00 : f32
    %154 = vector.broadcast %cst_45 : f32 to vector<16x128xf32>
    %155 = arith.addf %154, %153 : vector<16x128xf32>
    %156 = arith.divf %154, %155 : vector<16x128xf32>
    %157 = vector.extract_strided_slice %139 {offsets = [0, 256], sizes = [16, 128], strides = [1, 1]} : vector<16x384xf32> to vector<16x128xf32>
    %158 = vector.extract_strided_slice %140 {offsets = [0, 256], sizes = [16, 128], strides = [1, 1]} : vector<16x384xf32> to vector<16x128xf32>
    %159 = vector.broadcast %8 : vector<1x128xf32> to vector<16x128xf32>
    %160 = arith.addf %158, %159 : vector<16x128xf32>
    %161 = arith.mulf %148, %160 : vector<16x128xf32>
    %162 = arith.addf %157, %161 : vector<16x128xf32>
    %163 = math.tanh %162 : vector<16x128xf32>
    %cst_46 = arith.constant 1.000000e+00 : f32
    %164 = vector.broadcast %cst_46 : f32 to vector<16x128xf32>
    %165 = arith.subf %164, %156 : vector<16x128xf32>
    %166 = arith.mulf %165, %163 : vector<16x128xf32>
    %167 = arith.mulf %156, %136 : vector<16x128xf32>
    %168 = arith.addf %166, %167 : vector<16x128xf32>
    %169 = arith.truncf %168 : vector<16x128xf32> to vector<16x128xbf16>
    %c64_47 = arith.constant 64 : index
    %c0_48 = arith.constant 0 : index
    %170 = vector.load %arg14[%c64_47, %c0_48] : memref<128x128xbf16, #tpu.memory_space<vmem>>, vector<16x128xbf16>
    tpu.vector_store %arg14[%c64_47, %c0_48], %169 {strides = array<i32>} : memref<128x128xbf16, #tpu.memory_space<vmem>>, vector<16x128xbf16>,
    %c80 = arith.constant 80 : index
    %c0_49 = arith.constant 0 : index
    %171 = vector.load %arg13[%c80, %c0_49] : memref<128x384xf32, #tpu.memory_space<vmem>>, vector<16x384xf32>
    %cst_50 = arith.constant dense<0.000000e+00> : vector<16x384xf32>
    %172 = tpu.matmul %169, %7, %cst_50 {dimension_numbers = #tpu.dot_dimension_numbers<[1], [0], [0], [1], [0, 0, 1, 1], [], []>} : vector<16x128xbf16>, vector<128x384xbf16>, vector<16x384xf32> -> vector<16x384xf32>
    %173 = vector.extract_strided_slice %171 {offsets = [0, 0], sizes = [16, 128], strides = [1, 1]} : vector<16x384xf32> to vector<16x128xf32>
    %174 = vector.extract_strided_slice %172 {offsets = [0, 0], sizes = [16, 128], strides = [1, 1]} : vector<16x384xf32> to vector<16x128xf32>
    %175 = arith.addf %173, %174 : vector<16x128xf32>
    %176 = arith.negf %175 : vector<16x128xf32>
    %177 = math.exp %176 : vector<16x128xf32>
    %cst_51 = arith.constant 1.000000e+00 : f32
    %178 = vector.broadcast %cst_51 : f32 to vector<16x128xf32>
    %179 = arith.addf %178, %177 : vector<16x128xf32>
    %180 = arith.divf %178, %179 : vector<16x128xf32>
    %181 = vector.extract_strided_slice %171 {offsets = [0, 128], sizes = [16, 128], strides = [1, 1]} : vector<16x384xf32> to vector<16x128xf32>
    %182 = vector.extract_strided_slice %172 {offsets = [0, 128], sizes = [16, 128], strides = [1, 1]} : vector<16x384xf32> to vector<16x128xf32>
    %183 = arith.addf %181, %182 : vector<16x128xf32>
    %184 = arith.negf %183 : vector<16x128xf32>
    %185 = math.exp %184 : vector<16x128xf32>
    %cst_52 = arith.constant 1.000000e+00 : f32
    %186 = vector.broadcast %cst_52 : f32 to vector<16x128xf32>
    %187 = arith.addf %186, %185 : vector<16x128xf32>
    %188 = arith.divf %186, %187 : vector<16x128xf32>
    %189 = vector.extract_strided_slice %171 {offsets = [0, 256], sizes = [16, 128], strides = [1, 1]} : vector<16x384xf32> to vector<16x128xf32>
    %190 = vector.extract_strided_slice %172 {offsets = [0, 256], sizes = [16, 128], strides = [1, 1]} : vector<16x384xf32> to vector<16x128xf32>
    %191 = vector.broadcast %8 : vector<1x128xf32> to vector<16x128xf32>
    %192 = arith.addf %190, %191 : vector<16x128xf32>
    %193 = arith.mulf %180, %192 : vector<16x128xf32>
    %194 = arith.addf %189, %193 : vector<16x128xf32>
    %195 = math.tanh %194 : vector<16x128xf32>
    %cst_53 = arith.constant 1.000000e+00 : f32
    %196 = vector.broadcast %cst_53 : f32 to vector<16x128xf32>
    %197 = arith.subf %196, %188 : vector<16x128xf32>
    %198 = arith.mulf %197, %195 : vector<16x128xf32>
    %199 = arith.mulf %188, %168 : vector<16x128xf32>
    %200 = arith.addf %198, %199 : vector<16x128xf32>
    %201 = arith.truncf %200 : vector<16x128xf32> to vector<16x128xbf16>
    %c80_54 = arith.constant 80 : index
    %c0_55 = arith.constant 0 : index
    %202 = vector.load %arg14[%c80_54, %c0_55] : memref<128x128xbf16, #tpu.memory_space<vmem>>, vector<16x128xbf16>
    tpu.vector_store %arg14[%c80_54, %c0_55], %201 {strides = array<i32>} : memref<128x128xbf16, #tpu.memory_space<vmem>>, vector<16x128xbf16>,
    %c96 = arith.constant 96 : index
    %c0_56 = arith.constant 0 : index
    %203 = vector.load %arg13[%c96, %c0_56] : memref<128x384xf32, #tpu.memory_space<vmem>>, vector<16x384xf32>
    %cst_57 = arith.constant dense<0.000000e+00> : vector<16x384xf32>
    %204 = tpu.matmul %201, %7, %cst_57 {dimension_numbers = #tpu.dot_dimension_numbers<[1], [0], [0], [1], [0, 0, 1, 1], [], []>} : vector<16x128xbf16>, vector<128x384xbf16>, vector<16x384xf32> -> vector<16x384xf32>
    %205 = vector.extract_strided_slice %203 {offsets = [0, 0], sizes = [16, 128], strides = [1, 1]} : vector<16x384xf32> to vector<16x128xf32>
    %206 = vector.extract_strided_slice %204 {offsets = [0, 0], sizes = [16, 128], strides = [1, 1]} : vector<16x384xf32> to vector<16x128xf32>
    %207 = arith.addf %205, %206 : vector<16x128xf32>
    %208 = arith.negf %207 : vector<16x128xf32>
    %209 = math.exp %208 : vector<16x128xf32>
    %cst_58 = arith.constant 1.000000e+00 : f32
    %210 = vector.broadcast %cst_58 : f32 to vector<16x128xf32>
    %211 = arith.addf %210, %209 : vector<16x128xf32>
    %212 = arith.divf %210, %211 : vector<16x128xf32>
    %213 = vector.extract_strided_slice %203 {offsets = [0, 128], sizes = [16, 128], strides = [1, 1]} : vector<16x384xf32> to vector<16x128xf32>
    %214 = vector.extract_strided_slice %204 {offsets = [0, 128], sizes = [16, 128], strides = [1, 1]} : vector<16x384xf32> to vector<16x128xf32>
    %215 = arith.addf %213, %214 : vector<16x128xf32>
    %216 = arith.negf %215 : vector<16x128xf32>
    %217 = math.exp %216 : vector<16x128xf32>
    %cst_59 = arith.constant 1.000000e+00 : f32
    %218 = vector.broadcast %cst_59 : f32 to vector<16x128xf32>
    %219 = arith.addf %218, %217 : vector<16x128xf32>
    %220 = arith.divf %218, %219 : vector<16x128xf32>
    %221 = vector.extract_strided_slice %203 {offsets = [0, 256], sizes = [16, 128], strides = [1, 1]} : vector<16x384xf32> to vector<16x128xf32>
    %222 = vector.extract_strided_slice %204 {offsets = [0, 256], sizes = [16, 128], strides = [1, 1]} : vector<16x384xf32> to vector<16x128xf32>
    %223 = vector.broadcast %8 : vector<1x128xf32> to vector<16x128xf32>
    %224 = arith.addf %222, %223 : vector<16x128xf32>
    %225 = arith.mulf %212, %224 : vector<16x128xf32>
    %226 = arith.addf %221, %225 : vector<16x128xf32>
    %227 = math.tanh %226 : vector<16x128xf32>
    %cst_60 = arith.constant 1.000000e+00 : f32
    %228 = vector.broadcast %cst_60 : f32 to vector<16x128xf32>
    %229 = arith.subf %228, %220 : vector<16x128xf32>
    %230 = arith.mulf %229, %227 : vector<16x128xf32>
    %231 = arith.mulf %220, %200 : vector<16x128xf32>
    %232 = arith.addf %230, %231 : vector<16x128xf32>
    %233 = arith.truncf %232 : vector<16x128xf32> to vector<16x128xbf16>
    %c96_61 = arith.constant 96 : index
    %c0_62 = arith.constant 0 : index
    %234 = vector.load %arg14[%c96_61, %c0_62] : memref<128x128xbf16, #tpu.memory_space<vmem>>, vector<16x128xbf16>
    tpu.vector_store %arg14[%c96_61, %c0_62], %233 {strides = array<i32>} : memref<128x128xbf16, #tpu.memory_space<vmem>>, vector<16x128xbf16>,
    %c112 = arith.constant 112 : index
    %c0_63 = arith.constant 0 : index
    %235 = vector.load %arg13[%c112, %c0_63] : memref<128x384xf32, #tpu.memory_space<vmem>>, vector<16x384xf32>
    %cst_64 = arith.constant dense<0.000000e+00> : vector<16x384xf32>
    %236 = tpu.matmul %233, %7, %cst_64 {dimension_numbers = #tpu.dot_dimension_numbers<[1], [0], [0], [1], [0, 0, 1, 1], [], []>} : vector<16x128xbf16>, vector<128x384xbf16>, vector<16x384xf32> -> vector<16x384xf32>
    %237 = vector.extract_strided_slice %235 {offsets = [0, 0], sizes = [16, 128], strides = [1, 1]} : vector<16x384xf32> to vector<16x128xf32>
    %238 = vector.extract_strided_slice %236 {offsets = [0, 0], sizes = [16, 128], strides = [1, 1]} : vector<16x384xf32> to vector<16x128xf32>
    %239 = arith.addf %237, %238 : vector<16x128xf32>
    %240 = arith.negf %239 : vector<16x128xf32>
    %241 = math.exp %240 : vector<16x128xf32>
    %cst_65 = arith.constant 1.000000e+00 : f32
    %242 = vector.broadcast %cst_65 : f32 to vector<16x128xf32>
    %243 = arith.addf %242, %241 : vector<16x128xf32>
    %244 = arith.divf %242, %243 : vector<16x128xf32>
    %245 = vector.extract_strided_slice %235 {offsets = [0, 128], sizes = [16, 128], strides = [1, 1]} : vector<16x384xf32> to vector<16x128xf32>
    %246 = vector.extract_strided_slice %236 {offsets = [0, 128], sizes = [16, 128], strides = [1, 1]} : vector<16x384xf32> to vector<16x128xf32>
    %247 = arith.addf %245, %246 : vector<16x128xf32>
    %248 = arith.negf %247 : vector<16x128xf32>
    %249 = math.exp %248 : vector<16x128xf32>
    %cst_66 = arith.constant 1.000000e+00 : f32
    %250 = vector.broadcast %cst_66 : f32 to vector<16x128xf32>
    %251 = arith.addf %250, %249 : vector<16x128xf32>
    %252 = arith.divf %250, %251 : vector<16x128xf32>
    %253 = vector.extract_strided_slice %235 {offsets = [0, 256], sizes = [16, 128], strides = [1, 1]} : vector<16x384xf32> to vector<16x128xf32>
    %254 = vector.extract_strided_slice %236 {offsets = [0, 256], sizes = [16, 128], strides = [1, 1]} : vector<16x384xf32> to vector<16x128xf32>
    %255 = vector.broadcast %8 : vector<1x128xf32> to vector<16x128xf32>
    %256 = arith.addf %254, %255 : vector<16x128xf32>
    %257 = arith.mulf %244, %256 : vector<16x128xf32>
    %258 = arith.addf %253, %257 : vector<16x128xf32>
    %259 = math.tanh %258 : vector<16x128xf32>
    %cst_67 = arith.constant 1.000000e+00 : f32
    %260 = vector.broadcast %cst_67 : f32 to vector<16x128xf32>
    %261 = arith.subf %260, %252 : vector<16x128xf32>
    %262 = arith.mulf %261, %259 : vector<16x128xf32>
    %263 = arith.mulf %252, %232 : vector<16x128xf32>
    %264 = arith.addf %262, %263 : vector<16x128xf32>
    %265 = arith.truncf %264 : vector<16x128xf32> to vector<16x128xbf16>
    %c112_68 = arith.constant 112 : index
    %c0_69 = arith.constant 0 : index
    %266 = vector.load %arg14[%c112_68, %c0_69] : memref<128x128xbf16, #tpu.memory_space<vmem>>, vector<16x128xbf16>
    tpu.vector_store %arg14[%c112_68, %c0_69], %265 {strides = array<i32>} : memref<128x128xbf16, #tpu.memory_space<vmem>>, vector<16x128xbf16>,
    %c0_70 = arith.constant 0 : index
    %c0_71 = arith.constant 0 : index
    %267 = vector.load %arg14[%c0_70, %c0_71] : memref<128x128xbf16, #tpu.memory_space<vmem>>, vector<128x128xbf16>
    %c0_72 = arith.constant 0 : index
    %c0_73 = arith.constant 0 : index
    %268 = vector.load %arg6[%c0_72, %c0_73] : memref<128x384xbf16, #tpu.memory_space<vmem>>, vector<128x384xbf16>
    %cst_74 = arith.constant dense<0.000000e+00> : vector<128x384xf32>
    %269 = tpu.matmul %267, %268, %cst_74 {dimension_numbers = #tpu.dot_dimension_numbers<[1], [0], [0], [1], [0, 0, 1, 1], [], []>} : vector<128x128xbf16>, vector<128x384xbf16>, vector<128x384xf32> -> vector<128x384xf32>
    %c0_75 = arith.constant 0 : index
    %c0_76 = arith.constant 0 : index
    %270 = vector.load %arg8[%c0_75, %c0_76] : memref<1x384xf32, #tpu.memory_space<vmem>>, vector<1x384xf32>
    %271 = vector.broadcast %270 : vector<1x384xf32> to vector<128x384xf32>
    %272 = arith.addf %269, %271 : vector<128x384xf32>
    %c0_77 = arith.constant 0 : index
    %c0_78 = arith.constant 0 : index
    %273 = vector.load %arg13[%c0_77, %c0_78] : memref<128x384xf32, #tpu.memory_space<vmem>>, vector<128x384xf32>
    tpu.vector_store %arg13[%c0_77, %c0_78], %272 {strides = array<i32>} : memref<128x384xf32, #tpu.memory_space<vmem>>, vector<128x384xf32>,
    %c0_79 = arith.constant 0 : index
    %c0_80 = arith.constant 0 : index
    %274 = vector.load %arg7[%c0_79, %c0_80] : memref<128x384xbf16, #tpu.memory_space<vmem>>, vector<128x384xbf16>
    %c0_81 = arith.constant 0 : index
    %c0_82 = arith.constant 0 : index
    %275 = vector.load %arg9[%c0_81, %c0_82] : memref<1x128xf32, #tpu.memory_space<vmem>>, vector<1x128xf32>
    %cst_83 = arith.constant 0.000000e+00 : f32
    %276 = vector.broadcast %cst_83 : f32 to vector<16x128xf32>
    %cst_84 = arith.constant 0.000000e+00 : bf16
    %277 = vector.broadcast %cst_84 : bf16 to vector<16x128xbf16>
    %c0_85 = arith.constant 0 : index
    %c0_86 = arith.constant 0 : index
    %278 = vector.load %arg13[%c0_85, %c0_86] : memref<128x384xf32, #tpu.memory_space<vmem>>, vector<16x384xf32>
    %cst_87 = arith.constant dense<0.000000e+00> : vector<16x384xf32>
    %279 = tpu.matmul %277, %274, %cst_87 {dimension_numbers = #tpu.dot_dimension_numbers<[1], [0], [0], [1], [0, 0, 1, 1], [], []>} : vector<16x128xbf16>, vector<128x384xbf16>, vector<16x384xf32> -> vector<16x384xf32>
    %280 = vector.extract_strided_slice %278 {offsets = [0, 0], sizes = [16, 128], strides = [1, 1]} : vector<16x384xf32> to vector<16x128xf32>
    %281 = vector.extract_strided_slice %279 {offsets = [0, 0], sizes = [16, 128], strides = [1, 1]} : vector<16x384xf32> to vector<16x128xf32>
    %282 = arith.addf %280, %281 : vector<16x128xf32>
    %283 = arith.negf %282 : vector<16x128xf32>
    %284 = math.exp %283 : vector<16x128xf32>
    %cst_88 = arith.constant 1.000000e+00 : f32
    %285 = vector.broadcast %cst_88 : f32 to vector<16x128xf32>
    %286 = arith.addf %285, %284 : vector<16x128xf32>
    %287 = arith.divf %285, %286 : vector<16x128xf32>
    %288 = vector.extract_strided_slice %278 {offsets = [0, 128], sizes = [16, 128], strides = [1, 1]} : vector<16x384xf32> to vector<16x128xf32>
    %289 = vector.extract_strided_slice %279 {offsets = [0, 128], sizes = [16, 128], strides = [1, 1]} : vector<16x384xf32> to vector<16x128xf32>
    %290 = arith.addf %288, %289 : vector<16x128xf32>
    %291 = arith.negf %290 : vector<16x128xf32>
    %292 = math.exp %291 : vector<16x128xf32>
    %cst_89 = arith.constant 1.000000e+00 : f32
    %293 = vector.broadcast %cst_89 : f32 to vector<16x128xf32>
    %294 = arith.addf %293, %292 : vector<16x128xf32>
    %295 = arith.divf %293, %294 : vector<16x128xf32>
    %296 = vector.extract_strided_slice %278 {offsets = [0, 256], sizes = [16, 128], strides = [1, 1]} : vector<16x384xf32> to vector<16x128xf32>
    %297 = vector.extract_strided_slice %279 {offsets = [0, 256], sizes = [16, 128], strides = [1, 1]} : vector<16x384xf32> to vector<16x128xf32>
    %298 = vector.broadcast %275 : vector<1x128xf32> to vector<16x128xf32>
    %299 = arith.addf %297, %298 : vector<16x128xf32>
    %300 = arith.mulf %287, %299 : vector<16x128xf32>
    %301 = arith.addf %296, %300 : vector<16x128xf32>
    %302 = math.tanh %301 : vector<16x128xf32>
    %cst_90 = arith.constant 1.000000e+00 : f32
    %303 = vector.broadcast %cst_90 : f32 to vector<16x128xf32>
    %304 = arith.subf %303, %295 : vector<16x128xf32>
    %305 = arith.mulf %304, %302 : vector<16x128xf32>
    %306 = arith.mulf %295, %276 : vector<16x128xf32>
    %307 = arith.addf %305, %306 : vector<16x128xf32>
    %308 = arith.truncf %307 : vector<16x128xf32> to vector<16x128xbf16>
    %c16_91 = arith.constant 16 : index
    %c0_92 = arith.constant 0 : index
    %309 = vector.load %arg13[%c16_91, %c0_92] : memref<128x384xf32, #tpu.memory_space<vmem>>, vector<16x384xf32>
    %cst_93 = arith.constant dense<0.000000e+00> : vector<16x384xf32>
    %310 = tpu.matmul %308, %274, %cst_93 {dimension_numbers = #tpu.dot_dimension_numbers<[1], [0], [0], [1], [0, 0, 1, 1], [], []>} : vector<16x128xbf16>, vector<128x384xbf16>, vector<16x384xf32> -> vector<16x384xf32>
    %311 = vector.extract_strided_slice %309 {offsets = [0, 0], sizes = [16, 128], strides = [1, 1]} : vector<16x384xf32> to vector<16x128xf32>
    %312 = vector.extract_strided_slice %310 {offsets = [0, 0], sizes = [16, 128], strides = [1, 1]} : vector<16x384xf32> to vector<16x128xf32>
    %313 = arith.addf %311, %312 : vector<16x128xf32>
    %314 = arith.negf %313 : vector<16x128xf32>
    %315 = math.exp %314 : vector<16x128xf32>
    %cst_94 = arith.constant 1.000000e+00 : f32
    %316 = vector.broadcast %cst_94 : f32 to vector<16x128xf32>
    %317 = arith.addf %316, %315 : vector<16x128xf32>
    %318 = arith.divf %316, %317 : vector<16x128xf32>
    %319 = vector.extract_strided_slice %309 {offsets = [0, 128], sizes = [16, 128], strides = [1, 1]} : vector<16x384xf32> to vector<16x128xf32>
    %320 = vector.extract_strided_slice %310 {offsets = [0, 128], sizes = [16, 128], strides = [1, 1]} : vector<16x384xf32> to vector<16x128xf32>
    %321 = arith.addf %319, %320 : vector<16x128xf32>
    %322 = arith.negf %321 : vector<16x128xf32>
    %323 = math.exp %322 : vector<16x128xf32>
    %cst_95 = arith.constant 1.000000e+00 : f32
    %324 = vector.broadcast %cst_95 : f32 to vector<16x128xf32>
    %325 = arith.addf %324, %323 : vector<16x128xf32>
    %326 = arith.divf %324, %325 : vector<16x128xf32>
    %327 = vector.extract_strided_slice %309 {offsets = [0, 256], sizes = [16, 128], strides = [1, 1]} : vector<16x384xf32> to vector<16x128xf32>
    %328 = vector.extract_strided_slice %310 {offsets = [0, 256], sizes = [16, 128], strides = [1, 1]} : vector<16x384xf32> to vector<16x128xf32>
    %329 = vector.broadcast %275 : vector<1x128xf32> to vector<16x128xf32>
    %330 = arith.addf %328, %329 : vector<16x128xf32>
    %331 = arith.mulf %318, %330 : vector<16x128xf32>
    %332 = arith.addf %327, %331 : vector<16x128xf32>
    %333 = math.tanh %332 : vector<16x128xf32>
    %cst_96 = arith.constant 1.000000e+00 : f32
    %334 = vector.broadcast %cst_96 : f32 to vector<16x128xf32>
    %335 = arith.subf %334, %326 : vector<16x128xf32>
    %336 = arith.mulf %335, %333 : vector<16x128xf32>
    %337 = arith.mulf %326, %307 : vector<16x128xf32>
    %338 = arith.addf %336, %337 : vector<16x128xf32>
    %339 = arith.truncf %338 : vector<16x128xf32> to vector<16x128xbf16>
    %c32_97 = arith.constant 32 : index
    %c0_98 = arith.constant 0 : index
    %340 = vector.load %arg13[%c32_97, %c0_98] : memref<128x384xf32, #tpu.memory_space<vmem>>, vector<16x384xf32>
    %cst_99 = arith.constant dense<0.000000e+00> : vector<16x384xf32>
    %341 = tpu.matmul %339, %274, %cst_99 {dimension_numbers = #tpu.dot_dimension_numbers<[1], [0], [0], [1], [0, 0, 1, 1], [], []>} : vector<16x128xbf16>, vector<128x384xbf16>, vector<16x384xf32> -> vector<16x384xf32>
    %342 = vector.extract_strided_slice %340 {offsets = [0, 0], sizes = [16, 128], strides = [1, 1]} : vector<16x384xf32> to vector<16x128xf32>
    %343 = vector.extract_strided_slice %341 {offsets = [0, 0], sizes = [16, 128], strides = [1, 1]} : vector<16x384xf32> to vector<16x128xf32>
    %344 = arith.addf %342, %343 : vector<16x128xf32>
    %345 = arith.negf %344 : vector<16x128xf32>
    %346 = math.exp %345 : vector<16x128xf32>
    %cst_100 = arith.constant 1.000000e+00 : f32
    %347 = vector.broadcast %cst_100 : f32 to vector<16x128xf32>
    %348 = arith.addf %347, %346 : vector<16x128xf32>
    %349 = arith.divf %347, %348 : vector<16x128xf32>
    %350 = vector.extract_strided_slice %340 {offsets = [0, 128], sizes = [16, 128], strides = [1, 1]} : vector<16x384xf32> to vector<16x128xf32>
    %351 = vector.extract_strided_slice %341 {offsets = [0, 128], sizes = [16, 128], strides = [1, 1]} : vector<16x384xf32> to vector<16x128xf32>
    %352 = arith.addf %350, %351 : vector<16x128xf32>
    %353 = arith.negf %352 : vector<16x128xf32>
    %354 = math.exp %353 : vector<16x128xf32>
    %cst_101 = arith.constant 1.000000e+00 : f32
    %355 = vector.broadcast %cst_101 : f32 to vector<16x128xf32>
    %356 = arith.addf %355, %354 : vector<16x128xf32>
    %357 = arith.divf %355, %356 : vector<16x128xf32>
    %358 = vector.extract_strided_slice %340 {offsets = [0, 256], sizes = [16, 128], strides = [1, 1]} : vector<16x384xf32> to vector<16x128xf32>
    %359 = vector.extract_strided_slice %341 {offsets = [0, 256], sizes = [16, 128], strides = [1, 1]} : vector<16x384xf32> to vector<16x128xf32>
    %360 = vector.broadcast %275 : vector<1x128xf32> to vector<16x128xf32>
    %361 = arith.addf %359, %360 : vector<16x128xf32>
    %362 = arith.mulf %349, %361 : vector<16x128xf32>
    %363 = arith.addf %358, %362 : vector<16x128xf32>
    %364 = math.tanh %363 : vector<16x128xf32>
    %cst_102 = arith.constant 1.000000e+00 : f32
    %365 = vector.broadcast %cst_102 : f32 to vector<16x128xf32>
    %366 = arith.subf %365, %357 : vector<16x128xf32>
    %367 = arith.mulf %366, %364 : vector<16x128xf32>
    %368 = arith.mulf %357, %338 : vector<16x128xf32>
    %369 = arith.addf %367, %368 : vector<16x128xf32>
    %370 = arith.truncf %369 : vector<16x128xf32> to vector<16x128xbf16>
    %c48_103 = arith.constant 48 : index
    %c0_104 = arith.constant 0 : index
    %371 = vector.load %arg13[%c48_103, %c0_104] : memref<128x384xf32, #tpu.memory_space<vmem>>, vector<16x384xf32>
    %cst_105 = arith.constant dense<0.000000e+00> : vector<16x384xf32>
    %372 = tpu.matmul %370, %274, %cst_105 {dimension_numbers = #tpu.dot_dimension_numbers<[1], [0], [0], [1], [0, 0, 1, 1], [], []>} : vector<16x128xbf16>, vector<128x384xbf16>, vector<16x384xf32> -> vector<16x384xf32>
    %373 = vector.extract_strided_slice %371 {offsets = [0, 0], sizes = [16, 128], strides = [1, 1]} : vector<16x384xf32> to vector<16x128xf32>
    %374 = vector.extract_strided_slice %372 {offsets = [0, 0], sizes = [16, 128], strides = [1, 1]} : vector<16x384xf32> to vector<16x128xf32>
    %375 = arith.addf %373, %374 : vector<16x128xf32>
    %376 = arith.negf %375 : vector<16x128xf32>
    %377 = math.exp %376 : vector<16x128xf32>
    %cst_106 = arith.constant 1.000000e+00 : f32
    %378 = vector.broadcast %cst_106 : f32 to vector<16x128xf32>
    %379 = arith.addf %378, %377 : vector<16x128xf32>
    %380 = arith.divf %378, %379 : vector<16x128xf32>
    %381 = vector.extract_strided_slice %371 {offsets = [0, 128], sizes = [16, 128], strides = [1, 1]} : vector<16x384xf32> to vector<16x128xf32>
    %382 = vector.extract_strided_slice %372 {offsets = [0, 128], sizes = [16, 128], strides = [1, 1]} : vector<16x384xf32> to vector<16x128xf32>
    %383 = arith.addf %381, %382 : vector<16x128xf32>
    %384 = arith.negf %383 : vector<16x128xf32>
    %385 = math.exp %384 : vector<16x128xf32>
    %cst_107 = arith.constant 1.000000e+00 : f32
    %386 = vector.broadcast %cst_107 : f32 to vector<16x128xf32>
    %387 = arith.addf %386, %385 : vector<16x128xf32>
    %388 = arith.divf %386, %387 : vector<16x128xf32>
    %389 = vector.extract_strided_slice %371 {offsets = [0, 256], sizes = [16, 128], strides = [1, 1]} : vector<16x384xf32> to vector<16x128xf32>
    %390 = vector.extract_strided_slice %372 {offsets = [0, 256], sizes = [16, 128], strides = [1, 1]} : vector<16x384xf32> to vector<16x128xf32>
    %391 = vector.broadcast %275 : vector<1x128xf32> to vector<16x128xf32>
    %392 = arith.addf %390, %391 : vector<16x128xf32>
    %393 = arith.mulf %380, %392 : vector<16x128xf32>
    %394 = arith.addf %389, %393 : vector<16x128xf32>
    %395 = math.tanh %394 : vector<16x128xf32>
    %cst_108 = arith.constant 1.000000e+00 : f32
    %396 = vector.broadcast %cst_108 : f32 to vector<16x128xf32>
    %397 = arith.subf %396, %388 : vector<16x128xf32>
    %398 = arith.mulf %397, %395 : vector<16x128xf32>
    %399 = arith.mulf %388, %369 : vector<16x128xf32>
    %400 = arith.addf %398, %399 : vector<16x128xf32>
    %401 = arith.truncf %400 : vector<16x128xf32> to vector<16x128xbf16>
    %c64_109 = arith.constant 64 : index
    %c0_110 = arith.constant 0 : index
    %402 = vector.load %arg13[%c64_109, %c0_110] : memref<128x384xf32, #tpu.memory_space<vmem>>, vector<16x384xf32>
    %cst_111 = arith.constant dense<0.000000e+00> : vector<16x384xf32>
    %403 = tpu.matmul %401, %274, %cst_111 {dimension_numbers = #tpu.dot_dimension_numbers<[1], [0], [0], [1], [0, 0, 1, 1], [], []>} : vector<16x128xbf16>, vector<128x384xbf16>, vector<16x384xf32> -> vector<16x384xf32>
    %404 = vector.extract_strided_slice %402 {offsets = [0, 0], sizes = [16, 128], strides = [1, 1]} : vector<16x384xf32> to vector<16x128xf32>
    %405 = vector.extract_strided_slice %403 {offsets = [0, 0], sizes = [16, 128], strides = [1, 1]} : vector<16x384xf32> to vector<16x128xf32>
    %406 = arith.addf %404, %405 : vector<16x128xf32>
    %407 = arith.negf %406 : vector<16x128xf32>
    %408 = math.exp %407 : vector<16x128xf32>
    %cst_112 = arith.constant 1.000000e+00 : f32
    %409 = vector.broadcast %cst_112 : f32 to vector<16x128xf32>
    %410 = arith.addf %409, %408 : vector<16x128xf32>
    %411 = arith.divf %409, %410 : vector<16x128xf32>
    %412 = vector.extract_strided_slice %402 {offsets = [0, 128], sizes = [16, 128], strides = [1, 1]} : vector<16x384xf32> to vector<16x128xf32>
    %413 = vector.extract_strided_slice %403 {offsets = [0, 128], sizes = [16, 128], strides = [1, 1]} : vector<16x384xf32> to vector<16x128xf32>
    %414 = arith.addf %412, %413 : vector<16x128xf32>
    %415 = arith.negf %414 : vector<16x128xf32>
    %416 = math.exp %415 : vector<16x128xf32>
    %cst_113 = arith.constant 1.000000e+00 : f32
    %417 = vector.broadcast %cst_113 : f32 to vector<16x128xf32>
    %418 = arith.addf %417, %416 : vector<16x128xf32>
    %419 = arith.divf %417, %418 : vector<16x128xf32>
    %420 = vector.extract_strided_slice %402 {offsets = [0, 256], sizes = [16, 128], strides = [1, 1]} : vector<16x384xf32> to vector<16x128xf32>
    %421 = vector.extract_strided_slice %403 {offsets = [0, 256], sizes = [16, 128], strides = [1, 1]} : vector<16x384xf32> to vector<16x128xf32>
    %422 = vector.broadcast %275 : vector<1x128xf32> to vector<16x128xf32>
    %423 = arith.addf %421, %422 : vector<16x128xf32>
    %424 = arith.mulf %411, %423 : vector<16x128xf32>
    %425 = arith.addf %420, %424 : vector<16x128xf32>
    %426 = math.tanh %425 : vector<16x128xf32>
    %cst_114 = arith.constant 1.000000e+00 : f32
    %427 = vector.broadcast %cst_114 : f32 to vector<16x128xf32>
    %428 = arith.subf %427, %419 : vector<16x128xf32>
    %429 = arith.mulf %428, %426 : vector<16x128xf32>
    %430 = arith.mulf %419, %400 : vector<16x128xf32>
    %431 = arith.addf %429, %430 : vector<16x128xf32>
    %432 = arith.truncf %431 : vector<16x128xf32> to vector<16x128xbf16>
    %c80_115 = arith.constant 80 : index
    %c0_116 = arith.constant 0 : index
    %433 = vector.load %arg13[%c80_115, %c0_116] : memref<128x384xf32, #tpu.memory_space<vmem>>, vector<16x384xf32>
    %cst_117 = arith.constant dense<0.000000e+00> : vector<16x384xf32>
    %434 = tpu.matmul %432, %274, %cst_117 {dimension_numbers = #tpu.dot_dimension_numbers<[1], [0], [0], [1], [0, 0, 1, 1], [], []>} : vector<16x128xbf16>, vector<128x384xbf16>, vector<16x384xf32> -> vector<16x384xf32>
    %435 = vector.extract_strided_slice %433 {offsets = [0, 0], sizes = [16, 128], strides = [1, 1]} : vector<16x384xf32> to vector<16x128xf32>
    %436 = vector.extract_strided_slice %434 {offsets = [0, 0], sizes = [16, 128], strides = [1, 1]} : vector<16x384xf32> to vector<16x128xf32>
    %437 = arith.addf %435, %436 : vector<16x128xf32>
    %438 = arith.negf %437 : vector<16x128xf32>
    %439 = math.exp %438 : vector<16x128xf32>
    %cst_118 = arith.constant 1.000000e+00 : f32
    %440 = vector.broadcast %cst_118 : f32 to vector<16x128xf32>
    %441 = arith.addf %440, %439 : vector<16x128xf32>
    %442 = arith.divf %440, %441 : vector<16x128xf32>
    %443 = vector.extract_strided_slice %433 {offsets = [0, 128], sizes = [16, 128], strides = [1, 1]} : vector<16x384xf32> to vector<16x128xf32>
    %444 = vector.extract_strided_slice %434 {offsets = [0, 128], sizes = [16, 128], strides = [1, 1]} : vector<16x384xf32> to vector<16x128xf32>
    %445 = arith.addf %443, %444 : vector<16x128xf32>
    %446 = arith.negf %445 : vector<16x128xf32>
    %447 = math.exp %446 : vector<16x128xf32>
    %cst_119 = arith.constant 1.000000e+00 : f32
    %448 = vector.broadcast %cst_119 : f32 to vector<16x128xf32>
    %449 = arith.addf %448, %447 : vector<16x128xf32>
    %450 = arith.divf %448, %449 : vector<16x128xf32>
    %451 = vector.extract_strided_slice %433 {offsets = [0, 256], sizes = [16, 128], strides = [1, 1]} : vector<16x384xf32> to vector<16x128xf32>
    %452 = vector.extract_strided_slice %434 {offsets = [0, 256], sizes = [16, 128], strides = [1, 1]} : vector<16x384xf32> to vector<16x128xf32>
    %453 = vector.broadcast %275 : vector<1x128xf32> to vector<16x128xf32>
    %454 = arith.addf %452, %453 : vector<16x128xf32>
    %455 = arith.mulf %442, %454 : vector<16x128xf32>
    %456 = arith.addf %451, %455 : vector<16x128xf32>
    %457 = math.tanh %456 : vector<16x128xf32>
    %cst_120 = arith.constant 1.000000e+00 : f32
    %458 = vector.broadcast %cst_120 : f32 to vector<16x128xf32>
    %459 = arith.subf %458, %450 : vector<16x128xf32>
    %460 = arith.mulf %459, %457 : vector<16x128xf32>
    %461 = arith.mulf %450, %431 : vector<16x128xf32>
    %462 = arith.addf %460, %461 : vector<16x128xf32>
    %463 = arith.truncf %462 : vector<16x128xf32> to vector<16x128xbf16>
    %c96_121 = arith.constant 96 : index
    %c0_122 = arith.constant 0 : index
    %464 = vector.load %arg13[%c96_121, %c0_122] : memref<128x384xf32, #tpu.memory_space<vmem>>, vector<16x384xf32>
    %cst_123 = arith.constant dense<0.000000e+00> : vector<16x384xf32>
    %465 = tpu.matmul %463, %274, %cst_123 {dimension_numbers = #tpu.dot_dimension_numbers<[1], [0], [0], [1], [0, 0, 1, 1], [], []>} : vector<16x128xbf16>, vector<128x384xbf16>, vector<16x384xf32> -> vector<16x384xf32>
    %466 = vector.extract_strided_slice %464 {offsets = [0, 0], sizes = [16, 128], strides = [1, 1]} : vector<16x384xf32> to vector<16x128xf32>
    %467 = vector.extract_strided_slice %465 {offsets = [0, 0], sizes = [16, 128], strides = [1, 1]} : vector<16x384xf32> to vector<16x128xf32>
    %468 = arith.addf %466, %467 : vector<16x128xf32>
    %469 = arith.negf %468 : vector<16x128xf32>
    %470 = math.exp %469 : vector<16x128xf32>
    %cst_124 = arith.constant 1.000000e+00 : f32
    %471 = vector.broadcast %cst_124 : f32 to vector<16x128xf32>
    %472 = arith.addf %471, %470 : vector<16x128xf32>
    %473 = arith.divf %471, %472 : vector<16x128xf32>
    %474 = vector.extract_strided_slice %464 {offsets = [0, 128], sizes = [16, 128], strides = [1, 1]} : vector<16x384xf32> to vector<16x128xf32>
    %475 = vector.extract_strided_slice %465 {offsets = [0, 128], sizes = [16, 128], strides = [1, 1]} : vector<16x384xf32> to vector<16x128xf32>
    %476 = arith.addf %474, %475 : vector<16x128xf32>
    %477 = arith.negf %476 : vector<16x128xf32>
    %478 = math.exp %477 : vector<16x128xf32>
    %cst_125 = arith.constant 1.000000e+00 : f32
    %479 = vector.broadcast %cst_125 : f32 to vector<16x128xf32>
    %480 = arith.addf %479, %478 : vector<16x128xf32>
    %481 = arith.divf %479, %480 : vector<16x128xf32>
    %482 = vector.extract_strided_slice %464 {offsets = [0, 256], sizes = [16, 128], strides = [1, 1]} : vector<16x384xf32> to vector<16x128xf32>
    %483 = vector.extract_strided_slice %465 {offsets = [0, 256], sizes = [16, 128], strides = [1, 1]} : vector<16x384xf32> to vector<16x128xf32>
    %484 = vector.broadcast %275 : vector<1x128xf32> to vector<16x128xf32>
    %485 = arith.addf %483, %484 : vector<16x128xf32>
    %486 = arith.mulf %473, %485 : vector<16x128xf32>
    %487 = arith.addf %482, %486 : vector<16x128xf32>
    %488 = math.tanh %487 : vector<16x128xf32>
    %cst_126 = arith.constant 1.000000e+00 : f32
    %489 = vector.broadcast %cst_126 : f32 to vector<16x128xf32>
    %490 = arith.subf %489, %481 : vector<16x128xf32>
    %491 = arith.mulf %490, %488 : vector<16x128xf32>
    %492 = arith.mulf %481, %462 : vector<16x128xf32>
    %493 = arith.addf %491, %492 : vector<16x128xf32>
    %494 = arith.truncf %493 : vector<16x128xf32> to vector<16x128xbf16>
    %c112_127 = arith.constant 112 : index
    %c0_128 = arith.constant 0 : index
    %495 = vector.load %arg13[%c112_127, %c0_128] : memref<128x384xf32, #tpu.memory_space<vmem>>, vector<16x384xf32>
    %cst_129 = arith.constant dense<0.000000e+00> : vector<16x384xf32>
    %496 = tpu.matmul %494, %274, %cst_129 {dimension_numbers = #tpu.dot_dimension_numbers<[1], [0], [0], [1], [0, 0, 1, 1], [], []>} : vector<16x128xbf16>, vector<128x384xbf16>, vector<16x384xf32> -> vector<16x384xf32>
    %497 = vector.extract_strided_slice %495 {offsets = [0, 0], sizes = [16, 128], strides = [1, 1]} : vector<16x384xf32> to vector<16x128xf32>
    %498 = vector.extract_strided_slice %496 {offsets = [0, 0], sizes = [16, 128], strides = [1, 1]} : vector<16x384xf32> to vector<16x128xf32>
    %499 = arith.addf %497, %498 : vector<16x128xf32>
    %500 = arith.negf %499 : vector<16x128xf32>
    %501 = math.exp %500 : vector<16x128xf32>
    %cst_130 = arith.constant 1.000000e+00 : f32
    %502 = vector.broadcast %cst_130 : f32 to vector<16x128xf32>
    %503 = arith.addf %502, %501 : vector<16x128xf32>
    %504 = arith.divf %502, %503 : vector<16x128xf32>
    %505 = vector.extract_strided_slice %495 {offsets = [0, 128], sizes = [16, 128], strides = [1, 1]} : vector<16x384xf32> to vector<16x128xf32>
    %506 = vector.extract_strided_slice %496 {offsets = [0, 128], sizes = [16, 128], strides = [1, 1]} : vector<16x384xf32> to vector<16x128xf32>
    %507 = arith.addf %505, %506 : vector<16x128xf32>
    %508 = arith.negf %507 : vector<16x128xf32>
    %509 = math.exp %508 : vector<16x128xf32>
    %cst_131 = arith.constant 1.000000e+00 : f32
    %510 = vector.broadcast %cst_131 : f32 to vector<16x128xf32>
    %511 = arith.addf %510, %509 : vector<16x128xf32>
    %512 = arith.divf %510, %511 : vector<16x128xf32>
    %513 = vector.extract_strided_slice %495 {offsets = [0, 256], sizes = [16, 128], strides = [1, 1]} : vector<16x384xf32> to vector<16x128xf32>
    %514 = vector.extract_strided_slice %496 {offsets = [0, 256], sizes = [16, 128], strides = [1, 1]} : vector<16x384xf32> to vector<16x128xf32>
    %515 = vector.broadcast %275 : vector<1x128xf32> to vector<16x128xf32>
    %516 = arith.addf %514, %515 : vector<16x128xf32>
    %517 = arith.mulf %504, %516 : vector<16x128xf32>
    %518 = arith.addf %513, %517 : vector<16x128xf32>
    %519 = math.tanh %518 : vector<16x128xf32>
    %cst_132 = arith.constant 1.000000e+00 : f32
    %520 = vector.broadcast %cst_132 : f32 to vector<16x128xf32>
    %521 = arith.subf %520, %512 : vector<16x128xf32>
    %522 = arith.mulf %521, %519 : vector<16x128xf32>
    %523 = arith.mulf %512, %493 : vector<16x128xf32>
    %524 = arith.addf %522, %523 : vector<16x128xf32>
    %525 = arith.truncf %524 : vector<16x128xf32> to vector<16x128xbf16>
    %c0_133 = arith.constant 0 : index
    %c0_134 = arith.constant 0 : index
    %526 = vector.load %arg10[%c0_133, %c0_134] : memref<128x128xbf16, #tpu.memory_space<vmem>>, vector<128x128xbf16>
    %cst_135 = arith.constant dense<0.000000e+00> : vector<16x128xf32>
    %527 = tpu.matmul %525, %526, %cst_135 {dimension_numbers = #tpu.dot_dimension_numbers<[1], [0], [0], [1], [0, 0, 1, 1], [], []>} : vector<16x128xbf16>, vector<128x128xbf16>, vector<16x128xf32> -> vector<16x128xf32>
    %c0_136 = arith.constant 0 : index
    %c0_137 = arith.constant 0 : index
    %528 = vector.load %arg11[%c0_136, %c0_137] : memref<1x128xf32, #tpu.memory_space<vmem>>, vector<1x128xf32>
    %529 = vector.broadcast %528 : vector<1x128xf32> to vector<16x128xf32>
    %530 = arith.addf %527, %529 : vector<16x128xf32>
    %c0_138 = arith.constant 0 : index
    %c0_139 = arith.constant 0 : index
    %531 = vector.load %arg12[%c0_138, %c0_139] : memref<16x128xf32, #tpu.memory_space<vmem>>, vector<16x128xf32>
    tpu.vector_store %arg12[%c0_138, %c0_139], %530 {strides = array<i32>} : memref<16x128xf32, #tpu.memory_space<vmem>>, vector<16x128xf32>,
    return
  }
  func.func @transform_0(%arg0: i32) -> (i32, i32) {
    %c0_i32 = arith.constant 0 : i32
    %c0_i32_0 = arith.constant 0 : i32
    %c0_i32_1 = arith.constant 0 : i32
    return %c0_i32, %c0_i32_0 : i32, i32
  }
  func.func @transform_1(%arg0: i32) -> (i32, i32) {
    %c0_i32 = arith.constant 0 : i32
    %c0_i32_0 = arith.constant 0 : i32
    %c0_i32_1 = arith.constant 0 : i32
    return %c0_i32, %c0_i32_0 : i32, i32
  }
  func.func @transform_2(%arg0: i32) -> (i32, i32) {
    %c0_i32 = arith.constant 0 : i32
    %c0_i32_0 = arith.constant 0 : i32
    %c0_i32_1 = arith.constant 0 : i32
    return %c0_i32, %c0_i32_0 : i32, i32
  }
  func.func @transform_3(%arg0: i32) -> (i32, i32) {
    %c0_i32 = arith.constant 0 : i32
    %c0_i32_0 = arith.constant 0 : i32
    %c0_i32_1 = arith.constant 0 : i32
    return %c0_i32, %c0_i32_0 : i32, i32
  }
  func.func @transform_4(%arg0: i32) -> (i32, i32) {
    %c0_i32 = arith.constant 0 : i32
    %c0_i32_0 = arith.constant 0 : i32
    %c0_i32_1 = arith.constant 0 : i32
    return %c0_i32, %c0_i32_0 : i32, i32
  }
  func.func @transform_5(%arg0: i32) -> (i32, i32) {
    %c0_i32 = arith.constant 0 : i32
    %c0_i32_0 = arith.constant 0 : i32
    %c0_i32_1 = arith.constant 0 : i32
    return %c0_i32, %c0_i32_0 : i32, i32
  }
  func.func @transform_6(%arg0: i32) -> (i32, i32) {
    %c0_i32 = arith.constant 0 : i32
    %c0_i32_0 = arith.constant 0 : i32
    %c0_i32_1 = arith.constant 0 : i32
    return %c0_i32, %c0_i32_0 : i32, i32
  }
  func.func @transform_7(%arg0: i32) -> (i32, i32) {
    %c0_i32 = arith.constant 0 : i32
    %c0_i32_0 = arith.constant 0 : i32
    %c0_i32_1 = arith.constant 0 : i32
    return %c0_i32, %c0_i32_0 : i32, i32
  }
  func.func @transform_8(%arg0: i32) -> (i32, i32) {
    %c0_i32 = arith.constant 0 : i32
    %c0_i32_0 = arith.constant 0 : i32
    %c0_i32_1 = arith.constant 0 : i32
    return %c0_i32, %c0_i32_0 : i32, i32
  }
  func.func @transform_9(%arg0: i32) -> (i32, i32) {
    %c0_i32 = arith.constant 0 : i32
    %c0_i32_0 = arith.constant 0 : i32
    %c0_i32_1 = arith.constant 0 : i32
    return %c0_i32, %c0_i32_0 : i32, i32
  }
  func.func @transform_10(%arg0: i32) -> (i32, i32) {
    %c0_i32 = arith.constant 0 : i32
    %c0_i32_0 = arith.constant 0 : i32
    %c0_i32_1 = arith.constant 0 : i32
    return %c0_i32, %c0_i32_0 : i32, i32
  }
  func.func @transform_11(%arg0: i32) -> (i32, i32) {
    %c0_i32 = arith.constant 0 : i32
    %c0_i32_0 = arith.constant 0 : i32
    return %arg0, %c0_i32 : i32, i32
  }
}

</mosaic_0001>

<llo_original>
// kernel: tpu_custom_call.1
$region0: #{tpu_custom_call.1}
  #allocation0 [shape = 'u32[]', space=smem, size = 0x4, offset = 0x4, fixed_abs, tag = 'smem constant byte address 0x4 - core index']
  #allocation1 [shape = 'u32[144,128]{1,0:T(1,128)}', space=vmem, size = 0x12000, scoped, tag = 'internal scratch']
  #allocation2 [shape = 'f32[128,384]{1,0:T(8,128)}', space=vmem, size = 0x30000, scoped, tag = 'scratch operand']
  #allocation3 [shape = 'bf16[128,128]{1,0:T(16,128)(2,1)}', space=vmem, size = 0x8000, scoped, tag = 'scratch operand']
  %s0 = inlined_call_operand.vmem [shape: bf16[128,32], index: 0, kind: input, shape index: {}]
  %s1 = inlined_call_operand.vmem [shape: bf16[32,384], index: 1, kind: input, shape index: {}]
  %s2 = inlined_call_operand.hbm [shape: bf16[128,384], index: 2, kind: input, shape index: {}]
  %s3 = inlined_call_operand.hbm [shape: f32[1,384], index: 3, kind: input, shape index: {}]
  %s4 = inlined_call_operand.vmem [shape: f32[1,128], index: 4, kind: input, shape index: {}]
  %s5 = inlined_call_operand.hbm [shape: bf16[128,384], index: 5, kind: input, shape index: {}]
  %s6 = inlined_call_operand.hbm [shape: bf16[128,384], index: 6, kind: input, shape index: {}]
  %s7 = inlined_call_operand.hbm [shape: f32[1,384], index: 7, kind: input, shape index: {}]
  %s8 = inlined_call_operand.vmem [shape: f32[1,128], index: 8, kind: input, shape index: {}]
  %s9 = inlined_call_operand.vmem [shape: bf16[128,128], index: 9, kind: input, shape index: {}]
  %s10 = inlined_call_operand.vmem [shape: f32[1,128], index: 10, kind: input, shape index: {}]
  %s11 = inlined_call_operand.hbm [shape: f32[16,128], index: 11, kind: output, shape index: {}]
  %s12 = sld [smem:[#allocation0]]
  $region74: #{tpu_custom_call.1} parent=0
    _
  %s14 = ssub.s32 1, %s12
  %s15 = scalar_select 0, %s14, %s12
  $region1: #{tpu_custom_call.1} parent=0
    #allocation4 [shape = 'u8[98304]{0}', space=vmem, size = 0x18000, scoped, tag = 'input window, operand 2, single buffered']
    #allocation5 [shape = 's32[1]{0}', space=sflag, size = 0x4, scoped, tag = 'scoped memory for tpu_custom_call.1']
    #allocation6 [shape = 's32[1]{0}', space=sflag, size = 0x4, scoped, tag = 'scoped memory for tpu_custom_call.1']
    #allocation7 [shape = 'u8[1536]{0}', space=vmem, size = 0x800, scoped, tag = 'input window, operand 3, single buffered']
    #allocation8 [shape = 's32[1]{0}', space=sflag, size = 0x4, scoped, tag = 'scoped memory for tpu_custom_call.1']
    #allocation9 [shape = 'u8[98304]{0}', space=vmem, size = 0x18000, scoped, tag = 'input window, operand 5, single buffered']
    #allocation10 [shape = 'u8[98304]{0}', space=vmem, size = 0x18000, scoped, tag = 'input window, operand 6, single buffered']
    #allocation11 [shape = 's32[1]{0}', space=sflag, size = 0x4, scoped, tag = 'scoped memory for tpu_custom_call.1']
    #allocation12 [shape = 'u8[1536]{0}', space=vmem, size = 0x800, scoped, tag = 'input window, operand 7, single buffered']
    #allocation13 [shape = 'u8[8192]{0}', space=vmem, size = 0x2000, scoped, tag = 'output window, operand 0, single buffered']
    %16 = vsyncpa [#allocation5], 0
    %17 = vsyncpa [#allocation8], 0
    %18 = vsyncpa [#allocation11], 0
    %19 = vsyncpa [#allocation6], 0
    // Predicated region
    $region2: #{tpu_custom_call.1} parent=1 // pred_check
      _
    $region3: #{tpu_custom_call.1} parent=1 // pred_check_branch
      %21 = sbr.rel (0) target = $region5
    $region4: #{tpu_custom_call.1} parent=1 // pred_region
      _
    $region5: #{tpu_custom_call.1} parent=1 // pred_fallthru
      _
    // Predicated region
    $region6: #{tpu_custom_call.1} parent=1 // pred_check
      _
    $region7: #{tpu_custom_call.1} parent=1 // pred_check_branch
      %23 = sbr.rel (0) target = $region9
    $region8: #{tpu_custom_call.1} parent=1 // pred_region
      _
    $region9: #{tpu_custom_call.1} parent=1 // pred_fallthru
      _
    // Predicated region
    $region10: #{tpu_custom_call.1} parent=1 // pred_check
      _
    $region11: #{tpu_custom_call.1} parent=1 // pred_check_branch
      %25 = sbr.rel (0) target = $region13
    $region12: #{tpu_custom_call.1} parent=1 // pred_region
      %s27 = ssub.s32 3072, 3072
      %28 = vsyncadd [#allocation5], %s27
      %s29 = sshll.u32 [#allocation4], 4
      %s30 = int_to_ptr.vmem [resolvable:$true] %s29
      %35 = dma.hbm_to_vmem [thread:$0]  %s2, 3072, %s30, [#allocation5], 192, 192, 12
    $region13: #{tpu_custom_call.1} parent=1 // pred_fallthru
      _
    // Predicated region
    $region14: #{tpu_custom_call.1} parent=1 // pred_check
      _
    $region15: #{tpu_custom_call.1} parent=1 // pred_check_branch
      %37 = sbr.rel (0) target = $region17
    $region16: #{tpu_custom_call.1} parent=1 // pred_region
      %s39 = ssub.s32 48, 48
      %40 = vsyncadd [#allocation8], %s39
      %s42 = sshll.u32 [#allocation7], 4
      %s43 = int_to_ptr.vmem [resolvable:$true] %s42
      %45 = dma.hbm_to_vmem [thread:$0]  %s3, 48, %s43, [#allocation8]
    $region17: #{tpu_custom_call.1} parent=1 // pred_fallthru
      _
    // Predicated region
    $region18: #{tpu_custom_call.1} parent=1 // pred_check
      _
    $region19: #{tpu_custom_call.1} parent=1 // pred_check_branch
      %47 = sbr.rel (0) target = $region21
    $region20: #{tpu_custom_call.1} parent=1 // pred_region
      _
    $region21: #{tpu_custom_call.1} parent=1 // pred_fallthru
      _
    // Predicated region
    $region22: #{tpu_custom_call.1} parent=1 // pred_check
      _
    $region23: #{tpu_custom_call.1} parent=1 // pred_check_branch
      %49 = sbr.rel (0) target = $region25
    $region24: #{tpu_custom_call.1} parent=1 // pred_region
      %s51 = ssub.s32 3072, 3072
      %52 = vsyncadd [#allocation8], %s51
      %s53 = sshll.u32 [#allocation9], 4
      %s54 = int_to_ptr.vmem [resolvable:$true] %s53
      %59 = dma.hbm_to_vmem [thread:$0]  %s5, 3072, %s54, [#allocation8], 192, 192, 12
    $region25: #{tpu_custom_call.1} parent=1 // pred_fallthru
      _
    // Predicated region
    $region26: #{tpu_custom_call.1} parent=1 // pred_check
      _
    $region27: #{tpu_custom_call.1} parent=1 // pred_check_branch
      %61 = sbr.rel (0) target = $region29
    $region28: #{tpu_custom_call.1} parent=1 // pred_region
      %s63 = ssub.s32 3072, 3072
      %64 = vsyncadd [#allocation11], %s63
      %s65 = sshll.u32 [#allocation10], 4
      %s66 = int_to_ptr.vmem [resolvable:$true] %s65
      %71 = dma.hbm_to_vmem [thread:$0]  %s6, 3072, %s66, [#allocation11], 192, 192, 12
    $region29: #{tpu_custom_call.1} parent=1 // pred_fallthru
      _
    // Predicated region
    $region30: #{tpu_custom_call.1} parent=1 // pred_check
      _
    $region31: #{tpu_custom_call.1} parent=1 // pred_check_branch
      %73 = sbr.rel (0) target = $region33
    $region32: #{tpu_custom_call.1} parent=1 // pred_region
      %s75 = ssub.s32 48, 48
      %76 = vsyncadd [#allocation11], %s75
      %s78 = sshll.u32 [#allocation12], 4
      %s79 = int_to_ptr.vmem [resolvable:$true] %s78
      %81 = dma.hbm_to_vmem [thread:$0]  %s7, 48, %s79, [#allocation11]
    $region33: #{tpu_custom_call.1} parent=1 // pred_fallthru
      _
    // Predicated region
    $region34: #{tpu_custom_call.1} parent=1 // pred_check
      _
    $region35: #{tpu_custom_call.1} parent=1 // pred_check_branch
      %83 = sbr.rel (0) target = $region37
    $region36: #{tpu_custom_call.1} parent=1 // pred_region
      _
    $region37: #{tpu_custom_call.1} parent=1 // pred_fallthru
      _
    // Predicated region
    $region38: #{tpu_custom_call.1} parent=1 // pred_check
      _
    $region39: #{tpu_custom_call.1} parent=1 // pred_check_branch
      %85 = sbr.rel (0) target = $region41
    $region40: #{tpu_custom_call.1} parent=1 // pred_region
      _
    $region41: #{tpu_custom_call.1} parent=1 // pred_fallthru
      _
    // Predicated region
    $region42: #{tpu_custom_call.1} parent=1 // pred_check
      _
    $region43: #{tpu_custom_call.1} parent=1 // pred_check_branch
      %87 = sbr.rel (0) target = $region45
    $region44: #{tpu_custom_call.1} parent=1 // pred_region
      _
    $region45: #{tpu_custom_call.1} parent=1 // pred_fallthru
      _
    // Predicated region
    $region46: #{tpu_custom_call.1} parent=1 // pred_check
      _
    $region47: #{tpu_custom_call.1} parent=1 // pred_check_branch
      %89 = sbr.rel (0) target = $region49
    $region48: #{tpu_custom_call.1} parent=1 // pred_region
      %90 = dma.done [#allocation5], 3072
    $region49: #{tpu_custom_call.1} parent=1 // pred_fallthru
      _
    // Predicated region
    $region50: #{tpu_custom_call.1} parent=1 // pred_check
      _
    $region51: #{tpu_custom_call.1} parent=1 // pred_check_branch
      %92 = sbr.rel (0) target = $region53
    $region52: #{tpu_custom_call.1} parent=1 // pred_region
      %93 = dma.done [#allocation8], 48
    $region53: #{tpu_custom_call.1} parent=1 // pred_fallthru
      _
    // Predicated region
    $region54: #{tpu_custom_call.1} parent=1 // pred_check
      _
    $region55: #{tpu_custom_call.1} parent=1 // pred_check_branch
      %95 = sbr.rel (0) target = $region57
    $region56: #{tpu_custom_call.1} parent=1 // pred_region
      %96 = dma.done [#allocation8], 3072
    $region57: #{tpu_custom_call.1} parent=1 // pred_fallthru
      _
    // Predicated region
    $region58: #{tpu_custom_call.1} parent=1 // pred_check
      _
    $region59: #{tpu_custom_call.1} parent=1 // pred_check_branch
      %98 = sbr.rel (0) target = $region61
    $region60: #{tpu_custom_call.1} parent=1 // pred_region
      %99 = dma.done [#allocation11], 3072
    $region61: #{tpu_custom_call.1} parent=1 // pred_fallthru
      _
    // Predicated region
    $region62: #{tpu_custom_call.1} parent=1 // pred_check
      _
    $region63: #{tpu_custom_call.1} parent=1 // pred_check_branch
      %101 = sbr.rel (0) target = $region65
    $region64: #{tpu_custom_call.1} parent=1 // pred_region
      %102 = dma.done [#allocation11], 48
    $region65: #{tpu_custom_call.1} parent=1 // pred_fallthru
      _
    %v104 = vld [vmem:[%s0] sm:$0xf]
    %v105 = vld [vmem:[%s0 + $0x4] sm:$0xf]
    %v106 = vld [vmem:[%s0 + $0x8] sm:$0xf]
    %v107 = vld [vmem:[%s0 + $0xc] sm:$0xf]
    %v108 = vld [vmem:[%s0 + $0x10] sm:$0xf]
    %v109 = vld [vmem:[%s0 + $0x14] sm:$0xf]
    %v110 = vld [vmem:[%s0 + $0x18] sm:$0xf]
    %v111 = vld [vmem:[%s0 + $0x1c] sm:$0xf]
    %v112 = vld [vmem:[%s0 + $0x20] sm:$0xf]
    %v113 = vld [vmem:[%s0 + $0x24] sm:$0xf]
    %v114 = vld [vmem:[%s0 + $0x28] sm:$0xf]
    %v115 = vld [vmem:[%s0 + $0x2c] sm:$0xf]
    %v116 = vld [vmem:[%s0 + $0x30] sm:$0xf]
    %v117 = vld [vmem:[%s0 + $0x34] sm:$0xf]
    %v118 = vld [vmem:[%s0 + $0x38] sm:$0xf]
    %v119 = vld [vmem:[%s0 + $0x3c] sm:$0xf]
    %v120 = vld [vmem:[%s1] sm:$0xff]
    %v121 = vld [vmem:[%s1 + $0x8] sm:$0xf]
    %v122 = vld [vmem:[%s1 + $0xc] sm:$0xff]
    %v123 = vld [vmem:[%s1 + $0x14] sm:$0xf]
    %v124 = vld [vmem:[%s1 + $0x18] sm:$0xff]
    %v125 = vld [vmem:[%s1 + $0x20] sm:$0xf]
    %v126 = vld [vmem:[%s1 + $0x24] sm:$0xff]
    %v127 = vld [vmem:[%s1 + $0x2c] sm:$0xf]
    %v128 = vld [vmem:[#allocation7] sm:$0x7]
    %v130 = vlaneseq
    %v131 = vshrl.u32 %v130, 7
    %v132 = vsub.s32 0, %v131
    %v133 = vrot.slane %v128, %v132
    %v134 = vlaneseq
    %v135 = vshrl.u32 %v134, 7
    %v136 = vsub.s32 1, %v135
    %v137 = vrot.slane %v128, %v136
    %v138 = vlaneseq
    %v139 = vshrl.u32 %v138, 7
    %v140 = vsub.s32 2, %v139
    %v141 = vrot.slane %v128, %v140
    %v161 = vunpack.c.l.b16 %v104
    %v162 = vunpack.c.l.b16 %v105
    %v163 = vunpack.c.l.b16 %v106
    %v164 = vunpack.c.l.b16 %v107
    %v165 = vunpack.c.l.b16 %v108
    %v166 = vunpack.c.l.b16 %v109
    %v167 = vunpack.c.l.b16 %v110
    %v168 = vunpack.c.l.b16 %v111
    %v169 = vunpack.c.l.b16 %v112
    %v170 = vunpack.c.l.b16 %v113
    %v171 = vunpack.c.l.b16 %v114
    %v172 = vunpack.c.l.b16 %v115
    %v173 = vunpack.c.l.b16 %v116
    %v174 = vunpack.c.l.b16 %v117
    %v175 = vunpack.c.l.b16 %v118
    %v176 = vunpack.c.l.b16 %v119
    %v177 = vpack.c.b16 %v162, %v161
    %v178 = vpack.c.b16 %v164, %v163
    %v179 = vpack.c.b16 %v166, %v165
    %v180 = vpack.c.b16 %v168, %v167
    %v181 = vpack.c.b16 %v170, %v169
    %v182 = vpack.c.b16 %v172, %v171
    %v183 = vpack.c.b16 %v174, %v173
    %v184 = vpack.c.b16 %v176, %v175
    %v193 = vunpack.c.l.b16 %v120
    %v194 = vunpack.c.h.b16 %v120
    %v195 = vunpack.c.l.b16 %v121
    %v196 = vunpack.c.l.b16 %v122
    %v197 = vunpack.c.h.b16 %v122
    %v198 = vunpack.c.l.b16 %v123
    %v199 = vunpack.c.l.b16 %v124
    %v200 = vunpack.c.h.b16 %v124
    %v201 = vunpack.c.l.b16 %v125
    %v202 = vunpack.c.l.b16 %v126
    %v203 = vunpack.c.h.b16 %v126
    %v204 = vunpack.c.l.b16 %v127
    %v205 = vpack.c.b16 %v196, %v193
    %v206 = vpack.c.b16 %v197, %v194
    %v207 = vpack.c.b16 %v198, %v195
    %v208 = vpack.c.b16 %v202, %v199
    %v209 = vpack.c.b16 %v203, %v200
    %v210 = vpack.c.b16 %v204, %v201
    %vm217 = vcmask 261120
    %v219 = vsel %vm217, %v177, 0
    %v222 = vsel %vm217, %v178, 0
    %v225 = vsel %vm217, %v179, 0
    %v228 = vsel %vm217, %v180, 0
    %v231 = vsel %vm217, %v181, 0
    %v234 = vsel %vm217, %v182, 0
    %v237 = vsel %vm217, %v183, 0
    %v240 = vsel %vm217, %v184, 0
    %242 = vmatprep.subr.bf16.mxu0 %v206
    %243 = vmatpush1.bf16.msra.mxu0 %v205
    %244 = vmatprep.subr.bf16.mxu0 %v209
    %245 = vmatpush1.bf16.msra.mxu0 %v208
    %246 = vmatprep.subr.bf16.mxu0 0
    %247 = vmatpush1.bf16.msra.mxu0 0
    %248 = vmatprep.subr.bf16.mxu0 0
    %249 = vmatpush1.bf16.msra.mxu0 0
    %250 = vmatprep.subr.bf16.mxu0 0
    %251 = vmatpush1.bf16.msra.mxu0 0
    %252 = vmatprep.subr.bf16.mxu0 0
    %253 = vmatpush1.bf16.msra.mxu0 0
    %254 = vmatprep.subr.bf16.mxu0 0
    %255 = vmatpush1.bf16.msra.mxu0 0
    %256 = vmatprep.subr.bf16.mxu0 0
    %257 = vmatpush1.bf16.msra.mxu0 0
    %258 = vmatprep.subr.bf16.mxu0 0
    %259 = vmatpush1.bf16.msra.mxu0 0
    %260 = vmatprep.subr.bf16.mxu0 0
    %261 = vmatpush1.bf16.msra.mxu0 0
    %262 = vmatprep.subr.bf16.mxu0 0
    %263 = vmatpush1.bf16.msra.mxu0 0
    %264 = vmatprep.subr.bf16.mxu0 0
    %265 = vmatpush1.bf16.msra.mxu0 0
    %266 = vmatprep.subr.bf16.mxu0 0
    %267 = vmatpush1.bf16.msra.mxu0 0
    %268 = vmatprep.subr.bf16.mxu0 0
    %269 = vmatpush1.bf16.msra.mxu0 0
    %270 = vmatprep.subr.bf16.mxu0 0
    %271 = vmatpush1.bf16.msra.mxu0 0
    %272 = vmatprep.subr.bf16.mxu0 0
    %273 = vmatpush1.bf16.msra.mxu0 0
    %274 = vmatprep.mubr.bf16.mxu0 0
    %275 = vmatmul.mubr.bf16.gmra.mrb[0].mxu0 %v219
    %v276 = vpop.f32.mrb[0].mxu0
    %v277 = vadd.f32 %v133, %v276
    %v278 = vpop.f32.mrb[0].mxu0
    %v279 = vadd.f32 %v137, %v278
    %v280 = vpop.f32.mrb[0].mxu0
    %v281 = vadd.f32 %v133, %v280
    %v282 = vpop.f32.mrb[0].mxu0
    %v283 = vadd.f32 %v137, %v282
    %284 = vmatprep.mubr.bf16.mxu0 0
    %285 = vmatmul.mubr.bf16.gmra.mrb[0].mxu0 %v222
    %v286 = vpop.f32.mrb[0].mxu0
    %v287 = vadd.f32 %v133, %v286
    %v288 = vpop.f32.mrb[0].mxu0
    %v289 = vadd.f32 %v137, %v288
    %v290 = vpop.f32.mrb[0].mxu0
    %v291 = vadd.f32 %v133, %v290
    %v292 = vpop.f32.mrb[0].mxu0
    %v293 = vadd.f32 %v137, %v292
    %294 = vmatprep.mubr.bf16.mxu0 0
    %295 = vmatmul.mubr.bf16.gmra.mrb[0].mxu0 %v225
    %v296 = vpop.f32.mrb[0].mxu0
    %v297 = vadd.f32 %v133, %v296
    %v298 = vpop.f32.mrb[0].mxu0
    %v299 = vadd.f32 %v137, %v298
    %v300 = vpop.f32.mrb[0].mxu0
    %v301 = vadd.f32 %v133, %v300
    %v302 = vpop.f32.mrb[0].mxu0
    %v303 = vadd.f32 %v137, %v302
    %304 = vmatprep.mubr.bf16.mxu0 0
    %305 = vmatmul.mubr.bf16.gmra.mrb[0].mxu0 %v228
    %v306 = vpop.f32.mrb[0].mxu0
    %v307 = vadd.f32 %v133, %v306
    %v308 = vpop.f32.mrb[0].mxu0
    %v309 = vadd.f32 %v137, %v308
    %v310 = vpop.f32.mrb[0].mxu0
    %v311 = vadd.f32 %v133, %v310
    %v312 = vpop.f32.mrb[0].mxu0
    %v313 = vadd.f32 %v137, %v312
    %314 = vmatprep.mubr.bf16.mxu0 0
    %315 = vmatmul.mubr.bf16.gmra.mrb[0].mxu0 %v231
    %v316 = vpop.f32.mrb[0].mxu0
    %v317 = vadd.f32 %v133, %v316
    %v318 = vpop.f32.mrb[0].mxu0
    %v319 = vadd.f32 %v137, %v318
    %v320 = vpop.f32.mrb[0].mxu0
    %v321 = vadd.f32 %v133, %v320
    %v322 = vpop.f32.mrb[0].mxu0
    %v323 = vadd.f32 %v137, %v322
    %324 = vmatprep.mubr.bf16.mxu0 0
    %325 = vmatmul.mubr.bf16.gmra.mrb[0].mxu0 %v234
    %v326 = vpop.f32.mrb[0].mxu0
    %v327 = vadd.f32 %v133, %v326
    %v328 = vpop.f32.mrb[0].mxu0
    %v329 = vadd.f32 %v137, %v328
    %v330 = vpop.f32.mrb[0].mxu0
    %v331 = vadd.f32 %v133, %v330
    %v332 = vpop.f32.mrb[0].mxu0
    %v333 = vadd.f32 %v137, %v332
    %334 = vmatprep.mubr.bf16.mxu0 0
    %335 = vmatmul.mubr.bf16.gmra.mrb[0].mxu0 %v237
    %v336 = vpop.f32.mrb[0].mxu0
    %v337 = vadd.f32 %v133, %v336
    %v338 = vpop.f32.mrb[0].mxu0
    %v339 = vadd.f32 %v137, %v338
    %v340 = vpop.f32.mrb[0].mxu0
    %v341 = vadd.f32 %v133, %v340
    %v342 = vpop.f32.mrb[0].mxu0
    %v343 = vadd.f32 %v137, %v342
    %344 = vmatprep.mubr.bf16.mxu0 0
    %345 = vmatmul.mubr.bf16.gmra.mrb[0].mxu0 %v240
    %v346 = vpop.f32.mrb[0].mxu0
    %v347 = vadd.f32 %v133, %v346
    %v348 = vpop.f32.mrb[0].mxu0
    %v349 = vadd.f32 %v137, %v348
    %v350 = vpop.f32.mrb[0].mxu0
    %v351 = vadd.f32 %v133, %v350
    %v352 = vpop.f32.mrb[0].mxu0
    %v353 = vadd.f32 %v137, %v352
    %354 = vdwg.mxu0
    %355 = vmatprep.subr.bf16.mxu0 0
    %356 = vmatpush1.bf16.msra.mxu0 %v207
    %357 = vmatprep.subr.bf16.mxu0 0
    %358 = vmatpush1.bf16.msra.mxu0 %v210
    %359 = vmatprep.subr.bf16.mxu0 0
    %360 = vmatpush1.bf16.msra.mxu0 0
    %361 = vmatprep.subr.bf16.mxu0 0
    %362 = vmatpush1.bf16.msra.mxu0 0
    %363 = vmatprep.subr.bf16.mxu0 0
    %364 = vmatpush1.bf16.msra.mxu0 0
    %365 = vmatprep.subr.bf16.mxu0 0
    %366 = vmatpush1.bf16.msra.mxu0 0
    %367 = vmatprep.subr.bf16.mxu0 0
    %368 = vmatpush1.bf16.msra.mxu0 0
    %369 = vmatprep.subr.bf16.mxu0 0
    %370 = vmatpush1.bf16.msra.mxu0 0
    %371 = vmatprep.subr.bf16.mxu0 0
    %372 = vmatpush1.bf16.msra.mxu0 0
    %373 = vmatprep.subr.bf16.mxu0 0
    %374 = vmatpush1.bf16.msra.mxu0 0
    %375 = vmatprep.subr.bf16.mxu0 0
    %376 = vmatpush1.bf16.msra.mxu0 0
    %377 = vmatprep.subr.bf16.mxu0 0
    %378 = vmatpush1.bf16.msra.mxu0 0
    %379 = vmatprep.subr.bf16.mxu0 0
    %380 = vmatpush1.bf16.msra.mxu0 0
    %381 = vmatprep.subr.bf16.mxu0 0
    %382 = vmatpush1.bf16.msra.mxu0 0
    %383 = vmatprep.subr.bf16.mxu0 0
    %384 = vmatpush1.bf16.msra.mxu0 0
    %385 = vmatprep.subr.bf16.mxu0 0
    %386 = vmatpush1.bf16.msra.mxu0 0
    %387 = vmatprep.mubr.bf16.mxu0 0
    %388 = vmatmul.mubr.bf16.gmra.mrb[0].mxu0 %v219
    %v389 = vpop.f32.mrb[0].mxu0
    %v390 = vadd.f32 %v141, %v389
    %v391 = vpop.f32.mrb[0].mxu0
    %v392 = vpop.f32.mrb[0].mxu0
    %v393 = vadd.f32 %v141, %v392
    %v394 = vpop.f32.mrb[0].mxu0
    %395 = vmatprep.mubr.bf16.mxu0 0
    %396 = vmatmul.mubr.bf16.gmra.mrb[0].mxu0 %v222
    %v397 = vpop.f32.mrb[0].mxu0
    %v398 = vadd.f32 %v141, %v397
    %v399 = vpop.f32.mrb[0].mxu0
    %v400 = vpop.f32.mrb[0].mxu0
    %v401 = vadd.f32 %v141, %v400
    %v402 = vpop.f32.mrb[0].mxu0
    %403 = vmatprep.mubr.bf16.mxu0 0
    %404 = vmatmul.mubr.bf16.gmra.mrb[0].mxu0 %v225
    %v405 = vpop.f32.mrb[0].mxu0
    %v406 = vadd.f32 %v141, %v405
    %v407 = vpop.f32.mrb[0].mxu0
    %v408 = vpop.f32.mrb[0].mxu0
    %v409 = vadd.f32 %v141, %v408
    %v410 = vpop.f32.mrb[0].mxu0
    %411 = vmatprep.mubr.bf16.mxu0 0
    %412 = vmatmul.mubr.bf16.gmra.mrb[0].mxu0 %v228
    %v413 = vpop.f32.mrb[0].mxu0
    %v414 = vadd.f32 %v141, %v413
    %v415 = vpop.f32.mrb[0].mxu0
    %v416 = vpop.f32.mrb[0].mxu0
    %v417 = vadd.f32 %v141, %v416
    %v418 = vpop.f32.mrb[0].mxu0
    %419 = vmatprep.mubr.bf16.mxu0 0
    %420 = vmatmul.mubr.bf16.gmra.mrb[0].mxu0 %v231
    %v421 = vpop.f32.mrb[0].mxu0
    %v422 = vadd.f32 %v141, %v421
    %v423 = vpop.f32.mrb[0].mxu0
    %v424 = vpop.f32.mrb[0].mxu0
    %v425 = vadd.f32 %v141, %v424
    %v426 = vpop.f32.mrb[0].mxu0
    %427 = vmatprep.mubr.bf16.mxu0 0
    %428 = vmatmul.mubr.bf16.gmra.mrb[0].mxu0 %v234
    %v429 = vpop.f32.mrb[0].mxu0
    %v430 = vadd.f32 %v141, %v429
    %v431 = vpop.f32.mrb[0].mxu0
    %v432 = vpop.f32.mrb[0].mxu0
    %v433 = vadd.f32 %v141, %v432
    %v434 = vpop.f32.mrb[0].mxu0
    %435 = vmatprep.mubr.bf16.mxu0 0
    %436 = vmatmul.mubr.bf16.gmra.mrb[0].mxu0 %v237
    %v437 = vpop.f32.mrb[0].mxu0
    %v438 = vadd.f32 %v141, %v437
    %v439 = vpop.f32.mrb[0].mxu0
    %v440 = vpop.f32.mrb[0].mxu0
    %v441 = vadd.f32 %v141, %v440
    %v442 = vpop.f32.mrb[0].mxu0
    %443 = vmatprep.mubr.bf16.mxu0 0
    %444 = vmatmul.mubr.bf16.gmra.mrb[0].mxu0 %v240
    %v445 = vpop.f32.mrb[0].mxu0
    %v446 = vadd.f32 %v141, %v445
    %v447 = vpop.f32.mrb[0].mxu0
    %v448 = vpop.f32.mrb[0].mxu0
    %v449 = vadd.f32 %v141, %v448
    %v450 = vpop.f32.mrb[0].mxu0
    %451 = vdwg.mxu0
    %452 = vst [vmem:[#allocation2] sm:$0xff] %v277
    %453 = vst [vmem:[#allocation2 + $0x8] sm:$0xff] %v279
    %454 = vst [vmem:[#allocation2 + $0x10] sm:$0xff] %v390
    %455 = vst [vmem:[#allocation2 + $0x18] sm:$0xff] %v281
    %456 = vst [vmem:[#allocation2 + $0x20] sm:$0xff] %v283
    %457 = vst [vmem:[#allocation2 + $0x28] sm:$0xff] %v393
    %458 = vst [vmem:[#allocation2 + $0x30] sm:$0xff] %v287
    %459 = vst [vmem:[#allocation2 + $0x38] sm:$0xff] %v289
    %460 = vst [vmem:[#allocation2 + $0x40] sm:$0xff] %v398
    %461 = vst [vmem:[#allocation2 + $0x48] sm:$0xff] %v291
    %462 = vst [vmem:[#allocation2 + $0x50] sm:$0xff] %v293
    %463 = vst [vmem:[#allocation2 + $0x58] sm:$0xff] %v401
    %464 = vst [vmem:[#allocation2 + $0x60] sm:$0xff] %v297
    %465 = vst [vmem:[#allocation2 + $0x68] sm:$0xff] %v299
    %466 = vst [vmem:[#allocation2 + $0x70] sm:$0xff] %v406
    %467 = vst [vmem:[#allocation2 + $0x78] sm:$0xff] %v301
    %468 = vst [vmem:[#allocation2 + $0x80] sm:$0xff] %v303
    %469 = vst [vmem:[#allocation2 + $0x88] sm:$0xff] %v409
    %470 = vst [vmem:[#allocation2 + $0x90] sm:$0xff] %v307
    %471 = vst [vmem:[#allocation2 + $0x98] sm:$0xff] %v309
    %472 = vst [vmem:[#allocation2 + $0xa0] sm:$0xff] %v414
    %473 = vst [vmem:[#allocation2 + $0xa8] sm:$0xff] %v311
    %474 = vst [vmem:[#allocation2 + $0xb0] sm:$0xff] %v313
    %475 = vst [vmem:[#allocation2 + $0xb8] sm:$0xff] %v417
    %476 = vst [vmem:[#allocation2 + $0xc0] sm:$0xff] %v317
    %477 = vst [vmem:[#allocation2 + $0xc8] sm:$0xff] %v319
    %478 = vst [vmem:[#allocation2 + $0xd0] sm:$0xff] %v422
    %479 = vst [vmem:[#allocation2 + $0xd8] sm:$0xff] %v321
    %480 = vst [vmem:[#allocation2 + $0xe0] sm:$0xff] %v323
    %481 = vst [vmem:[#allocation2 + $0xe8] sm:$0xff] %v425
    %482 = vst [vmem:[#allocation2 + $0xf0] sm:$0xff] %v327
    %483 = vst [vmem:[#allocation2 + $0xf8] sm:$0xff] %v329
    %484 = vst [vmem:[#allocation2 + $0x100] sm:$0xff] %v430
    %485 = vst [vmem:[#allocation2 + $0x108] sm:$0xff] %v331
    %486 = vst [vmem:[#allocation2 + $0x110] sm:$0xff] %v333
    %487 = vst [vmem:[#allocation2 + $0x118] sm:$0xff] %v433
    %488 = vst [vmem:[#allocation2 + $0x120] sm:$0xff] %v337
    %489 = vst [vmem:[#allocation2 + $0x128] sm:$0xff] %v339
    %490 = vst [vmem:[#allocation2 + $0x130] sm:$0xff] %v438
    %491 = vst [vmem:[#allocation2 + $0x138] sm:$0xff] %v341
    %492 = vst [vmem:[#allocation2 + $0x140] sm:$0xff] %v343
    %493 = vst [vmem:[#allocation2 + $0x148] sm:$0xff] %v441
    %494 = vst [vmem:[#allocation2 + $0x150] sm:$0xff] %v347
    %495 = vst [vmem:[#allocation2 + $0x158] sm:$0xff] %v349
    %496 = vst [vmem:[#allocation2 + $0x160] sm:$0xff] %v446
    %497 = vst [vmem:[#allocation2 + $0x168] sm:$0xff] %v351
    %498 = vst [vmem:[#allocation2 + $0x170] sm:$0xff] %v353
    %499 = vst [vmem:[#allocation2 + $0x178] sm:$0xff] %v449
    %v500 = vld [vmem:[#allocation4] sm:$0xff]
    %v501 = vld [vmem:[#allocation4 + $0x8] sm:$0xf]
    %v502 = vld [vmem:[#allocation4 + $0xc] sm:$0xff]
    %v503 = vld [vmem:[#allocation4 + $0x14] sm:$0xf]
    %v504 = vld [vmem:[#allocation4 + $0x18] sm:$0xff]
    %v505 = vld [vmem:[#allocation4 + $0x20] sm:$0xf]
    %v506 = vld [vmem:[#allocation4 + $0x24] sm:$0xff]
    %v507 = vld [vmem:[#allocation4 + $0x2c] sm:$0xf]
    %v508 = vld [vmem:[#allocation4 + $0x30] sm:$0xff]
    %v509 = vld [vmem:[#allocation4 + $0x38] sm:$0xf]
    %v510 = vld [vmem:[#allocation4 + $0x3c] sm:$0xff]
    %v511 = vld [vmem:[#allocation4 + $0x44] sm:$0xf]
    %v512 = vld [vmem:[#allocation4 + $0x48] sm:$0xff]
    %v513 = vld [vmem:[#allocation4 + $0x50] sm:$0xf]
    %v514 = vld [vmem:[#allocation4 + $0x54] sm:$0xff]
    %v515 = vld [vmem:[#allocation4 + $0x5c] sm:$0xf]
    %v516 = vld [vmem:[#allocation4 + $0x60] sm:$0xff]
    %v517 = vld [vmem:[#allocation4 + $0x68] sm:$0xf]
    %v518 = vld [vmem:[#allocation4 + $0x6c] sm:$0xff]
    %v519 = vld [vmem:[#allocation4 + $0x74] sm:$0xf]
    %v520 = vld [vmem:[#allocation4 + $0x78] sm:$0xff]
    %v521 = vld [vmem:[#allocation4 + $0x80] sm:$0xf]
    %v522 = vld [vmem:[#allocation4 + $0x84] sm:$0xff]
    %v523 = vld [vmem:[#allocation4 + $0x8c] sm:$0xf]
    %v524 = vld [vmem:[#allocation4 + $0x90] sm:$0xff]
    %v525 = vld [vmem:[#allocation4 + $0x98] sm:$0xf]
    %v526 = vld [vmem:[#allocation4 + $0x9c] sm:$0xff]
    %v527 = vld [vmem:[#allocation4 + $0xa4] sm:$0xf]
    %v528 = vld [vmem:[#allocation4 + $0xa8] sm:$0xff]
    %v529 = vld [vmem:[#allocation4 + $0xb0] sm:$0xf]
    %v530 = vld [vmem:[#allocation4 + $0xb4] sm:$0xff]
    %v531 = vld [vmem:[#allocation4 + $0xbc] sm:$0xf]
    %v532 = vld [vmem:[%s4] sm:$0x1]
    %v533 = vld [vmem:[#allocation2] sm:$0xff]
    %v534 = vld [vmem:[#allocation2 + $0x8] sm:$0xff]
    %v535 = vld [vmem:[#allocation2 + $0x10] sm:$0xff]
    %v536 = vld [vmem:[#allocation2 + $0x18] sm:$0xff]
    %v537 = vld [vmem:[#allocation2 + $0x20] sm:$0xff]
    %v538 = vld [vmem:[#allocation2 + $0x28] sm:$0xff]
    %v571 = vunpack.c.l.b16 %v500
    %v572 = vunpack.c.h.b16 %v500
    %v573 = vunpack.c.l.b16 %v501
    %v574 = vunpack.c.l.b16 %v502
    %v575 = vunpack.c.h.b16 %v502
    %v576 = vunpack.c.l.b16 %v503
    %v577 = vunpack.c.l.b16 %v504
    %v578 = vunpack.c.h.b16 %v504
    %v579 = vunpack.c.l.b16 %v505
    %v580 = vunpack.c.l.b16 %v506
    %v581 = vunpack.c.h.b16 %v506
    %v582 = vunpack.c.l.b16 %v507
    %v583 = vunpack.c.l.b16 %v508
    %v584 = vunpack.c.h.b16 %v508
    %v585 = vunpack.c.l.b16 %v509
    %v586 = vunpack.c.l.b16 %v510
    %v587 = vunpack.c.h.b16 %v510
    %v588 = vunpack.c.l.b16 %v511
    %v589 = vunpack.c.l.b16 %v512
    %v590 = vunpack.c.h.b16 %v512
    %v591 = vunpack.c.l.b16 %v513
    %v592 = vunpack.c.l.b16 %v514
    %v593 = vunpack.c.h.b16 %v514
    %v594 = vunpack.c.l.b16 %v515
    %v595 = vunpack.c.l.b16 %v516
    %v596 = vunpack.c.h.b16 %v516
    %v597 = vunpack.c.l.b16 %v517
    %v598 = vunpack.c.l.b16 %v518
    %v599 = vunpack.c.h.b16 %v518
    %v600 = vunpack.c.l.b16 %v519
    %v601 = vunpack.c.l.b16 %v520
    %v602 = vunpack.c.h.b16 %v520
    %v603 = vunpack.c.l.b16 %v521
    %v604 = vunpack.c.l.b16 %v522
    %v605 = vunpack.c.h.b16 %v522
    %v606 = vunpack.c.l.b16 %v523
    %v607 = vunpack.c.l.b16 %v524
    %v608 = vunpack.c.h.b16 %v524
    %v609 = vunpack.c.l.b16 %v525
    %v610 = vunpack.c.l.b16 %v526
    %v611 = vunpack.c.h.b16 %v526
    %v612 = vunpack.c.l.b16 %v527
    %v613 = vunpack.c.l.b16 %v528
    %v614 = vunpack.c.h.b16 %v528
    %v615 = vunpack.c.l.b16 %v529
    %v616 = vunpack.c.l.b16 %v530
    %v617 = vunpack.c.h.b16 %v530
    %v618 = vunpack.c.l.b16 %v531
    %v619 = vpack.c.b16 %v574, %v571
    %v620 = vpack.c.b16 %v575, %v572
    %v621 = vpack.c.b16 %v576, %v573
    %v622 = vpack.c.b16 %v580, %v577
    %v623 = vpack.c.b16 %v581, %v578
    %v624 = vpack.c.b16 %v582, %v579
    %v625 = vpack.c.b16 %v586, %v583
    %v626 = vpack.c.b16 %v587, %v584
    %v627 = vpack.c.b16 %v588, %v585
    %v628 = vpack.c.b16 %v592, %v589
    %v629 = vpack.c.b16 %v593, %v590
    %v630 = vpack.c.b16 %v594, %v591
    %v631 = vpack.c.b16 %v598, %v595
    %v632 = vpack.c.b16 %v599, %v596
    %v633 = vpack.c.b16 %v600, %v597
    %v634 = vpack.c.b16 %v604, %v601
    %v635 = vpack.c.b16 %v605, %v602
    %v636 = vpack.c.b16 %v606, %v603
    %v637 = vpack.c.b16 %v610, %v607
    %v638 = vpack.c.b16 %v611, %v608
    %v639 = vpack.c.b16 %v612, %v609
    %v640 = vpack.c.b16 %v616, %v613
    %v641 = vpack.c.b16 %v617, %v614
    %v642 = vpack.c.b16 %v618, %v615
    %667 = vmatprep.subr.bf16.mxu0 %v620
    %668 = vmatpush1.bf16.msra.mxu0 %v619
    %669 = vmatprep.subr.bf16.mxu0 %v623
    %670 = vmatpush1.bf16.msra.mxu0 %v622
    %671 = vmatprep.subr.bf16.mxu0 %v626
    %672 = vmatpush1.bf16.msra.mxu0 %v625
    %673 = vmatprep.subr.bf16.mxu0 %v629
    %674 = vmatpush1.bf16.msra.mxu0 %v628
    %675 = vmatprep.subr.bf16.mxu0 %v632
    %676 = vmatpush1.bf16.msra.mxu0 %v631
    %677 = vmatprep.subr.bf16.mxu0 %v635
    %678 = vmatpush1.bf16.msra.mxu0 %v634
    %679 = vmatprep.subr.bf16.mxu0 %v638
    %680 = vmatpush1.bf16.msra.mxu0 %v637
    %681 = vmatprep.subr.bf16.mxu0 %v641
    %682 = vmatpush1.bf16.msra.mxu0 %v640
    %683 = vmatprep.subr.bf16.mxu0 0
    %684 = vmatpush1.bf16.msra.mxu0 0
    %685 = vmatprep.subr.bf16.mxu0 0
    %686 = vmatpush1.bf16.msra.mxu0 0
    %687 = vmatprep.subr.bf16.mxu0 0
    %688 = vmatpush1.bf16.msra.mxu0 0
    %689 = vmatprep.subr.bf16.mxu0 0
    %690 = vmatpush1.bf16.msra.mxu0 0
    %691 = vmatprep.subr.bf16.mxu0 0
    %692 = vmatpush1.bf16.msra.mxu0 0
    %693 = vmatprep.subr.bf16.mxu0 0
    %694 = vmatpush1.bf16.msra.mxu0 0
    %695 = vmatprep.subr.bf16.mxu0 0
    %696 = vmatpush1.bf16.msra.mxu0 0
    %697 = vmatprep.subr.bf16.mxu0 0
    %698 = vmatpush1.bf16.msra.mxu0 0
    %699 = vmatprep.mubr.bf16.mxu0 0
    %700 = vmatmul.mubr.bf16.gmra.mrb[0].mxu0 0
    %v701 = vpop.f32.mrb[0].mxu0
    %v702 = vadd.f32 0.0, %v701
    %v703 = vpop.f32.mrb[0].mxu0
    %v704 = vadd.f32 0.0, %v703
    %v705 = vpop.f32.mrb[0].mxu0
    %v706 = vadd.f32 0.0, %v705
    %v707 = vpop.f32.mrb[0].mxu0
    %v708 = vadd.f32 0.0, %v707
    %709 = vdwg.mxu0
    %710 = vmatprep.subr.bf16.mxu0 0
    %711 = vmatpush1.bf16.msra.mxu0 %v621
    %712 = vmatprep.subr.bf16.mxu0 0
    %713 = vmatpush1.bf16.msra.mxu0 %v624
    %714 = vmatprep.subr.bf16.mxu0 0
    %715 = vmatpush1.bf16.msra.mxu0 %v627
    %716 = vmatprep.subr.bf16.mxu0 0
    %717 = vmatpush1.bf16.msra.mxu0 %v630
    %718 = vmatprep.subr.bf16.mxu0 0
    %719 = vmatpush1.bf16.msra.mxu0 %v633
    %720 = vmatprep.subr.bf16.mxu0 0
    %721 = vmatpush1.bf16.msra.mxu0 %v636
    %722 = vmatprep.subr.bf16.mxu0 0
    %723 = vmatpush1.bf16.msra.mxu0 %v639
    %724 = vmatprep.subr.bf16.mxu0 0
    %725 = vmatpush1.bf16.msra.mxu0 %v642
    %726 = vmatprep.subr.bf16.mxu0 0
    %727 = vmatpush1.bf16.msra.mxu0 0
    %728 = vmatprep.subr.bf16.mxu0 0
    %729 = vmatpush1.bf16.msra.mxu0 0
    %730 = vmatprep.subr.bf16.mxu0 0
    %731 = vmatpush1.bf16.msra.mxu0 0
    %732 = vmatprep.subr.bf16.mxu0 0
    %733 = vmatpush1.bf16.msra.mxu0 0
    %734 = vmatprep.subr.bf16.mxu0 0
    %735 = vmatpush1.bf16.msra.mxu0 0
    %736 = vmatprep.subr.bf16.mxu0 0
    %737 = vmatpush1.bf16.msra.mxu0 0
    %738 = vmatprep.subr.bf16.mxu0 0
    %739 = vmatpush1.bf16.msra.mxu0 0
    %740 = vmatprep.subr.bf16.mxu0 0
    %741 = vmatpush1.bf16.msra.mxu0 0
    %742 = vmatprep.mubr.bf16.mxu0 0
    %743 = vmatmul.mubr.bf16.gmra.mrb[0].mxu0 0
    %v744 = vpop.f32.mrb[0].mxu0
    %v745 = vadd.f32 0.0, %v744
    %v746 = vpop.f32.mrb[0].mxu0
    %v747 = vpop.f32.mrb[0].mxu0
    %v748 = vadd.f32 0.0, %v747
    %v749 = vpop.f32.mrb[0].mxu0
    %750 = vdwg.mxu0
    %v751 = vadd.f32 %v533, %v702
    %v752 = vadd.f32 %v536, %v706
    %v753 = vxor.u32 %v751, 2147483648
    %v754 = vxor.u32 %v752, 2147483648
    %v755 = vmul.f32 %v753, 1.442695
    %v756 = vpow.pop %v755
    %v757 = vmul.f32 %v754, 1.442695
    %v758 = vpow.pop %v757
    %v759 = vadd.f32 %v756, 1.0
    %v760 = vadd.f32 %v758, 1.0
    %v761 = vrcp.pop %v759
    %v762 = vmul.f32 1.0, %v761
    %v763 = vrcp.pop %v760
    %v764 = vmul.f32 1.0, %v763
    %v765 = vadd.f32 %v534, %v704
    %v766 = vadd.f32 %v537, %v708
    %v767 = vxor.u32 %v765, 2147483648
    %v768 = vxor.u32 %v766, 2147483648
    %v769 = vmul.f32 %v767, 1.442695
    %v770 = vpow.pop %v769
    %v771 = vmul.f32 %v768, 1.442695
    %v772 = vpow.pop %v771
    %v773 = vadd.f32 %v770, 1.0
    %v774 = vadd.f32 %v772, 1.0
    %v775 = vrcp.pop %v773
    %v776 = vmul.f32 1.0, %v775
    %v777 = vrcp.pop %v774
    %v778 = vmul.f32 1.0, %v777
    %v780 = vlaneseq
    %v781 = vshrl.u32 %v780, 7
    %v782 = vsub.s32 0, %v781
    %v783 = vrot.slane %v532, %v782
    %v785 = vadd.f32 %v745, %v783
    %v786 = vadd.f32 %v748, %v783
    %v787 = vmul.f32 %v762, %v785
    %v788 = vmul.f32 %v764, %v786
    %v789 = vadd.f32 %v535, %v787
    %v790 = vadd.f32 %v538, %v788
    %v791 = vtanh.pop %v789
    %v792 = vtanh.pop %v790
    %v793 = vsub.f32 1.0, %v776
    %v794 = vsub.f32 1.0, %v778
    %v795 = vmul.f32 %v793, %v791
    %v796 = vmul.f32 %v794, %v792
    %v797 = vmul.f32 %v776, 0.0
    %v798 = vmul.f32 %v778, 0.0
    %v799 = vadd.f32 %v795, %v797
    %v800 = vadd.f32 %v796, %v798
    %v801 = vpack.c.bf16 %v800, %v799
    %802 = vst [vmem:[#allocation3] sm:$0xff] %v801
    %v803 = vld [vmem:[#allocation2 + $0x30] sm:$0xff]
    %v804 = vld [vmem:[#allocation2 + $0x38] sm:$0xff]
    %v805 = vld [vmem:[#allocation2 + $0x40] sm:$0xff]
    %v806 = vld [vmem:[#allocation2 + $0x48] sm:$0xff]
    %v807 = vld [vmem:[#allocation2 + $0x50] sm:$0xff]
    %v808 = vld [vmem:[#allocation2 + $0x58] sm:$0xff]
    %809 = vmatprep.subr.bf16.mxu0 %v620
    %810 = vmatpush1.bf16.msra.mxu0 %v619
    %811 = vmatprep.subr.bf16.mxu0 %v623
    %812 = vmatpush1.bf16.msra.mxu0 %v622
    %813 = vmatprep.subr.bf16.mxu0 %v626
    %814 = vmatpush1.bf16.msra.mxu0 %v625
    %815 = vmatprep.subr.bf16.mxu0 %v629
    %816 = vmatpush1.bf16.msra.mxu0 %v628
    %817 = vmatprep.subr.bf16.mxu0 %v632
    %818 = vmatpush1.bf16.msra.mxu0 %v631
    %819 = vmatprep.subr.bf16.mxu0 %v635
    %820 = vmatpush1.bf16.msra.mxu0 %v634
    %821 = vmatprep.subr.bf16.mxu0 %v638
    %822 = vmatpush1.bf16.msra.mxu0 %v637
    %823 = vmatprep.subr.bf16.mxu0 %v641
    %824 = vmatpush1.bf16.msra.mxu0 %v640
    %825 = vmatprep.subr.bf16.mxu0 0
    %826 = vmatpush1.bf16.msra.mxu0 0
    %827 = vmatprep.subr.bf16.mxu0 0
    %828 = vmatpush1.bf16.msra.mxu0 0
    %829 = vmatprep.subr.bf16.mxu0 0
    %830 = vmatpush1.bf16.msra.mxu0 0
    %831 = vmatprep.subr.bf16.mxu0 0
    %832 = vmatpush1.bf16.msra.mxu0 0
    %833 = vmatprep.subr.bf16.mxu0 0
    %834 = vmatpush1.bf16.msra.mxu0 0
    %835 = vmatprep.subr.bf16.mxu0 0
    %836 = vmatpush1.bf16.msra.mxu0 0
    %837 = vmatprep.subr.bf16.mxu0 0
    %838 = vmatpush1.bf16.msra.mxu0 0
    %839 = vmatprep.subr.bf16.mxu0 0
    %840 = vmatpush1.bf16.msra.mxu0 0
    %841 = vmatprep.mubr.bf16.mxu0 0
    %842 = vmatmul.mubr.bf16.gmra.mrb[0].mxu0 %v801
    %v843 = vpop.f32.mrb[0].mxu0
    %v844 = vadd.f32 0.0, %v843
    %v845 = vpop.f32.mrb[0].mxu0
    %v846 = vadd.f32 0.0, %v845
    %v847 = vpop.f32.mrb[0].mxu0
    %v848 = vadd.f32 0.0, %v847
    %v849 = vpop.f32.mrb[0].mxu0
    %v850 = vadd.f32 0.0, %v849
    %851 = vdwg.mxu0
    %852 = vmatprep.subr.bf16.mxu0 0
    %853 = vmatpush1.bf16.msra.mxu0 %v621
    %854 = vmatprep.subr.bf16.mxu0 0
    %855 = vmatpush1.bf16.msra.mxu0 %v624
    %856 = vmatprep.subr.bf16.mxu0 0
    %857 = vmatpush1.bf16.msra.mxu0 %v627
    %858 = vmatprep.subr.bf16.mxu0 0
    %859 = vmatpush1.bf16.msra.mxu0 %v630
    %860 = vmatprep.subr.bf16.mxu0 0
    %861 = vmatpush1.bf16.msra.mxu0 %v633
    %862 = vmatprep.subr.bf16.mxu0 0
    %863 = vmatpush1.bf16.msra.mxu0 %v636
    %864 = vmatprep.subr.bf16.mxu0 0
    %865 = vmatpush1.bf16.msra.mxu0 %v639
    %866 = vmatprep.subr.bf16.mxu0 0
    %867 = vmatpush1.bf16.msra.mxu0 %v642
    %868 = vmatprep.subr.bf16.mxu0 0
    %869 = vmatpush1.bf16.msra.mxu0 0
    %870 = vmatprep.subr.bf16.mxu0 0
    %871 = vmatpush1.bf16.msra.mxu0 0
    %872 = vmatprep.subr.bf16.mxu0 0
    %873 = vmatpush1.bf16.msra.mxu0 0
    %874 = vmatprep.subr.bf16.mxu0 0
    %875 = vmatpush1.bf16.msra.mxu0 0
    %876 = vmatprep.subr.bf16.mxu0 0
    %877 = vmatpush1.bf16.msra.mxu0 0
    %878 = vmatprep.subr.bf16.mxu0 0
    %879 = vmatpush1.bf16.msra.mxu0 0
    %880 = vmatprep.subr.bf16.mxu0 0
    %881 = vmatpush1.bf16.msra.mxu0 0
    %882 = vmatprep.subr.bf16.mxu0 0
    %883 = vmatpush1.bf16.msra.mxu0 0
    %884 = vmatprep.mubr.bf16.mxu0 0
    %885 = vmatmul.mubr.bf16.gmra.mrb[0].mxu0 %v801
    %v886 = vpop.f32.mrb[0].mxu0
    %v887 = vadd.f32 0.0, %v886
    %v888 = vpop.f32.mrb[0].mxu0
    %v889 = vpop.f32.mrb[0].mxu0
    %v890 = vadd.f32 0.0, %v889
    %v891 = vpop.f32.mrb[0].mxu0
    %892 = vdwg.mxu0
    %v893 = vadd.f32 %v803, %v844
    %v894 = vadd.f32 %v806, %v848
    %v895 = vxor.u32 %v893, 2147483648
    %v896 = vxor.u32 %v894, 2147483648
    %v897 = vmul.f32 %v895, 1.442695
    %v898 = vpow.pop %v897
    %v899 = vmul.f32 %v896, 1.442695
    %v900 = vpow.pop %v899
    %v901 = vadd.f32 %v898, 1.0
    %v902 = vadd.f32 %v900, 1.0
    %v903 = vrcp.pop %v901
    %v904 = vmul.f32 1.0, %v903
    %v905 = vrcp.pop %v902
    %v906 = vmul.f32 1.0, %v905
    %v907 = vadd.f32 %v804, %v846
    %v908 = vadd.f32 %v807, %v850
    %v909 = vxor.u32 %v907, 2147483648
    %v910 = vxor.u32 %v908, 2147483648
    %v911 = vmul.f32 %v909, 1.442695
    %v912 = vpow.pop %v911
    %v913 = vmul.f32 %v910, 1.442695
    %v914 = vpow.pop %v913
    %v915 = vadd.f32 %v912, 1.0
    %v916 = vadd.f32 %v914, 1.0
    %v917 = vrcp.pop %v915
    %v918 = vmul.f32 1.0, %v917
    %v919 = vrcp.pop %v916
    %v920 = vmul.f32 1.0, %v919
    %v921 = vadd.f32 %v887, %v783
    %v922 = vadd.f32 %v890, %v783
    %v923 = vmul.f32 %v904, %v921
    %v924 = vmul.f32 %v906, %v922
    %v925 = vadd.f32 %v805, %v923
    %v926 = vadd.f32 %v808, %v924
    %v927 = vtanh.pop %v925
    %v928 = vtanh.pop %v926
    %v929 = vsub.f32 1.0, %v918
    %v930 = vsub.f32 1.0, %v920
    %v931 = vmul.f32 %v929, %v927
    %v932 = vmul.f32 %v930, %v928
    %v933 = vmul.f32 %v918, %v799
    %v934 = vmul.f32 %v920, %v800
    %v935 = vadd.f32 %v931, %v933
    %v936 = vadd.f32 %v932, %v934
    %v937 = vpack.c.bf16 %v936, %v935
    %938 = vst [vmem:[#allocation3 + $0x8] sm:$0xff] %v937
    %v939 = vld [vmem:[#allocation2 + $0x60] sm:$0xff]
    %v940 = vld [vmem:[#allocation2 + $0x68] sm:$0xff]
    %v941 = vld [vmem:[#allocation2 + $0x70] sm:$0xff]
    %v942 = vld [vmem:[#allocation2 + $0x78] sm:$0xff]
    %v943 = vld [vmem:[#allocation2 + $0x80] sm:$0xff]
    %v944 = vld [vmem:[#allocation2 + $0x88] sm:$0xff]
    %945 = vmatprep.subr.bf16.mxu0 %v620
    %946 = vmatpush1.bf16.msra.mxu0 %v619
    %947 = vmatprep.subr.bf16.mxu0 %v623
    %948 = vmatpush1.bf16.msra.mxu0 %v622
    %949 = vmatprep.subr.bf16.mxu0 %v626
    %950 = vmatpush1.bf16.msra.mxu0 %v625
    %951 = vmatprep.subr.bf16.mxu0 %v629
    %952 = vmatpush1.bf16.msra.mxu0 %v628
    %953 = vmatprep.subr.bf16.mxu0 %v632
    %954 = vmatpush1.bf16.msra.mxu0 %v631
    %955 = vmatprep.subr.bf16.mxu0 %v635
    %956 = vmatpush1.bf16.msra.mxu0 %v634
    %957 = vmatprep.subr.bf16.mxu0 %v638
    %958 = vmatpush1.bf16.msra.mxu0 %v637
    %959 = vmatprep.subr.bf16.mxu0 %v641
    %960 = vmatpush1.bf16.msra.mxu0 %v640
    %961 = vmatprep.subr.bf16.mxu0 0
    %962 = vmatpush1.bf16.msra.mxu0 0
    %963 = vmatprep.subr.bf16.mxu0 0
    %964 = vmatpush1.bf16.msra.mxu0 0
    %965 = vmatprep.subr.bf16.mxu0 0
    %966 = vmatpush1.bf16.msra.mxu0 0
    %967 = vmatprep.subr.bf16.mxu0 0
    %968 = vmatpush1.bf16.msra.mxu0 0
    %969 = vmatprep.subr.bf16.mxu0 0
    %970 = vmatpush1.bf16.msra.mxu0 0
    %971 = vmatprep.subr.bf16.mxu0 0
    %972 = vmatpush1.bf16.msra.mxu0 0
    %973 = vmatprep.subr.bf16.mxu0 0
    %974 = vmatpush1.bf16.msra.mxu0 0
    %975 = vmatprep.subr.bf16.mxu0 0
    %976 = vmatpush1.bf16.msra.mxu0 0
    %977 = vmatprep.mubr.bf16.mxu0 0
    %978 = vmatmul.mubr.bf16.gmra.mrb[0].mxu0 %v937
    %v979 = vpop.f32.mrb[0].mxu0
    %v980 = vadd.f32 0.0, %v979
    %v981 = vpop.f32.mrb[0].mxu0
    %v982 = vadd.f32 0.0, %v981
    %v983 = vpop.f32.mrb[0].mxu0
    %v984 = vadd.f32 0.0, %v983
    %v985 = vpop.f32.mrb[0].mxu0
    %v986 = vadd.f32 0.0, %v985
    %987 = vdwg.mxu0
    %988 = vmatprep.subr.bf16.mxu0 0
    %989 = vmatpush1.bf16.msra.mxu0 %v621
    %990 = vmatprep.subr.bf16.mxu0 0
    %991 = vmatpush1.bf16.msra.mxu0 %v624
    %992 = vmatprep.subr.bf16.mxu0 0
    %993 = vmatpush1.bf16.msra.mxu0 %v627
    %994 = vmatprep.subr.bf16.mxu0 0
    %995 = vmatpush1.bf16.msra.mxu0 %v630
    %996 = vmatprep.subr.bf16.mxu0 0
    %997 = vmatpush1.bf16.msra.mxu0 %v633
    %998 = vmatprep.subr.bf16.mxu0 0
    %999 = vmatpush1.bf16.msra.mxu0 %v636
    %1000 = vmatprep.subr.bf16.mxu0 0
    %1001 = vmatpush1.bf16.msra.mxu0 %v639
    %1002 = vmatprep.subr.bf16.mxu0 0
    %1003 = vmatpush1.bf16.msra.mxu0 %v642
    %1004 = vmatprep.subr.bf16.mxu0 0
    %1005 = vmatpush1.bf16.msra.mxu0 0
    %1006 = vmatprep.subr.bf16.mxu0 0
    %1007 = vmatpush1.bf16.msra.mxu0 0
    %1008 = vmatprep.subr.bf16.mxu0 0
    %1009 = vmatpush1.bf16.msra.mxu0 0
    %1010 = vmatprep.subr.bf16.mxu0 0
    %1011 = vmatpush1.bf16.msra.mxu0 0
    %1012 = vmatprep.subr.bf16.mxu0 0
    %1013 = vmatpush1.bf16.msra.mxu0 0
    %1014 = vmatprep.subr.bf16.mxu0 0
    %1015 = vmatpush1.bf16.msra.mxu0 0
    %1016 = vmatprep.subr.bf16.mxu0 0
    %1017 = vmatpush1.bf16.msra.mxu0 0
    %1018 = vmatprep.subr.bf16.mxu0 0
    %1019 = vmatpush1.bf16.msra.mxu0 0
    %1020 = vmatprep.mubr.bf16.mxu0 0
    %1021 = vmatmul.mubr.bf16.gmra.mrb[0].mxu0 %v937
    %v1022 = vpop.f32.mrb[0].mxu0
    %v1023 = vadd.f32 0.0, %v1022
    %v1024 = vpop.f32.mrb[0].mxu0
    %v1025 = vpop.f32.mrb[0].mxu0
    %v1026 = vadd.f32 0.0, %v1025
    %v1027 = vpop.f32.mrb[0].mxu0
    %1028 = vdwg.mxu0
    %v1029 = vadd.f32 %v939, %v980
    %v1030 = vadd.f32 %v942, %v984
    %v1031 = vxor.u32 %v1029, 2147483648
    %v1032 = vxor.u32 %v1030, 2147483648
    %v1033 = vmul.f32 %v1031, 1.442695
    %v1034 = vpow.pop %v1033
    %v1035 = vmul.f32 %v1032, 1.442695
    %v1036 = vpow.pop %v1035
    %v1037 = vadd.f32 %v1034, 1.0
    %v1038 = vadd.f32 %v1036, 1.0
    %v1039 = vrcp.pop %v1037
    %v1040 = vmul.f32 1.0, %v1039
    %v1041 = vrcp.pop %v1038
    %v1042 = vmul.f32 1.0, %v1041
    %v1043 = vadd.f32 %v940, %v982
    %v1044 = vadd.f32 %v943, %v986
    %v1045 = vxor.u32 %v1043, 2147483648
    %v1046 = vxor.u32 %v1044, 2147483648
    %v1047 = vmul.f32 %v1045, 1.442695
    %v1048 = vpow.pop %v1047
    %v1049 = vmul.f32 %v1046, 1.442695
    %v1050 = vpow.pop %v1049
    %v1051 = vadd.f32 %v1048, 1.0
    %v1052 = vadd.f32 %v1050, 1.0
    %v1053 = vrcp.pop %v1051
    %v1054 = vmul.f32 1.0, %v1053
    %v1055 = vrcp.pop %v1052
    %v1056 = vmul.f32 1.0, %v1055
    %v1057 = vadd.f32 %v1023, %v783
    %v1058 = vadd.f32 %v1026, %v783
    %v1059 = vmul.f32 %v1040, %v1057
    %v1060 = vmul.f32 %v1042, %v1058
    %v1061 = vadd.f32 %v941, %v1059
    %v1062 = vadd.f32 %v944, %v1060
    %v1063 = vtanh.pop %v1061
    %v1064 = vtanh.pop %v1062
    %v1065 = vsub.f32 1.0, %v1054
    %v1066 = vsub.f32 1.0, %v1056
    %v1067 = vmul.f32 %v1065, %v1063
    %v1068 = vmul.f32 %v1066, %v1064
    %v1069 = vmul.f32 %v1054, %v935
    %v1070 = vmul.f32 %v1056, %v936
    %v1071 = vadd.f32 %v1067, %v1069
    %v1072 = vadd.f32 %v1068, %v1070
    %v1073 = vpack.c.bf16 %v1072, %v1071
    %1074 = vst [vmem:[#allocation3 + $0x10] sm:$0xff] %v1073
    %v1075 = vld [vmem:[#allocation2 + $0x90] sm:$0xff]
    %v1076 = vld [vmem:[#allocation2 + $0x98] sm:$0xff]
    %v1077 = vld [vmem:[#allocation2 + $0xa0] sm:$0xff]
    %v1078 = vld [vmem:[#allocation2 + $0xa8] sm:$0xff]
    %v1079 = vld [vmem:[#allocation2 + $0xb0] sm:$0xff]
    %v1080 = vld [vmem:[#allocation2 + $0xb8] sm:$0xff]
    %1081 = vmatprep.subr.bf16.mxu0 %v620
    %1082 = vmatpush1.bf16.msra.mxu0 %v619
    %1083 = vmatprep.subr.bf16.mxu0 %v623
    %1084 = vmatpush1.bf16.msra.mxu0 %v622
    %1085 = vmatprep.subr.bf16.mxu0 %v626
    %1086 = vmatpush1.bf16.msra.mxu0 %v625
    %1087 = vmatprep.subr.bf16.mxu0 %v629
    %1088 = vmatpush1.bf16.msra.mxu0 %v628
    %1089 = vmatprep.subr.bf16.mxu0 %v632
    %1090 = vmatpush1.bf16.msra.mxu0 %v631
    %1091 = vmatprep.subr.bf16.mxu0 %v635
    %1092 = vmatpush1.bf16.msra.mxu0 %v634
    %1093 = vmatprep.subr.bf16.mxu0 %v638
    %1094 = vmatpush1.bf16.msra.mxu0 %v637
    %1095 = vmatprep.subr.bf16.mxu0 %v641
    %1096 = vmatpush1.bf16.msra.mxu0 %v640
    %1097 = vmatprep.subr.bf16.mxu0 0
    %1098 = vmatpush1.bf16.msra.mxu0 0
    %1099 = vmatprep.subr.bf16.mxu0 0
    %1100 = vmatpush1.bf16.msra.mxu0 0
    %1101 = vmatprep.subr.bf16.mxu0 0
    %1102 = vmatpush1.bf16.msra.mxu0 0
    %1103 = vmatprep.subr.bf16.mxu0 0
    %1104 = vmatpush1.bf16.msra.mxu0 0
    %1105 = vmatprep.subr.bf16.mxu0 0
    %1106 = vmatpush1.bf16.msra.mxu0 0
    %1107 = vmatprep.subr.bf16.mxu0 0
    %1108 = vmatpush1.bf16.msra.mxu0 0
    %1109 = vmatprep.subr.bf16.mxu0 0
    %1110 = vmatpush1.bf16.msra.mxu0 0
    %1111 = vmatprep.subr.bf16.mxu0 0
    %1112 = vmatpush1.bf16.msra.mxu0 0
    %1113 = vmatprep.mubr.bf16.mxu0 0
    %1114 = vmatmul.mubr.bf16.gmra.mrb[0].mxu0 %v1073
    %v1115 = vpop.f32.mrb[0].mxu0
    %v1116 = vadd.f32 0.0, %v1115
    %v1117 = vpop.f32.mrb[0].mxu0
    %v1118 = vadd.f32 0.0, %v1117
    %v1119 = vpop.f32.mrb[0].mxu0
    %v1120 = vadd.f32 0.0, %v1119
    %v1121 = vpop.f32.mrb[0].mxu0
    %v1122 = vadd.f32 0.0, %v1121
    %1123 = vdwg.mxu0
    %1124 = vmatprep.subr.bf16.mxu0 0
    %1125 = vmatpush1.bf16.msra.mxu0 %v621
    %1126 = vmatprep.subr.bf16.mxu0 0
    %1127 = vmatpush1.bf16.msra.mxu0 %v624
    %1128 = vmatprep.subr.bf16.mxu0 0
    %1129 = vmatpush1.bf16.msra.mxu0 %v627
    %1130 = vmatprep.subr.bf16.mxu0 0
    %1131 = vmatpush1.bf16.msra.mxu0 %v630
    %1132 = vmatprep.subr.bf16.mxu0 0
    %1133 = vmatpush1.bf16.msra.mxu0 %v633
    %1134 = vmatprep.subr.bf16.mxu0 0
    %1135 = vmatpush1.bf16.msra.mxu0 %v636
    %1136 = vmatprep.subr.bf16.mxu0 0
    %1137 = vmatpush1.bf16.msra.mxu0 %v639
    %1138 = vmatprep.subr.bf16.mxu0 0
    %1139 = vmatpush1.bf16.msra.mxu0 %v642
    %1140 = vmatprep.subr.bf16.mxu0 0
    %1141 = vmatpush1.bf16.msra.mxu0 0
    %1142 = vmatprep.subr.bf16.mxu0 0
    %1143 = vmatpush1.bf16.msra.mxu0 0
    %1144 = vmatprep.subr.bf16.mxu0 0
    %1145 = vmatpush1.bf16.msra.mxu0 0
    %1146 = vmatprep.subr.bf16.mxu0 0
    %1147 = vmatpush1.bf16.msra.mxu0 0
    %1148 = vmatprep.subr.bf16.mxu0 0
    %1149 = vmatpush1.bf16.msra.mxu0 0
    %1150 = vmatprep.subr.bf16.mxu0 0
    %1151 = vmatpush1.bf16.msra.mxu0 0
    %1152 = vmatprep.subr.bf16.mxu0 0
    %1153 = vmatpush1.bf16.msra.mxu0 0
    %1154 = vmatprep.subr.bf16.mxu0 0
    %1155 = vmatpush1.bf16.msra.mxu0 0
    %1156 = vmatprep.mubr.bf16.mxu0 0
    %1157 = vmatmul.mubr.bf16.gmra.mrb[0].mxu0 %v1073
    %v1158 = vpop.f32.mrb[0].mxu0
    %v1159 = vadd.f32 0.0, %v1158
    %v1160 = vpop.f32.mrb[0].mxu0
    %v1161 = vpop.f32.mrb[0].mxu0
    %v1162 = vadd.f32 0.0, %v1161
    %v1163 = vpop.f32.mrb[0].mxu0
    %1164 = vdwg.mxu0
    %v1165 = vadd.f32 %v1075, %v1116
    %v1166 = vadd.f32 %v1078, %v1120
    %v1167 = vxor.u32 %v1165, 2147483648
    %v1168 = vxor.u32 %v1166, 2147483648
    %v1169 = vmul.f32 %v1167, 1.442695
    %v1170 = vpow.pop %v1169
    %v1171 = vmul.f32 %v1168, 1.442695
    %v1172 = vpow.pop %v1171
    %v1173 = vadd.f32 %v1170, 1.0
    %v1174 = vadd.f32 %v1172, 1.0
    %v1175 = vrcp.pop %v1173
    %v1176 = vmul.f32 1.0, %v1175
    %v1177 = vrcp.pop %v1174
    %v1178 = vmul.f32 1.0, %v1177
    %v1179 = vadd.f32 %v1076, %v1118
    %v1180 = vadd.f32 %v1079, %v1122
    %v1181 = vxor.u32 %v1179, 2147483648
    %v1182 = vxor.u32 %v1180, 2147483648
    %v1183 = vmul.f32 %v1181, 1.442695
    %v1184 = vpow.pop %v1183
    %v1185 = vmul.f32 %v1182, 1.442695
    %v1186 = vpow.pop %v1185
    %v1187 = vadd.f32 %v1184, 1.0
    %v1188 = vadd.f32 %v1186, 1.0
    %v1189 = vrcp.pop %v1187
    %v1190 = vmul.f32 1.0, %v1189
    %v1191 = vrcp.pop %v1188
    %v1192 = vmul.f32 1.0, %v1191
    %v1193 = vadd.f32 %v1159, %v783
    %v1194 = vadd.f32 %v1162, %v783
    %v1195 = vmul.f32 %v1176, %v1193
    %v1196 = vmul.f32 %v1178, %v1194
    %v1197 = vadd.f32 %v1077, %v1195
    %v1198 = vadd.f32 %v1080, %v1196
    %v1199 = vtanh.pop %v1197
    %v1200 = vtanh.pop %v1198
    %v1201 = vsub.f32 1.0, %v1190
    %v1202 = vsub.f32 1.0, %v1192
    %v1203 = vmul.f32 %v1201, %v1199
    %v1204 = vmul.f32 %v1202, %v1200
    %v1205 = vmul.f32 %v1190, %v1071
    %v1206 = vmul.f32 %v1192, %v1072
    %v1207 = vadd.f32 %v1203, %v1205
    %v1208 = vadd.f32 %v1204, %v1206
    %v1209 = vpack.c.bf16 %v1208, %v1207
    %1210 = vst [vmem:[#allocation3 + $0x18] sm:$0xff] %v1209
    %v1211 = vld [vmem:[#allocation2 + $0xc0] sm:$0xff]
    %v1212 = vld [vmem:[#allocation2 + $0xc8] sm:$0xff]
    %v1213 = vld [vmem:[#allocation2 + $0xd0] sm:$0xff]
    %v1214 = vld [vmem:[#allocation2 + $0xd8] sm:$0xff]
    %v1215 = vld [vmem:[#allocation2 + $0xe0] sm:$0xff]
    %v1216 = vld [vmem:[#allocation2 + $0xe8] sm:$0xff]
    %1217 = vmatprep.subr.bf16.mxu0 %v620
    %1218 = vmatpush1.bf16.msra.mxu0 %v619
    %1219 = vmatprep.subr.bf16.mxu0 %v623
    %1220 = vmatpush1.bf16.msra.mxu0 %v622
    %1221 = vmatprep.subr.bf16.mxu0 %v626
    %1222 = vmatpush1.bf16.msra.mxu0 %v625
    %1223 = vmatprep.subr.bf16.mxu0 %v629
    %1224 = vmatpush1.bf16.msra.mxu0 %v628
    %1225 = vmatprep.subr.bf16.mxu0 %v632
    %1226 = vmatpush1.bf16.msra.mxu0 %v631
    %1227 = vmatprep.subr.bf16.mxu0 %v635
    %1228 = vmatpush1.bf16.msra.mxu0 %v634
    %1229 = vmatprep.subr.bf16.mxu0 %v638
    %1230 = vmatpush1.bf16.msra.mxu0 %v637
    %1231 = vmatprep.subr.bf16.mxu0 %v641
    %1232 = vmatpush1.bf16.msra.mxu0 %v640
    %1233 = vmatprep.subr.bf16.mxu0 0
    %1234 = vmatpush1.bf16.msra.mxu0 0
    %1235 = vmatprep.subr.bf16.mxu0 0
    %1236 = vmatpush1.bf16.msra.mxu0 0
    %1237 = vmatprep.subr.bf16.mxu0 0
    %1238 = vmatpush1.bf16.msra.mxu0 0
    %1239 = vmatprep.subr.bf16.mxu0 0
    %1240 = vmatpush1.bf16.msra.mxu0 0
    %1241 = vmatprep.subr.bf16.mxu0 0
    %1242 = vmatpush1.bf16.msra.mxu0 0
    %1243 = vmatprep.subr.bf16.mxu0 0
    %1244 = vmatpush1.bf16.msra.mxu0 0
    %1245 = vmatprep.subr.bf16.mxu0 0
    %1246 = vmatpush1.bf16.msra.mxu0 0
    %1247 = vmatprep.subr.bf16.mxu0 0
    %1248 = vmatpush1.bf16.msra.mxu0 0
    %1249 = vmatprep.mubr.bf16.mxu0 0
    %1250 = vmatmul.mubr.bf16.gmra.mrb[0].mxu0 %v1209
    %v1251 = vpop.f32.mrb[0].mxu0
    %v1252 = vadd.f32 0.0, %v1251
    %v1253 = vpop.f32.mrb[0].mxu0
    %v1254 = vadd.f32 0.0, %v1253
    %v1255 = vpop.f32.mrb[0].mxu0
    %v1256 = vadd.f32 0.0, %v1255
    %v1257 = vpop.f32.mrb[0].mxu0
    %v1258 = vadd.f32 0.0, %v1257
    %1259 = vdwg.mxu0
    %1260 = vmatprep.subr.bf16.mxu0 0
    %1261 = vmatpush1.bf16.msra.mxu0 %v621
    %1262 = vmatprep.subr.bf16.mxu0 0
    %1263 = vmatpush1.bf16.msra.mxu0 %v624
    %1264 = vmatprep.subr.bf16.mxu0 0
    %1265 = vmatpush1.bf16.msra.mxu0 %v627
    %1266 = vmatprep.subr.bf16.mxu0 0
    %1267 = vmatpush1.bf16.msra.mxu0 %v630
    %1268 = vmatprep.subr.bf16.mxu0 0
    %1269 = vmatpush1.bf16.msra.mxu0 %v633
    %1270 = vmatprep.subr.bf16.mxu0 0
    %1271 = vmatpush1.bf16.msra.mxu0 %v636
    %1272 = vmatprep.subr.bf16.mxu0 0
    %1273 = vmatpush1.bf16.msra.mxu0 %v639
    %1274 = vmatprep.subr.bf16.mxu0 0
    %1275 = vmatpush1.bf16.msra.mxu0 %v642
    %1276 = vmatprep.subr.bf16.mxu0 0
    %1277 = vmatpush1.bf16.msra.mxu0 0
    %1278 = vmatprep.subr.bf16.mxu0 0
    %1279 = vmatpush1.bf16.msra.mxu0 0
    %1280 = vmatprep.subr.bf16.mxu0 0
    %1281 = vmatpush1.bf16.msra.mxu0 0
    %1282 = vmatprep.subr.bf16.mxu0 0
    %1283 = vmatpush1.bf16.msra.mxu0 0
    %1284 = vmatprep.subr.bf16.mxu0 0
    %1285 = vmatpush1.bf16.msra.mxu0 0
    %1286 = vmatprep.subr.bf16.mxu0 0
    %1287 = vmatpush1.bf16.msra.mxu0 0
    %1288 = vmatprep.subr.bf16.mxu0 0
    %1289 = vmatpush1.bf16.msra.mxu0 0
    %1290 = vmatprep.subr.bf16.mxu0 0
    %1291 = vmatpush1.bf16.msra.mxu0 0
    %1292 = vmatprep.mubr.bf16.mxu0 0
    %1293 = vmatmul.mubr.bf16.gmra.mrb[0].mxu0 %v1209
    %v1294 = vpop.f32.mrb[0].mxu0
    %v1295 = vadd.f32 0.0, %v1294
    %v1296 = vpop.f32.mrb[0].mxu0
    %v1297 = vpop.f32.mrb[0].mxu0
    %v1298 = vadd.f32 0.0, %v1297
    %v1299 = vpop.f32.mrb[0].mxu0
    %1300 = vdwg.mxu0
    %v1301 = vadd.f32 %v1211, %v1252
    %v1302 = vadd.f32 %v1214, %v1256
    %v1303 = vxor.u32 %v1301, 2147483648
    %v1304 = vxor.u32 %v1302, 2147483648
    %v1305 = vmul.f32 %v1303, 1.442695
    %v1306 = vpow.pop %v1305
    %v1307 = vmul.f32 %v1304, 1.442695
    %v1308 = vpow.pop %v1307
    %v1309 = vadd.f32 %v1306, 1.0
    %v1310 = vadd.f32 %v1308, 1.0
    %v1311 = vrcp.pop %v1309
    %v1312 = vmul.f32 1.0, %v1311
    %v1313 = vrcp.pop %v1310
    %v1314 = vmul.f32 1.0, %v1313
    %v1315 = vadd.f32 %v1212, %v1254
    %v1316 = vadd.f32 %v1215, %v1258
    %v1317 = vxor.u32 %v1315, 2147483648
    %v1318 = vxor.u32 %v1316, 2147483648
    %v1319 = vmul.f32 %v1317, 1.442695
    %v1320 = vpow.pop %v1319
    %v1321 = vmul.f32 %v1318, 1.442695
    %v1322 = vpow.pop %v1321
    %v1323 = vadd.f32 %v1320, 1.0
    %v1324 = vadd.f32 %v1322, 1.0
    %v1325 = vrcp.pop %v1323
    %v1326 = vmul.f32 1.0, %v1325
    %v1327 = vrcp.pop %v1324
    %v1328 = vmul.f32 1.0, %v1327
    %v1329 = vadd.f32 %v1295, %v783
    %v1330 = vadd.f32 %v1298, %v783
    %v1331 = vmul.f32 %v1312, %v1329
    %v1332 = vmul.f32 %v1314, %v1330
    %v1333 = vadd.f32 %v1213, %v1331
    %v1334 = vadd.f32 %v1216, %v1332
    %v1335 = vtanh.pop %v1333
    %v1336 = vtanh.pop %v1334
    %v1337 = vsub.f32 1.0, %v1326
    %v1338 = vsub.f32 1.0, %v1328
    %v1339 = vmul.f32 %v1337, %v1335
    %v1340 = vmul.f32 %v1338, %v1336
    %v1341 = vmul.f32 %v1326, %v1207
    %v1342 = vmul.f32 %v1328, %v1208
    %v1343 = vadd.f32 %v1339, %v1341
    %v1344 = vadd.f32 %v1340, %v1342
    %v1345 = vpack.c.bf16 %v1344, %v1343
    %1346 = vst [vmem:[#allocation3 + $0x20] sm:$0xff] %v1345
    %v1347 = vld [vmem:[#allocation2 + $0xf0] sm:$0xff]
    %v1348 = vld [vmem:[#allocation2 + $0xf8] sm:$0xff]
    %v1349 = vld [vmem:[#allocation2 + $0x100] sm:$0xff]
    %v1350 = vld [vmem:[#allocation2 + $0x108] sm:$0xff]
    %v1351 = vld [vmem:[#allocation2 + $0x110] sm:$0xff]
    %v1352 = vld [vmem:[#allocation2 + $0x118] sm:$0xff]
    %1353 = vmatprep.subr.bf16.mxu0 %v620
    %1354 = vmatpush1.bf16.msra.mxu0 %v619
    %1355 = vmatprep.subr.bf16.mxu0 %v623
    %1356 = vmatpush1.bf16.msra.mxu0 %v622
    %1357 = vmatprep.subr.bf16.mxu0 %v626
    %1358 = vmatpush1.bf16.msra.mxu0 %v625
    %1359 = vmatprep.subr.bf16.mxu0 %v629
    %1360 = vmatpush1.bf16.msra.mxu0 %v628
    %1361 = vmatprep.subr.bf16.mxu0 %v632
    %1362 = vmatpush1.bf16.msra.mxu0 %v631
    %1363 = vmatprep.subr.bf16.mxu0 %v635
    %1364 = vmatpush1.bf16.msra.mxu0 %v634
    %1365 = vmatprep.subr.bf16.mxu0 %v638
    %1366 = vmatpush1.bf16.msra.mxu0 %v637
    %1367 = vmatprep.subr.bf16.mxu0 %v641
    %1368 = vmatpush1.bf16.msra.mxu0 %v640
    %1369 = vmatprep.subr.bf16.mxu0 0
    %1370 = vmatpush1.bf16.msra.mxu0 0
    %1371 = vmatprep.subr.bf16.mxu0 0
    %1372 = vmatpush1.bf16.msra.mxu0 0
    %1373 = vmatprep.subr.bf16.mxu0 0
    %1374 = vmatpush1.bf16.msra.mxu0 0
    %1375 = vmatprep.subr.bf16.mxu0 0
    %1376 = vmatpush1.bf16.msra.mxu0 0
    %1377 = vmatprep.subr.bf16.mxu0 0
    %1378 = vmatpush1.bf16.msra.mxu0 0
    %1379 = vmatprep.subr.bf16.mxu0 0
    %1380 = vmatpush1.bf16.msra.mxu0 0
    %1381 = vmatprep.subr.bf16.mxu0 0
    %1382 = vmatpush1.bf16.msra.mxu0 0
    %1383 = vmatprep.subr.bf16.mxu0 0
    %1384 = vmatpush1.bf16.msra.mxu0 0
    %1385 = vmatprep.mubr.bf16.mxu0 0
    %1386 = vmatmul.mubr.bf16.gmra.mrb[0].mxu0 %v1345
    %v1387 = vpop.f32.mrb[0].mxu0
    %v1388 = vadd.f32 0.0, %v1387
    %v1389 = vpop.f32.mrb[0].mxu0
    %v1390 = vadd.f32 0.0, %v1389
    %v1391 = vpop.f32.mrb[0].mxu0
    %v1392 = vadd.f32 0.0, %v1391
    %v1393 = vpop.f32.mrb[0].mxu0
    %v1394 = vadd.f32 0.0, %v1393
    %1395 = vdwg.mxu0
    %1396 = vmatprep.subr.bf16.mxu0 0
    %1397 = vmatpush1.bf16.msra.mxu0 %v621
    %1398 = vmatprep.subr.bf16.mxu0 0
    %1399 = vmatpush1.bf16.msra.mxu0 %v624
    %1400 = vmatprep.subr.bf16.mxu0 0
    %1401 = vmatpush1.bf16.msra.mxu0 %v627
    %1402 = vmatprep.subr.bf16.mxu0 0
    %1403 = vmatpush1.bf16.msra.mxu0 %v630
    %1404 = vmatprep.subr.bf16.mxu0 0
    %1405 = vmatpush1.bf16.msra.mxu0 %v633
    %1406 = vmatprep.subr.bf16.mxu0 0
    %1407 = vmatpush1.bf16.msra.mxu0 %v636
    %1408 = vmatprep.subr.bf16.mxu0 0
    %1409 = vmatpush1.bf16.msra.mxu0 %v639
    %1410 = vmatprep.subr.bf16.mxu0 0
    %1411 = vmatpush1.bf16.msra.mxu0 %v642
    %1412 = vmatprep.subr.bf16.mxu0 0
    %1413 = vmatpush1.bf16.msra.mxu0 0
    %1414 = vmatprep.subr.bf16.mxu0 0
    %1415 = vmatpush1.bf16.msra.mxu0 0
    %1416 = vmatprep.subr.bf16.mxu0 0
    %1417 = vmatpush1.bf16.msra.mxu0 0
    %1418 = vmatprep.subr.bf16.mxu0 0
    %1419 = vmatpush1.bf16.msra.mxu0 0
    %1420 = vmatprep.subr.bf16.mxu0 0
    %1421 = vmatpush1.bf16.msra.mxu0 0
    %1422 = vmatprep.subr.bf16.mxu0 0
    %1423 = vmatpush1.bf16.msra.mxu0 0
    %1424 = vmatprep.subr.bf16.mxu0 0
    %1425 = vmatpush1.bf16.msra.mxu0 0
    %1426 = vmatprep.subr.bf16.mxu0 0
    %1427 = vmatpush1.bf16.msra.mxu0 0
    %1428 = vmatprep.mubr.bf16.mxu0 0
    %1429 = vmatmul.mubr.bf16.gmra.mrb[0].mxu0 %v1345
    %v1430 = vpop.f32.mrb[0].mxu0
    %v1431 = vadd.f32 0.0, %v1430
    %v1432 = vpop.f32.mrb[0].mxu0
    %v1433 = vpop.f32.mrb[0].mxu0
    %v1434 = vadd.f32 0.0, %v1433
    %v1435 = vpop.f32.mrb[0].mxu0
    %1436 = vdwg.mxu0
    %v1437 = vadd.f32 %v1347, %v1388
    %v1438 = vadd.f32 %v1350, %v1392
    %v1439 = vxor.u32 %v1437, 2147483648
    %v1440 = vxor.u32 %v1438, 2147483648
    %v1441 = vmul.f32 %v1439, 1.442695
    %v1442 = vpow.pop %v1441
    %v1443 = vmul.f32 %v1440, 1.442695
    %v1444 = vpow.pop %v1443
    %v1445 = vadd.f32 %v1442, 1.0
    %v1446 = vadd.f32 %v1444, 1.0
    %v1447 = vrcp.pop %v1445
    %v1448 = vmul.f32 1.0, %v1447
    %v1449 = vrcp.pop %v1446
    %v1450 = vmul.f32 1.0, %v1449
    %v1451 = vadd.f32 %v1348, %v1390
    %v1452 = vadd.f32 %v1351, %v1394
    %v1453 = vxor.u32 %v1451, 2147483648
    %v1454 = vxor.u32 %v1452, 2147483648
    %v1455 = vmul.f32 %v1453, 1.442695
    %v1456 = vpow.pop %v1455
    %v1457 = vmul.f32 %v1454, 1.442695
    %v1458 = vpow.pop %v1457
    %v1459 = vadd.f32 %v1456, 1.0
    %v1460 = vadd.f32 %v1458, 1.0
    %v1461 = vrcp.pop %v1459
    %v1462 = vmul.f32 1.0, %v1461
    %v1463 = vrcp.pop %v1460
    %v1464 = vmul.f32 1.0, %v1463
    %v1465 = vadd.f32 %v1431, %v783
    %v1466 = vadd.f32 %v1434, %v783
    %v1467 = vmul.f32 %v1448, %v1465
    %v1468 = vmul.f32 %v1450, %v1466
    %v1469 = vadd.f32 %v1349, %v1467
    %v1470 = vadd.f32 %v1352, %v1468
    %v1471 = vtanh.pop %v1469
    %v1472 = vtanh.pop %v1470
    %v1473 = vsub.f32 1.0, %v1462
    %v1474 = vsub.f32 1.0, %v1464
    %v1475 = vmul.f32 %v1473, %v1471
    %v1476 = vmul.f32 %v1474, %v1472
    %v1477 = vmul.f32 %v1462, %v1343
    %v1478 = vmul.f32 %v1464, %v1344
    %v1479 = vadd.f32 %v1475, %v1477
    %v1480 = vadd.f32 %v1476, %v1478
    %v1481 = vpack.c.bf16 %v1480, %v1479
    %1482 = vst [vmem:[#allocation3 + $0x28] sm:$0xff] %v1481
    %v1483 = vld [vmem:[#allocation2 + $0x120] sm:$0xff]
    %v1484 = vld [vmem:[#allocation2 + $0x128] sm:$0xff]
    %v1485 = vld [vmem:[#allocation2 + $0x130] sm:$0xff]
    %v1486 = vld [vmem:[#allocation2 + $0x138] sm:$0xff]
    %v1487 = vld [vmem:[#allocation2 + $0x140] sm:$0xff]
    %v1488 = vld [vmem:[#allocation2 + $0x148] sm:$0xff]
    %1489 = vmatprep.subr.bf16.mxu0 %v620
    %1490 = vmatpush1.bf16.msra.mxu0 %v619
    %1491 = vmatprep.subr.bf16.mxu0 %v623
    %1492 = vmatpush1.bf16.msra.mxu0 %v622
    %1493 = vmatprep.subr.bf16.mxu0 %v626
    %1494 = vmatpush1.bf16.msra.mxu0 %v625
    %1495 = vmatprep.subr.bf16.mxu0 %v629
    %1496 = vmatpush1.bf16.msra.mxu0 %v628
    %1497 = vmatprep.subr.bf16.mxu0 %v632
    %1498 = vmatpush1.bf16.msra.mxu0 %v631
    %1499 = vmatprep.subr.bf16.mxu0 %v635
    %1500 = vmatpush1.bf16.msra.mxu0 %v634
    %1501 = vmatprep.subr.bf16.mxu0 %v638
    %1502 = vmatpush1.bf16.msra.mxu0 %v637
    %1503 = vmatprep.subr.bf16.mxu0 %v641
    %1504 = vmatpush1.bf16.msra.mxu0 %v640
    %1505 = vmatprep.subr.bf16.mxu0 0
    %1506 = vmatpush1.bf16.msra.mxu0 0
    %1507 = vmatprep.subr.bf16.mxu0 0
    %1508 = vmatpush1.bf16.msra.mxu0 0
    %1509 = vmatprep.subr.bf16.mxu0 0
    %1510 = vmatpush1.bf16.msra.mxu0 0
    %1511 = vmatprep.subr.bf16.mxu0 0
    %1512 = vmatpush1.bf16.msra.mxu0 0
    %1513 = vmatprep.subr.bf16.mxu0 0
    %1514 = vmatpush1.bf16.msra.mxu0 0
    %1515 = vmatprep.subr.bf16.mxu0 0
    %1516 = vmatpush1.bf16.msra.mxu0 0
    %1517 = vmatprep.subr.bf16.mxu0 0
    %1518 = vmatpush1.bf16.msra.mxu0 0
    %1519 = vmatprep.subr.bf16.mxu0 0
    %1520 = vmatpush1.bf16.msra.mxu0 0
    %1521 = vmatprep.mubr.bf16.mxu0 0
    %1522 = vmatmul.mubr.bf16.gmra.mrb[0].mxu0 %v1481
    %v1523 = vpop.f32.mrb[0].mxu0
    %v1524 = vadd.f32 0.0, %v1523
    %v1525 = vpop.f32.mrb[0].mxu0
    %v1526 = vadd.f32 0.0, %v1525
    %v1527 = vpop.f32.mrb[0].mxu0
    %v1528 = vadd.f32 0.0, %v1527
    %v1529 = vpop.f32.mrb[0].mxu0
    %v1530 = vadd.f32 0.0, %v1529
    %1531 = vdwg.mxu0
    %1532 = vmatprep.subr.bf16.mxu0 0
    %1533 = vmatpush1.bf16.msra.mxu0 %v621
    %1534 = vmatprep.subr.bf16.mxu0 0
    %1535 = vmatpush1.bf16.msra.mxu0 %v624
    %1536 = vmatprep.subr.bf16.mxu0 0
    %1537 = vmatpush1.bf16.msra.mxu0 %v627
    %1538 = vmatprep.subr.bf16.mxu0 0
    %1539 = vmatpush1.bf16.msra.mxu0 %v630
    %1540 = vmatprep.subr.bf16.mxu0 0
    %1541 = vmatpush1.bf16.msra.mxu0 %v633
    %1542 = vmatprep.subr.bf16.mxu0 0
    %1543 = vmatpush1.bf16.msra.mxu0 %v636
    %1544 = vmatprep.subr.bf16.mxu0 0
    %1545 = vmatpush1.bf16.msra.mxu0 %v639
    %1546 = vmatprep.subr.bf16.mxu0 0
    %1547 = vmatpush1.bf16.msra.mxu0 %v642
    %1548 = vmatprep.subr.bf16.mxu0 0
    %1549 = vmatpush1.bf16.msra.mxu0 0
    %1550 = vmatprep.subr.bf16.mxu0 0
    %1551 = vmatpush1.bf16.msra.mxu0 0
    %1552 = vmatprep.subr.bf16.mxu0 0
    %1553 = vmatpush1.bf16.msra.mxu0 0
    %1554 = vmatprep.subr.bf16.mxu0 0
    %1555 = vmatpush1.bf16.msra.mxu0 0
    %1556 = vmatprep.subr.bf16.mxu0 0
    %1557 = vmatpush1.bf16.msra.mxu0 0
    %1558 = vmatprep.subr.bf16.mxu0 0
    %1559 = vmatpush1.bf16.msra.mxu0 0
    %1560 = vmatprep.subr.bf16.mxu0 0
    %1561 = vmatpush1.bf16.msra.mxu0 0
    %1562 = vmatprep.subr.bf16.mxu0 0
    %1563 = vmatpush1.bf16.msra.mxu0 0
    %1564 = vmatprep.mubr.bf16.mxu0 0
    %1565 = vmatmul.mubr.bf16.gmra.mrb[0].mxu0 %v1481
    %v1566 = vpop.f32.mrb[0].mxu0
    %v1567 = vadd.f32 0.0, %v1566
    %v1568 = vpop.f32.mrb[0].mxu0
    %v1569 = vpop.f32.mrb[0].mxu0
    %v1570 = vadd.f32 0.0, %v1569
    %v1571 = vpop.f32.mrb[0].mxu0
    %1572 = vdwg.mxu0
    %v1573 = vadd.f32 %v1483, %v1524
    %v1574 = vadd.f32 %v1486, %v1528
    %v1575 = vxor.u32 %v1573, 2147483648
    %v1576 = vxor.u32 %v1574, 2147483648
    %v1577 = vmul.f32 %v1575, 1.442695
    %v1578 = vpow.pop %v1577
    %v1579 = vmul.f32 %v1576, 1.442695
    %v1580 = vpow.pop %v1579
    %v1581 = vadd.f32 %v1578, 1.0
    %v1582 = vadd.f32 %v1580, 1.0
    %v1583 = vrcp.pop %v1581
    %v1584 = vmul.f32 1.0, %v1583
    %v1585 = vrcp.pop %v1582
    %v1586 = vmul.f32 1.0, %v1585
    %v1587 = vadd.f32 %v1484, %v1526
    %v1588 = vadd.f32 %v1487, %v1530
    %v1589 = vxor.u32 %v1587, 2147483648
    %v1590 = vxor.u32 %v1588, 2147483648
    %v1591 = vmul.f32 %v1589, 1.442695
    %v1592 = vpow.pop %v1591
    %v1593 = vmul.f32 %v1590, 1.442695
    %v1594 = vpow.pop %v1593
    %v1595 = vadd.f32 %v1592, 1.0
    %v1596 = vadd.f32 %v1594, 1.0
    %v1597 = vrcp.pop %v1595
    %v1598 = vmul.f32 1.0, %v1597
    %v1599 = vrcp.pop %v1596
    %v1600 = vmul.f32 1.0, %v1599
    %v1601 = vadd.f32 %v1567, %v783
    %v1602 = vadd.f32 %v1570, %v783
    %v1603 = vmul.f32 %v1584, %v1601
    %v1604 = vmul.f32 %v1586, %v1602
    %v1605 = vadd.f32 %v1485, %v1603
    %v1606 = vadd.f32 %v1488, %v1604
    %v1607 = vtanh.pop %v1605
    %v1608 = vtanh.pop %v1606
    %v1609 = vsub.f32 1.0, %v1598
    %v1610 = vsub.f32 1.0, %v1600
    %v1611 = vmul.f32 %v1609, %v1607
    %v1612 = vmul.f32 %v1610, %v1608
    %v1613 = vmul.f32 %v1598, %v1479
    %v1614 = vmul.f32 %v1600, %v1480
    %v1615 = vadd.f32 %v1611, %v1613
    %v1616 = vadd.f32 %v1612, %v1614
    %v1617 = vpack.c.bf16 %v1616, %v1615
    %1618 = vst [vmem:[#allocation3 + $0x30] sm:$0xff] %v1617
    %v1619 = vld [vmem:[#allocation2 + $0x150] sm:$0xff]
    %v1620 = vld [vmem:[#allocation2 + $0x158] sm:$0xff]
    %v1621 = vld [vmem:[#allocation2 + $0x160] sm:$0xff]
    %v1622 = vld [vmem:[#allocation2 + $0x168] sm:$0xff]
    %v1623 = vld [vmem:[#allocation2 + $0x170] sm:$0xff]
    %v1624 = vld [vmem:[#allocation2 + $0x178] sm:$0xff]
    %1625 = vmatprep.subr.bf16.mxu0 %v620
    %1626 = vmatpush1.bf16.msra.mxu0 %v619
    %1627 = vmatprep.subr.bf16.mxu0 %v623
    %1628 = vmatpush1.bf16.msra.mxu0 %v622
    %1629 = vmatprep.subr.bf16.mxu0 %v626
    %1630 = vmatpush1.bf16.msra.mxu0 %v625
    %1631 = vmatprep.subr.bf16.mxu0 %v629
    %1632 = vmatpush1.bf16.msra.mxu0 %v628
    %1633 = vmatprep.subr.bf16.mxu0 %v632
    %1634 = vmatpush1.bf16.msra.mxu0 %v631
    %1635 = vmatprep.subr.bf16.mxu0 %v635
    %1636 = vmatpush1.bf16.msra.mxu0 %v634
    %1637 = vmatprep.subr.bf16.mxu0 %v638
    %1638 = vmatpush1.bf16.msra.mxu0 %v637
    %1639 = vmatprep.subr.bf16.mxu0 %v641
    %1640 = vmatpush1.bf16.msra.mxu0 %v640
    %1641 = vmatprep.subr.bf16.mxu0 0
    %1642 = vmatpush1.bf16.msra.mxu0 0
    %1643 = vmatprep.subr.bf16.mxu0 0
    %1644 = vmatpush1.bf16.msra.mxu0 0
    %1645 = vmatprep.subr.bf16.mxu0 0
    %1646 = vmatpush1.bf16.msra.mxu0 0
    %1647 = vmatprep.subr.bf16.mxu0 0
    %1648 = vmatpush1.bf16.msra.mxu0 0
    %1649 = vmatprep.subr.bf16.mxu0 0
    %1650 = vmatpush1.bf16.msra.mxu0 0
    %1651 = vmatprep.subr.bf16.mxu0 0
    %1652 = vmatpush1.bf16.msra.mxu0 0
    %1653 = vmatprep.subr.bf16.mxu0 0
    %1654 = vmatpush1.bf16.msra.mxu0 0
    %1655 = vmatprep.subr.bf16.mxu0 0
    %1656 = vmatpush1.bf16.msra.mxu0 0
    %1657 = vmatprep.mubr.bf16.mxu0 0
    %1658 = vmatmul.mubr.bf16.gmra.mrb[0].mxu0 %v1617
    %v1659 = vpop.f32.mrb[0].mxu0
    %v1660 = vadd.f32 0.0, %v1659
    %v1661 = vpop.f32.mrb[0].mxu0
    %v1662 = vadd.f32 0.0, %v1661
    %v1663 = vpop.f32.mrb[0].mxu0
    %v1664 = vadd.f32 0.0, %v1663
    %v1665 = vpop.f32.mrb[0].mxu0
    %v1666 = vadd.f32 0.0, %v1665
    %1667 = vdwg.mxu0
    %1668 = vmatprep.subr.bf16.mxu0 0
    %1669 = vmatpush1.bf16.msra.mxu0 %v621
    %1670 = vmatprep.subr.bf16.mxu0 0
    %1671 = vmatpush1.bf16.msra.mxu0 %v624
    %1672 = vmatprep.subr.bf16.mxu0 0
    %1673 = vmatpush1.bf16.msra.mxu0 %v627
    %1674 = vmatprep.subr.bf16.mxu0 0
    %1675 = vmatpush1.bf16.msra.mxu0 %v630
    %1676 = vmatprep.subr.bf16.mxu0 0
    %1677 = vmatpush1.bf16.msra.mxu0 %v633
    %1678 = vmatprep.subr.bf16.mxu0 0
    %1679 = vmatpush1.bf16.msra.mxu0 %v636
    %1680 = vmatprep.subr.bf16.mxu0 0
    %1681 = vmatpush1.bf16.msra.mxu0 %v639
    %1682 = vmatprep.subr.bf16.mxu0 0
    %1683 = vmatpush1.bf16.msra.mxu0 %v642
    %1684 = vmatprep.subr.bf16.mxu0 0
    %1685 = vmatpush1.bf16.msra.mxu0 0
    %1686 = vmatprep.subr.bf16.mxu0 0
    %1687 = vmatpush1.bf16.msra.mxu0 0
    %1688 = vmatprep.subr.bf16.mxu0 0
    %1689 = vmatpush1.bf16.msra.mxu0 0
    %1690 = vmatprep.subr.bf16.mxu0 0
    %1691 = vmatpush1.bf16.msra.mxu0 0
    %1692 = vmatprep.subr.bf16.mxu0 0
    %1693 = vmatpush1.bf16.msra.mxu0 0
    %1694 = vmatprep.subr.bf16.mxu0 0
    %1695 = vmatpush1.bf16.msra.mxu0 0
    %1696 = vmatprep.subr.bf16.mxu0 0
    %1697 = vmatpush1.bf16.msra.mxu0 0
    %1698 = vmatprep.subr.bf16.mxu0 0
    %1699 = vmatpush1.bf16.msra.mxu0 0
    %1700 = vmatprep.mubr.bf16.mxu0 0
    %1701 = vmatmul.mubr.bf16.gmra.mrb[0].mxu0 %v1617
    %v1702 = vpop.f32.mrb[0].mxu0
    %v1703 = vadd.f32 0.0, %v1702
    %v1704 = vpop.f32.mrb[0].mxu0
    %v1705 = vpop.f32.mrb[0].mxu0
    %v1706 = vadd.f32 0.0, %v1705
    %v1707 = vpop.f32.mrb[0].mxu0
    %1708 = vdwg.mxu0
    %v1709 = vadd.f32 %v1619, %v1660
    %v1710 = vadd.f32 %v1622, %v1664
    %v1711 = vxor.u32 %v1709, 2147483648
    %v1712 = vxor.u32 %v1710, 2147483648
    %v1713 = vmul.f32 %v1711, 1.442695
    %v1714 = vpow.pop %v1713
    %v1715 = vmul.f32 %v1712, 1.442695
    %v1716 = vpow.pop %v1715
    %v1717 = vadd.f32 %v1714, 1.0
    %v1718 = vadd.f32 %v1716, 1.0
    %v1719 = vrcp.pop %v1717
    %v1720 = vmul.f32 1.0, %v1719
    %v1721 = vrcp.pop %v1718
    %v1722 = vmul.f32 1.0, %v1721
    %v1723 = vadd.f32 %v1620, %v1662
    %v1724 = vadd.f32 %v1623, %v1666
    %v1725 = vxor.u32 %v1723, 2147483648
    %v1726 = vxor.u32 %v1724, 2147483648
    %v1727 = vmul.f32 %v1725, 1.442695
    %v1728 = vpow.pop %v1727
    %v1729 = vmul.f32 %v1726, 1.442695
    %v1730 = vpow.pop %v1729
    %v1731 = vadd.f32 %v1728, 1.0
    %v1732 = vadd.f32 %v1730, 1.0
    %v1733 = vrcp.pop %v1731
    %v1734 = vmul.f32 1.0, %v1733
    %v1735 = vrcp.pop %v1732
    %v1736 = vmul.f32 1.0, %v1735
    %v1737 = vadd.f32 %v1703, %v783
    %v1738 = vadd.f32 %v1706, %v783
    %v1739 = vmul.f32 %v1720, %v1737
    %v1740 = vmul.f32 %v1722, %v1738
    %v1741 = vadd.f32 %v1621, %v1739
    %v1742 = vadd.f32 %v1624, %v1740
    %v1743 = vtanh.pop %v1741
    %v1744 = vtanh.pop %v1742
    %v1745 = vsub.f32 1.0, %v1734
    %v1746 = vsub.f32 1.0, %v1736
    %v1747 = vmul.f32 %v1745, %v1743
    %v1748 = vmul.f32 %v1746, %v1744
    %v1749 = vmul.f32 %v1734, %v1615
    %v1750 = vmul.f32 %v1736, %v1616
    %v1751 = vadd.f32 %v1747, %v1749
    %v1752 = vadd.f32 %v1748, %v1750
    %v1753 = vpack.c.bf16 %v1752, %v1751
    %1754 = vst [vmem:[#allocation3 + $0x38] sm:$0xff] %v1753
    %v1755 = vld [vmem:[#allocation3] sm:$0xff]
    %v1756 = vld [vmem:[#allocation3 + $0x8] sm:$0xff]
    %v1757 = vld [vmem:[#allocation3 + $0x10] sm:$0xff]
    %v1758 = vld [vmem:[#allocation3 + $0x18] sm:$0xff]
    %v1759 = vld [vmem:[#allocation3 + $0x20] sm:$0xff]
    %v1760 = vld [vmem:[#allocation3 + $0x28] sm:$0xff]
    %v1761 = vld [vmem:[#allocation3 + $0x30] sm:$0xff]
    %v1762 = vld [vmem:[#allocation3 + $0x38] sm:$0xff]
    %v1763 = vld [vmem:[#allocation9] sm:$0xff]
    %v1764 = vld [vmem:[#allocation9 + $0x8] sm:$0xf]
    %v1765 = vld [vmem:[#allocation9 + $0xc] sm:$0xff]
    %v1766 = vld [vmem:[#allocation9 + $0x14] sm:$0xf]
    %v1767 = vld [vmem:[#allocation9 + $0x18] sm:$0xff]
    %v1768 = vld [vmem:[#allocation9 + $0x20] sm:$0xf]
    %v1769 = vld [vmem:[#allocation9 + $0x24] sm:$0xff]
    %v1770 = vld [vmem:[#allocation9 + $0x2c] sm:$0xf]
    %v1771 = vld [vmem:[#allocation9 + $0x30] sm:$0xff]
    %v1772 = vld [vmem:[#allocation9 + $0x38] sm:$0xf]
    %v1773 = vld [vmem:[#allocation9 + $0x3c] sm:$0xff]
    %v1774 = vld [vmem:[#allocation9 + $0x44] sm:$0xf]
    %v1775 = vld [vmem:[#allocation9 + $0x48] sm:$0xff]
    %v1776 = vld [vmem:[#allocation9 + $0x50] sm:$0xf]
    %v1777 = vld [vmem:[#allocation9 + $0x54] sm:$0xff]
    %v1778 = vld [vmem:[#allocation9 + $0x5c] sm:$0xf]
    %v1779 = vld [vmem:[#allocation9 + $0x60] sm:$0xff]
    %v1780 = vld [vmem:[#allocation9 + $0x68] sm:$0xf]
    %v1781 = vld [vmem:[#allocation9 + $0x6c] sm:$0xff]
    %v1782 = vld [vmem:[#allocation9 + $0x74] sm:$0xf]
    %v1783 = vld [vmem:[#allocation9 + $0x78] sm:$0xff]
    %v1784 = vld [vmem:[#allocation9 + $0x80] sm:$0xf]
    %v1785 = vld [vmem:[#allocation9 + $0x84] sm:$0xff]
    %v1786 = vld [vmem:[#allocation9 + $0x8c] sm:$0xf]
    %v1787 = vld [vmem:[#allocation9 + $0x90] sm:$0xff]
    %v1788 = vld [vmem:[#allocation9 + $0x98] sm:$0xf]
    %v1789 = vld [vmem:[#allocation9 + $0x9c] sm:$0xff]
    %v1790 = vld [vmem:[#allocation9 + $0xa4] sm:$0xf]
    %v1791 = vld [vmem:[#allocation9 + $0xa8] sm:$0xff]
    %v1792 = vld [vmem:[#allocation9 + $0xb0] sm:$0xf]
    %v1793 = vld [vmem:[#allocation9 + $0xb4] sm:$0xff]
    %v1794 = vld [vmem:[#allocation9 + $0xbc] sm:$0xf]
    %v1795 = vld [vmem:[#allocation12] sm:$0x7]
    %v1797 = vlaneseq
    %v1798 = vshrl.u32 %v1797, 7
    %v1799 = vsub.s32 0, %v1798
    %v1800 = vrot.slane %v1795, %v1799
    %v1801 = vlaneseq
    %v1802 = vshrl.u32 %v1801, 7
    %v1803 = vsub.s32 1, %v1802
    %v1804 = vrot.slane %v1795, %v1803
    %v1805 = vlaneseq
    %v1806 = vshrl.u32 %v1805, 7
    %v1807 = vsub.s32 2, %v1806
    %v1808 = vrot.slane %v1795, %v1807
    %v1844 = vunpack.c.l.b16 %v1763
    %v1845 = vunpack.c.h.b16 %v1763
    %v1846 = vunpack.c.l.b16 %v1764
    %v1847 = vunpack.c.l.b16 %v1765
    %v1848 = vunpack.c.h.b16 %v1765
    %v1849 = vunpack.c.l.b16 %v1766
    %v1850 = vunpack.c.l.b16 %v1767
    %v1851 = vunpack.c.h.b16 %v1767
    %v1852 = vunpack.c.l.b16 %v1768
    %v1853 = vunpack.c.l.b16 %v1769
    %v1854 = vunpack.c.h.b16 %v1769
    %v1855 = vunpack.c.l.b16 %v1770
    %v1856 = vunpack.c.l.b16 %v1771
    %v1857 = vunpack.c.h.b16 %v1771
    %v1858 = vunpack.c.l.b16 %v1772
    %v1859 = vunpack.c.l.b16 %v1773
    %v1860 = vunpack.c.h.b16 %v1773
    %v1861 = vunpack.c.l.b16 %v1774
    %v1862 = vunpack.c.l.b16 %v1775
    %v1863 = vunpack.c.h.b16 %v1775
    %v1864 = vunpack.c.l.b16 %v1776
    %v1865 = vunpack.c.l.b16 %v1777
    %v1866 = vunpack.c.h.b16 %v1777
    %v1867 = vunpack.c.l.b16 %v1778
    %v1868 = vunpack.c.l.b16 %v1779
    %v1869 = vunpack.c.h.b16 %v1779
    %v1870 = vunpack.c.l.b16 %v1780
    %v1871 = vunpack.c.l.b16 %v1781
    %v1872 = vunpack.c.h.b16 %v1781
    %v1873 = vunpack.c.l.b16 %v1782
    %v1874 = vunpack.c.l.b16 %v1783
    %v1875 = vunpack.c.h.b16 %v1783
    %v1876 = vunpack.c.l.b16 %v1784
    %v1877 = vunpack.c.l.b16 %v1785
    %v1878 = vunpack.c.h.b16 %v1785
    %v1879 = vunpack.c.l.b16 %v1786
    %v1880 = vunpack.c.l.b16 %v1787
    %v1881 = vunpack.c.h.b16 %v1787
    %v1882 = vunpack.c.l.b16 %v1788
    %v1883 = vunpack.c.l.b16 %v1789
    %v1884 = vunpack.c.h.b16 %v1789
    %v1885 = vunpack.c.l.b16 %v1790
    %v1886 = vunpack.c.l.b16 %v1791
    %v1887 = vunpack.c.h.b16 %v1791
    %v1888 = vunpack.c.l.b16 %v1792
    %v1889 = vunpack.c.l.b16 %v1793
    %v1890 = vunpack.c.h.b16 %v1793
    %v1891 = vunpack.c.l.b16 %v1794
    %v1892 = vpack.c.b16 %v1847, %v1844
    %v1893 = vpack.c.b16 %v1848, %v1845
    %v1894 = vpack.c.b16 %v1849, %v1846
    %v1895 = vpack.c.b16 %v1853, %v1850
    %v1896 = vpack.c.b16 %v1854, %v1851
    %v1897 = vpack.c.b16 %v1855, %v1852
    %v1898 = vpack.c.b16 %v1859, %v1856
    %v1899 = vpack.c.b16 %v1860, %v1857
    %v1900 = vpack.c.b16 %v1861, %v1858
    %v1901 = vpack.c.b16 %v1865, %v1862
    %v1902 = vpack.c.b16 %v1866, %v1863
    %v1903 = vpack.c.b16 %v1867, %v1864
    %v1904 = vpack.c.b16 %v1871, %v1868
    %v1905 = vpack.c.b16 %v1872, %v1869
    %v1906 = vpack.c.b16 %v1873, %v1870
    %v1907 = vpack.c.b16 %v1877, %v1874
    %v1908 = vpack.c.b16 %v1878, %v1875
    %v1909 = vpack.c.b16 %v1879, %v1876
    %v1910 = vpack.c.b16 %v1883, %v1880
    %v1911 = vpack.c.b16 %v1884, %v1881
    %v1912 = vpack.c.b16 %v1885, %v1882
    %v1913 = vpack.c.b16 %v1889, %v1886
    %v1914 = vpack.c.b16 %v1890, %v1887
    %v1915 = vpack.c.b16 %v1891, %v1888
    %1940 = vmatprep.subr.bf16.mxu0 %v1893
    %1941 = vmatpush1.bf16.msra.mxu0 %v1892
    %1942 = vmatprep.subr.bf16.mxu0 %v1896
    %1943 = vmatpush1.bf16.msra.mxu0 %v1895
    %1944 = vmatprep.subr.bf16.mxu0 %v1899
    %1945 = vmatpush1.bf16.msra.mxu0 %v1898
    %1946 = vmatprep.subr.bf16.mxu0 %v1902
    %1947 = vmatpush1.bf16.msra.mxu0 %v1901
    %1948 = vmatprep.subr.bf16.mxu0 %v1905
    %1949 = vmatpush1.bf16.msra.mxu0 %v1904
    %1950 = vmatprep.subr.bf16.mxu0 %v1908
    %1951 = vmatpush1.bf16.msra.mxu0 %v1907
    %1952 = vmatprep.subr.bf16.mxu0 %v1911
    %1953 = vmatpush1.bf16.msra.mxu0 %v1910
    %1954 = vmatprep.subr.bf16.mxu0 %v1914
    %1955 = vmatpush1.bf16.msra.mxu0 %v1913
    %1956 = vmatprep.subr.bf16.mxu0 0
    %1957 = vmatpush1.bf16.msra.mxu0 0
    %1958 = vmatprep.subr.bf16.mxu0 0
    %1959 = vmatpush1.bf16.msra.mxu0 0
    %1960 = vmatprep.subr.bf16.mxu0 0
    %1961 = vmatpush1.bf16.msra.mxu0 0
    %1962 = vmatprep.subr.bf16.mxu0 0
    %1963 = vmatpush1.bf16.msra.mxu0 0
    %1964 = vmatprep.subr.bf16.mxu0 0
    %1965 = vmatpush1.bf16.msra.mxu0 0
    %1966 = vmatprep.subr.bf16.mxu0 0
    %1967 = vmatpush1.bf16.msra.mxu0 0
    %1968 = vmatprep.subr.bf16.mxu0 0
    %1969 = vmatpush1.bf16.msra.mxu0 0
    %1970 = vmatprep.subr.bf16.mxu0 0
    %1971 = vmatpush1.bf16.msra.mxu0 0
    %1972 = vmatprep.mubr.bf16.mxu0 0
    %1973 = vmatmul.mubr.bf16.gmra.mrb[0].mxu0 %v1755
    %v1974 = vpop.f32.mrb[0].mxu0
    %v1975 = vadd.f32 %v1800, %v1974
    %v1976 = vpop.f32.mrb[0].mxu0
    %v1977 = vadd.f32 %v1804, %v1976
    %v1978 = vpop.f32.mrb[0].mxu0
    %v1979 = vadd.f32 %v1800, %v1978
    %v1980 = vpop.f32.mrb[0].mxu0
    %v1981 = vadd.f32 %v1804, %v1980
    %1982 = vmatprep.mubr.bf16.mxu0 0
    %1983 = vmatmul.mubr.bf16.gmra.mrb[0].mxu0 %v1756
    %v1984 = vpop.f32.mrb[0].mxu0
    %v1985 = vadd.f32 %v1800, %v1984
    %v1986 = vpop.f32.mrb[0].mxu0
    %v1987 = vadd.f32 %v1804, %v1986
    %v1988 = vpop.f32.mrb[0].mxu0
    %v1989 = vadd.f32 %v1800, %v1988
    %v1990 = vpop.f32.mrb[0].mxu0
    %v1991 = vadd.f32 %v1804, %v1990
    %1992 = vmatprep.mubr.bf16.mxu0 0
    %1993 = vmatmul.mubr.bf16.gmra.mrb[0].mxu0 %v1757
    %v1994 = vpop.f32.mrb[0].mxu0
    %v1995 = vadd.f32 %v1800, %v1994
    %v1996 = vpop.f32.mrb[0].mxu0
    %v1997 = vadd.f32 %v1804, %v1996
    %v1998 = vpop.f32.mrb[0].mxu0
    %v1999 = vadd.f32 %v1800, %v1998
    %v2000 = vpop.f32.mrb[0].mxu0
    %v2001 = vadd.f32 %v1804, %v2000
    %2002 = vmatprep.mubr.bf16.mxu0 0
    %2003 = vmatmul.mubr.bf16.gmra.mrb[0].mxu0 %v1758
    %v2004 = vpop.f32.mrb[0].mxu0
    %v2005 = vadd.f32 %v1800, %v2004
    %v2006 = vpop.f32.mrb[0].mxu0
    %v2007 = vadd.f32 %v1804, %v2006
    %v2008 = vpop.f32.mrb[0].mxu0
    %v2009 = vadd.f32 %v1800, %v2008
    %v2010 = vpop.f32.mrb[0].mxu0
    %v2011 = vadd.f32 %v1804, %v2010
    %2012 = vmatprep.mubr.bf16.mxu0 0
    %2013 = vmatmul.mubr.bf16.gmra.mrb[0].mxu0 %v1759
    %v2014 = vpop.f32.mrb[0].mxu0
    %v2015 = vadd.f32 %v1800, %v2014
    %v2016 = vpop.f32.mrb[0].mxu0
    %v2017 = vadd.f32 %v1804, %v2016
    %v2018 = vpop.f32.mrb[0].mxu0
    %v2019 = vadd.f32 %v1800, %v2018
    %v2020 = vpop.f32.mrb[0].mxu0
    %v2021 = vadd.f32 %v1804, %v2020
    %2022 = vmatprep.mubr.bf16.mxu0 0
    %2023 = vmatmul.mubr.bf16.gmra.mrb[0].mxu0 %v1760
    %v2024 = vpop.f32.mrb[0].mxu0
    %v2025 = vadd.f32 %v1800, %v2024
    %v2026 = vpop.f32.mrb[0].mxu0
    %v2027 = vadd.f32 %v1804, %v2026
    %v2028 = vpop.f32.mrb[0].mxu0
    %v2029 = vadd.f32 %v1800, %v2028
    %v2030 = vpop.f32.mrb[0].mxu0
    %v2031 = vadd.f32 %v1804, %v2030
    %2032 = vmatprep.mubr.bf16.mxu0 0
    %2033 = vmatmul.mubr.bf16.gmra.mrb[0].mxu0 %v1761
    %v2034 = vpop.f32.mrb[0].mxu0
    %v2035 = vadd.f32 %v1800, %v2034
    %v2036 = vpop.f32.mrb[0].mxu0
    %v2037 = vadd.f32 %v1804, %v2036
    %v2038 = vpop.f32.mrb[0].mxu0
    %v2039 = vadd.f32 %v1800, %v2038
    %v2040 = vpop.f32.mrb[0].mxu0
    %v2041 = vadd.f32 %v1804, %v2040
    %2042 = vmatprep.mubr.bf16.mxu0 0
    %2043 = vmatmul.mubr.bf16.gmra.mrb[0].mxu0 %v1762
    %v2044 = vpop.f32.mrb[0].mxu0
    %v2045 = vadd.f32 %v1800, %v2044
    %v2046 = vpop.f32.mrb[0].mxu0
    %v2047 = vadd.f32 %v1804, %v2046
    %v2048 = vpop.f32.mrb[0].mxu0
    %v2049 = vadd.f32 %v1800, %v2048
    %v2050 = vpop.f32.mrb[0].mxu0
    %v2051 = vadd.f32 %v1804, %v2050
    %2052 = vdwg.mxu0
    %2053 = vmatprep.subr.bf16.mxu0 0
    %2054 = vmatpush1.bf16.msra.mxu0 %v1894
    %2055 = vmatprep.subr.bf16.mxu0 0
    %2056 = vmatpush1.bf16.msra.mxu0 %v1897
    %2057 = vmatprep.subr.bf16.mxu0 0
    %2058 = vmatpush1.bf16.msra.mxu0 %v1900
    %2059 = vmatprep.subr.bf16.mxu0 0
    %2060 = vmatpush1.bf16.msra.mxu0 %v1903
    %2061 = vmatprep.subr.bf16.mxu0 0
    %2062 = vmatpush1.bf16.msra.mxu0 %v1906
    %2063 = vmatprep.subr.bf16.mxu0 0
    %2064 = vmatpush1.bf16.msra.mxu0 %v1909
    %2065 = vmatprep.subr.bf16.mxu0 0
    %2066 = vmatpush1.bf16.msra.mxu0 %v1912
    %2067 = vmatprep.subr.bf16.mxu0 0
    %2068 = vmatpush1.bf16.msra.mxu0 %v1915
    %2069 = vmatprep.subr.bf16.mxu0 0
    %2070 = vmatpush1.bf16.msra.mxu0 0
    %2071 = vmatprep.subr.bf16.mxu0 0
    %2072 = vmatpush1.bf16.msra.mxu0 0
    %2073 = vmatprep.subr.bf16.mxu0 0
    %2074 = vmatpush1.bf16.msra.mxu0 0
    %2075 = vmatprep.subr.bf16.mxu0 0
    %2076 = vmatpush1.bf16.msra.mxu0 0
    %2077 = vmatprep.subr.bf16.mxu0 0
    %2078 = vmatpush1.bf16.msra.mxu0 0
    %2079 = vmatprep.subr.bf16.mxu0 0
    %2080 = vmatpush1.bf16.msra.mxu0 0
    %2081 = vmatprep.subr.bf16.mxu0 0
    %2082 = vmatpush1.bf16.msra.mxu0 0
    %2083 = vmatprep.subr.bf16.mxu0 0
    %2084 = vmatpush1.bf16.msra.mxu0 0
    %2085 = vmatprep.mubr.bf16.mxu0 0
    %2086 = vmatmul.mubr.bf16.gmra.mrb[0].mxu0 %v1755
    %v2087 = vpop.f32.mrb[0].mxu0
    %v2088 = vadd.f32 %v1808, %v2087
    %v2089 = vpop.f32.mrb[0].mxu0
    %v2090 = vpop.f32.mrb[0].mxu0
    %v2091 = vadd.f32 %v1808, %v2090
    %v2092 = vpop.f32.mrb[0].mxu0
    %2093 = vmatprep.mubr.bf16.mxu0 0
    %2094 = vmatmul.mubr.bf16.gmra.mrb[0].mxu0 %v1756
    %v2095 = vpop.f32.mrb[0].mxu0
    %v2096 = vadd.f32 %v1808, %v2095
    %v2097 = vpop.f32.mrb[0].mxu0
    %v2098 = vpop.f32.mrb[0].mxu0
    %v2099 = vadd.f32 %v1808, %v2098
    %v2100 = vpop.f32.mrb[0].mxu0
    %2101 = vmatprep.mubr.bf16.mxu0 0
    %2102 = vmatmul.mubr.bf16.gmra.mrb[0].mxu0 %v1757
    %v2103 = vpop.f32.mrb[0].mxu0
    %v2104 = vadd.f32 %v1808, %v2103
    %v2105 = vpop.f32.mrb[0].mxu0
    %v2106 = vpop.f32.mrb[0].mxu0
    %v2107 = vadd.f32 %v1808, %v2106
    %v2108 = vpop.f32.mrb[0].mxu0
    %2109 = vmatprep.mubr.bf16.mxu0 0
    %2110 = vmatmul.mubr.bf16.gmra.mrb[0].mxu0 %v1758
    %v2111 = vpop.f32.mrb[0].mxu0
    %v2112 = vadd.f32 %v1808, %v2111
    %v2113 = vpop.f32.mrb[0].mxu0
    %v2114 = vpop.f32.mrb[0].mxu0
    %v2115 = vadd.f32 %v1808, %v2114
    %v2116 = vpop.f32.mrb[0].mxu0
    %2117 = vmatprep.mubr.bf16.mxu0 0
    %2118 = vmatmul.mubr.bf16.gmra.mrb[0].mxu0 %v1759
    %v2119 = vpop.f32.mrb[0].mxu0
    %v2120 = vadd.f32 %v1808, %v2119
    %v2121 = vpop.f32.mrb[0].mxu0
    %v2122 = vpop.f32.mrb[0].mxu0
    %v2123 = vadd.f32 %v1808, %v2122
    %v2124 = vpop.f32.mrb[0].mxu0
    %2125 = vmatprep.mubr.bf16.mxu0 0
    %2126 = vmatmul.mubr.bf16.gmra.mrb[0].mxu0 %v1760
    %v2127 = vpop.f32.mrb[0].mxu0
    %v2128 = vadd.f32 %v1808, %v2127
    %v2129 = vpop.f32.mrb[0].mxu0
    %v2130 = vpop.f32.mrb[0].mxu0
    %v2131 = vadd.f32 %v1808, %v2130
    %v2132 = vpop.f32.mrb[0].mxu0
    %2133 = vmatprep.mubr.bf16.mxu0 0
    %2134 = vmatmul.mubr.bf16.gmra.mrb[0].mxu0 %v1761
    %v2135 = vpop.f32.mrb[0].mxu0
    %v2136 = vadd.f32 %v1808, %v2135
    %v2137 = vpop.f32.mrb[0].mxu0
    %v2138 = vpop.f32.mrb[0].mxu0
    %v2139 = vadd.f32 %v1808, %v2138
    %v2140 = vpop.f32.mrb[0].mxu0
    %2141 = vmatprep.mubr.bf16.mxu0 0
    %2142 = vmatmul.mubr.bf16.gmra.mrb[0].mxu0 %v1762
    %v2143 = vpop.f32.mrb[0].mxu0
    %v2144 = vadd.f32 %v1808, %v2143
    %v2145 = vpop.f32.mrb[0].mxu0
    %v2146 = vpop.f32.mrb[0].mxu0
    %v2147 = vadd.f32 %v1808, %v2146
    %v2148 = vpop.f32.mrb[0].mxu0
    %2149 = vdwg.mxu0
    %2150 = vst [vmem:[#allocation2] sm:$0xff] %v1975
    %2151 = vst [vmem:[#allocation2 + $0x8] sm:$0xff] %v1977
    %2152 = vst [vmem:[#allocation2 + $0x10] sm:$0xff] %v2088
    %2153 = vst [vmem:[#allocation2 + $0x18] sm:$0xff] %v1979
    %2154 = vst [vmem:[#allocation2 + $0x20] sm:$0xff] %v1981
    %2155 = vst [vmem:[#allocation2 + $0x28] sm:$0xff] %v2091
    %2156 = vst [vmem:[#allocation2 + $0x30] sm:$0xff] %v1985
    %2157 = vst [vmem:[#allocation2 + $0x38] sm:$0xff] %v1987
    %2158 = vst [vmem:[#allocation2 + $0x40] sm:$0xff] %v2096
    %2159 = vst [vmem:[#allocation2 + $0x48] sm:$0xff] %v1989
    %2160 = vst [vmem:[#allocation2 + $0x50] sm:$0xff] %v1991
    %2161 = vst [vmem:[#allocation2 + $0x58] sm:$0xff] %v2099
    %2162 = vst [vmem:[#allocation2 + $0x60] sm:$0xff] %v1995
    %2163 = vst [vmem:[#allocation2 + $0x68] sm:$0xff] %v1997
    %2164 = vst [vmem:[#allocation2 + $0x70] sm:$0xff] %v2104
    %2165 = vst [vmem:[#allocation2 + $0x78] sm:$0xff] %v1999
    %2166 = vst [vmem:[#allocation2 + $0x80] sm:$0xff] %v2001
    %2167 = vst [vmem:[#allocation2 + $0x88] sm:$0xff] %v2107
    %2168 = vst [vmem:[#allocation2 + $0x90] sm:$0xff] %v2005
    %2169 = vst [vmem:[#allocation2 + $0x98] sm:$0xff] %v2007
    %2170 = vst [vmem:[#allocation2 + $0xa0] sm:$0xff] %v2112
    %2171 = vst [vmem:[#allocation2 + $0xa8] sm:$0xff] %v2009
    %2172 = vst [vmem:[#allocation2 + $0xb0] sm:$0xff] %v2011
    %2173 = vst [vmem:[#allocation2 + $0xb8] sm:$0xff] %v2115
    %2174 = vst [vmem:[#allocation2 + $0xc0] sm:$0xff] %v2015
    %2175 = vst [vmem:[#allocation2 + $0xc8] sm:$0xff] %v2017
    %2176 = vst [vmem:[#allocation2 + $0xd0] sm:$0xff] %v2120
    %2177 = vst [vmem:[#allocation2 + $0xd8] sm:$0xff] %v2019
    %2178 = vst [vmem:[#allocation2 + $0xe0] sm:$0xff] %v2021
    %2179 = vst [vmem:[#allocation2 + $0xe8] sm:$0xff] %v2123
    %2180 = vst [vmem:[#allocation2 + $0xf0] sm:$0xff] %v2025
    %2181 = vst [vmem:[#allocation2 + $0xf8] sm:$0xff] %v2027
    %2182 = vst [vmem:[#allocation2 + $0x100] sm:$0xff] %v2128
    %2183 = vst [vmem:[#allocation2 + $0x108] sm:$0xff] %v2029
    %2184 = vst [vmem:[#allocation2 + $0x110] sm:$0xff] %v2031
    %2185 = vst [vmem:[#allocation2 + $0x118] sm:$0xff] %v2131
    %2186 = vst [vmem:[#allocation2 + $0x120] sm:$0xff] %v2035
    %2187 = vst [vmem:[#allocation2 + $0x128] sm:$0xff] %v2037
    %2188 = vst [vmem:[#allocation2 + $0x130] sm:$0xff] %v2136
    %2189 = vst [vmem:[#allocation2 + $0x138] sm:$0xff] %v2039
    %2190 = vst [vmem:[#allocation2 + $0x140] sm:$0xff] %v2041
    %2191 = vst [vmem:[#allocation2 + $0x148] sm:$0xff] %v2139
    %2192 = vst [vmem:[#allocation2 + $0x150] sm:$0xff] %v2045
    %2193 = vst [vmem:[#allocation2 + $0x158] sm:$0xff] %v2047
    %2194 = vst [vmem:[#allocation2 + $0x160] sm:$0xff] %v2144
    %2195 = vst [vmem:[#allocation2 + $0x168] sm:$0xff] %v2049
    %2196 = vst [vmem:[#allocation2 + $0x170] sm:$0xff] %v2051
    %2197 = vst [vmem:[#allocation2 + $0x178] sm:$0xff] %v2147
    %v2198 = vld [vmem:[#allocation10] sm:$0xff]
    %v2199 = vld [vmem:[#allocation10 + $0x8] sm:$0xf]
    %v2200 = vld [vmem:[#allocation10 + $0xc] sm:$0xff]
    %v2201 = vld [vmem:[#allocation10 + $0x14] sm:$0xf]
    %v2202 = vld [vmem:[#allocation10 + $0x18] sm:$0xff]
    %v2203 = vld [vmem:[#allocation10 + $0x20] sm:$0xf]
    %v2204 = vld [vmem:[#allocation10 + $0x24] sm:$0xff]
    %v2205 = vld [vmem:[#allocation10 + $0x2c] sm:$0xf]
    %v2206 = vld [vmem:[#allocation10 + $0x30] sm:$0xff]
    %v2207 = vld [vmem:[#allocation10 + $0x38] sm:$0xf]
    %v2208 = vld [vmem:[#allocation10 + $0x3c] sm:$0xff]
    %v2209 = vld [vmem:[#allocation10 + $0x44] sm:$0xf]
    %v2210 = vld [vmem:[#allocation10 + $0x48] sm:$0xff]
    %v2211 = vld [vmem:[#allocation10 + $0x50] sm:$0xf]
    %v2212 = vld [vmem:[#allocation10 + $0x54] sm:$0xff]
    %v2213 = vld [vmem:[#allocation10 + $0x5c] sm:$0xf]
    %v2214 = vld [vmem:[#allocation10 + $0x60] sm:$0xff]
    %v2215 = vld [vmem:[#allocation10 + $0x68] sm:$0xf]
    %v2216 = vld [vmem:[#allocation10 + $0x6c] sm:$0xff]
    %v2217 = vld [vmem:[#allocation10 + $0x74] sm:$0xf]
    %v2218 = vld [vmem:[#allocation10 + $0x78] sm:$0xff]
    %v2219 = vld [vmem:[#allocation10 + $0x80] sm:$0xf]
    %v2220 = vld [vmem:[#allocation10 + $0x84] sm:$0xff]
    %v2221 = vld [vmem:[#allocation10 + $0x8c] sm:$0xf]
    %v2222 = vld [vmem:[#allocation10 + $0x90] sm:$0xff]
    %v2223 = vld [vmem:[#allocation10 + $0x98] sm:$0xf]
    %v2224 = vld [vmem:[#allocation10 + $0x9c] sm:$0xff]
    %v2225 = vld [vmem:[#allocation10 + $0xa4] sm:$0xf]
    %v2226 = vld [vmem:[#allocation10 + $0xa8] sm:$0xff]
    %v2227 = vld [vmem:[#allocation10 + $0xb0] sm:$0xf]
    %v2228 = vld [vmem:[#allocation10 + $0xb4] sm:$0xff]
    %v2229 = vld [vmem:[#allocation10 + $0xbc] sm:$0xf]
    %v2230 = vld [vmem:[%s8] sm:$0x1]
    %v2231 = vld [vmem:[#allocation2] sm:$0xff]
    %v2232 = vld [vmem:[#allocation2 + $0x8] sm:$0xff]
    %v2233 = vld [vmem:[#allocation2 + $0x10] sm:$0xff]
    %v2234 = vld [vmem:[#allocation2 + $0x18] sm:$0xff]
    %v2235 = vld [vmem:[#allocation2 + $0x20] sm:$0xff]
    %v2236 = vld [vmem:[#allocation2 + $0x28] sm:$0xff]
    %v2269 = vunpack.c.l.b16 %v2198
    %v2270 = vunpack.c.h.b16 %v2198
    %v2271 = vunpack.c.l.b16 %v2199
    %v2272 = vunpack.c.l.b16 %v2200
    %v2273 = vunpack.c.h.b16 %v2200
    %v2274 = vunpack.c.l.b16 %v2201
    %v2275 = vunpack.c.l.b16 %v2202
    %v2276 = vunpack.c.h.b16 %v2202
    %v2277 = vunpack.c.l.b16 %v2203
    %v2278 = vunpack.c.l.b16 %v2204
    %v2279 = vunpack.c.h.b16 %v2204
    %v2280 = vunpack.c.l.b16 %v2205
    %v2281 = vunpack.c.l.b16 %v2206
    %v2282 = vunpack.c.h.b16 %v2206
    %v2283 = vunpack.c.l.b16 %v2207
    %v2284 = vunpack.c.l.b16 %v2208
    %v2285 = vunpack.c.h.b16 %v2208
    %v2286 = vunpack.c.l.b16 %v2209
    %v2287 = vunpack.c.l.b16 %v2210
    %v2288 = vunpack.c.h.b16 %v2210
    %v2289 = vunpack.c.l.b16 %v2211
    %v2290 = vunpack.c.l.b16 %v2212
    %v2291 = vunpack.c.h.b16 %v2212
    %v2292 = vunpack.c.l.b16 %v2213
    %v2293 = vunpack.c.l.b16 %v2214
    %v2294 = vunpack.c.h.b16 %v2214
    %v2295 = vunpack.c.l.b16 %v2215
    %v2296 = vunpack.c.l.b16 %v2216
    %v2297 = vunpack.c.h.b16 %v2216
    %v2298 = vunpack.c.l.b16 %v2217
    %v2299 = vunpack.c.l.b16 %v2218
    %v2300 = vunpack.c.h.b16 %v2218
    %v2301 = vunpack.c.l.b16 %v2219
    %v2302 = vunpack.c.l.b16 %v2220
    %v2303 = vunpack.c.h.b16 %v2220
    %v2304 = vunpack.c.l.b16 %v2221
    %v2305 = vunpack.c.l.b16 %v2222
    %v2306 = vunpack.c.h.b16 %v2222
    %v2307 = vunpack.c.l.b16 %v2223
    %v2308 = vunpack.c.l.b16 %v2224
    %v2309 = vunpack.c.h.b16 %v2224
    %v2310 = vunpack.c.l.b16 %v2225
    %v2311 = vunpack.c.l.b16 %v2226
    %v2312 = vunpack.c.h.b16 %v2226
    %v2313 = vunpack.c.l.b16 %v2227
    %v2314 = vunpack.c.l.b16 %v2228
    %v2315 = vunpack.c.h.b16 %v2228
    %v2316 = vunpack.c.l.b16 %v2229
    %v2317 = vpack.c.b16 %v2272, %v2269
    %v2318 = vpack.c.b16 %v2273, %v2270
    %v2319 = vpack.c.b16 %v2274, %v2271
    %v2320 = vpack.c.b16 %v2278, %v2275
    %v2321 = vpack.c.b16 %v2279, %v2276
    %v2322 = vpack.c.b16 %v2280, %v2277
    %v2323 = vpack.c.b16 %v2284, %v2281
    %v2324 = vpack.c.b16 %v2285, %v2282
    %v2325 = vpack.c.b16 %v2286, %v2283
    %v2326 = vpack.c.b16 %v2290, %v2287
    %v2327 = vpack.c.b16 %v2291, %v2288
    %v2328 = vpack.c.b16 %v2292, %v2289
    %v2329 = vpack.c.b16 %v2296, %v2293
    %v2330 = vpack.c.b16 %v2297, %v2294
    %v2331 = vpack.c.b16 %v2298, %v2295
    %v2332 = vpack.c.b16 %v2302, %v2299
    %v2333 = vpack.c.b16 %v2303, %v2300
    %v2334 = vpack.c.b16 %v2304, %v2301
    %v2335 = vpack.c.b16 %v2308, %v2305
    %v2336 = vpack.c.b16 %v2309, %v2306
    %v2337 = vpack.c.b16 %v2310, %v2307
    %v2338 = vpack.c.b16 %v2314, %v2311
    %v2339 = vpack.c.b16 %v2315, %v2312
    %v2340 = vpack.c.b16 %v2316, %v2313
    %2365 = vmatprep.subr.bf16.mxu0 %v2318
    %2366 = vmatpush1.bf16.msra.mxu0 %v2317
    %2367 = vmatprep.subr.bf16.mxu0 %v2321
    %2368 = vmatpush1.bf16.msra.mxu0 %v2320
    %2369 = vmatprep.subr.bf16.mxu0 %v2324
    %2370 = vmatpush1.bf16.msra.mxu0 %v2323
    %2371 = vmatprep.subr.bf16.mxu0 %v2327
    %2372 = vmatpush1.bf16.msra.mxu0 %v2326
    %2373 = vmatprep.subr.bf16.mxu0 %v2330
    %2374 = vmatpush1.bf16.msra.mxu0 %v2329
    %2375 = vmatprep.subr.bf16.mxu0 %v2333
    %2376 = vmatpush1.bf16.msra.mxu0 %v2332
    %2377 = vmatprep.subr.bf16.mxu0 %v2336
    %2378 = vmatpush1.bf16.msra.mxu0 %v2335
    %2379 = vmatprep.subr.bf16.mxu0 %v2339
    %2380 = vmatpush1.bf16.msra.mxu0 %v2338
    %2381 = vmatprep.subr.bf16.mxu0 0
    %2382 = vmatpush1.bf16.msra.mxu0 0
    %2383 = vmatprep.subr.bf16.mxu0 0
    %2384 = vmatpush1.bf16.msra.mxu0 0
    %2385 = vmatprep.subr.bf16.mxu0 0
    %2386 = vmatpush1.bf16.msra.mxu0 0
    %2387 = vmatprep.subr.bf16.mxu0 0
    %2388 = vmatpush1.bf16.msra.mxu0 0
    %2389 = vmatprep.subr.bf16.mxu0 0
    %2390 = vmatpush1.bf16.msra.mxu0 0
    %2391 = vmatprep.subr.bf16.mxu0 0
    %2392 = vmatpush1.bf16.msra.mxu0 0
    %2393 = vmatprep.subr.bf16.mxu0 0
    %2394 = vmatpush1.bf16.msra.mxu0 0
    %2395 = vmatprep.subr.bf16.mxu0 0
    %2396 = vmatpush1.bf16.msra.mxu0 0
    %2397 = vmatprep.mubr.bf16.mxu0 0
    %2398 = vmatmul.mubr.bf16.gmra.mrb[0].mxu0 0
    %v2399 = vpop.f32.mrb[0].mxu0
    %v2400 = vadd.f32 0.0, %v2399
    %v2401 = vpop.f32.mrb[0].mxu0
    %v2402 = vadd.f32 0.0, %v2401
    %v2403 = vpop.f32.mrb[0].mxu0
    %v2404 = vadd.f32 0.0, %v2403
    %v2405 = vpop.f32.mrb[0].mxu0
    %v2406 = vadd.f32 0.0, %v2405
    %2407 = vdwg.mxu0
    %2408 = vmatprep.subr.bf16.mxu0 0
    %2409 = vmatpush1.bf16.msra.mxu0 %v2319
    %2410 = vmatprep.subr.bf16.mxu0 0
    %2411 = vmatpush1.bf16.msra.mxu0 %v2322
    %2412 = vmatprep.subr.bf16.mxu0 0
    %2413 = vmatpush1.bf16.msra.mxu0 %v2325
    %2414 = vmatprep.subr.bf16.mxu0 0
    %2415 = vmatpush1.bf16.msra.mxu0 %v2328
    %2416 = vmatprep.subr.bf16.mxu0 0
    %2417 = vmatpush1.bf16.msra.mxu0 %v2331
    %2418 = vmatprep.subr.bf16.mxu0 0
    %2419 = vmatpush1.bf16.msra.mxu0 %v2334
    %2420 = vmatprep.subr.bf16.mxu0 0
    %2421 = vmatpush1.bf16.msra.mxu0 %v2337
    %2422 = vmatprep.subr.bf16.mxu0 0
    %2423 = vmatpush1.bf16.msra.mxu0 %v2340
    %2424 = vmatprep.subr.bf16.mxu0 0
    %2425 = vmatpush1.bf16.msra.mxu0 0
    %2426 = vmatprep.subr.bf16.mxu0 0
    %2427 = vmatpush1.bf16.msra.mxu0 0
    %2428 = vmatprep.subr.bf16.mxu0 0
    %2429 = vmatpush1.bf16.msra.mxu0 0
    %2430 = vmatprep.subr.bf16.mxu0 0
    %2431 = vmatpush1.bf16.msra.mxu0 0
    %2432 = vmatprep.subr.bf16.mxu0 0
    %2433 = vmatpush1.bf16.msra.mxu0 0
    %2434 = vmatprep.subr.bf16.mxu0 0
    %2435 = vmatpush1.bf16.msra.mxu0 0
    %2436 = vmatprep.subr.bf16.mxu0 0
    %2437 = vmatpush1.bf16.msra.mxu0 0
    %2438 = vmatprep.subr.bf16.mxu0 0
    %2439 = vmatpush1.bf16.msra.mxu0 0
    %2440 = vmatprep.mubr.bf16.mxu0 0
    %2441 = vmatmul.mubr.bf16.gmra.mrb[0].mxu0 0
    %v2442 = vpop.f32.mrb[0].mxu0
    %v2443 = vadd.f32 0.0, %v2442
    %v2444 = vpop.f32.mrb[0].mxu0
    %v2445 = vpop.f32.mrb[0].mxu0
    %v2446 = vadd.f32 0.0, %v2445
    %v2447 = vpop.f32.mrb[0].mxu0
    %2448 = vdwg.mxu0
    %v2449 = vadd.f32 %v2231, %v2400
    %v2450 = vadd.f32 %v2234, %v2404
    %v2451 = vxor.u32 %v2449, 2147483648
    %v2452 = vxor.u32 %v2450, 2147483648
    %v2453 = vmul.f32 %v2451, 1.442695
    %v2454 = vpow.pop %v2453
    %v2455 = vmul.f32 %v2452, 1.442695
    %v2456 = vpow.pop %v2455
    %v2457 = vadd.f32 %v2454, 1.0
    %v2458 = vadd.f32 %v2456, 1.0
    %v2459 = vrcp.pop %v2457
    %v2460 = vmul.f32 1.0, %v2459
    %v2461 = vrcp.pop %v2458
    %v2462 = vmul.f32 1.0, %v2461
    %v2463 = vadd.f32 %v2232, %v2402
    %v2464 = vadd.f32 %v2235, %v2406
    %v2465 = vxor.u32 %v2463, 2147483648
    %v2466 = vxor.u32 %v2464, 2147483648
    %v2467 = vmul.f32 %v2465, 1.442695
    %v2468 = vpow.pop %v2467
    %v2469 = vmul.f32 %v2466, 1.442695
    %v2470 = vpow.pop %v2469
    %v2471 = vadd.f32 %v2468, 1.0
    %v2472 = vadd.f32 %v2470, 1.0
    %v2473 = vrcp.pop %v2471
    %v2474 = vmul.f32 1.0, %v2473
    %v2475 = vrcp.pop %v2472
    %v2476 = vmul.f32 1.0, %v2475
    %v2478 = vlaneseq
    %v2479 = vshrl.u32 %v2478, 7
    %v2480 = vsub.s32 0, %v2479
    %v2481 = vrot.slane %v2230, %v2480
    %v2483 = vadd.f32 %v2443, %v2481
    %v2484 = vadd.f32 %v2446, %v2481
    %v2485 = vmul.f32 %v2460, %v2483
    %v2486 = vmul.f32 %v2462, %v2484
    %v2487 = vadd.f32 %v2233, %v2485
    %v2488 = vadd.f32 %v2236, %v2486
    %v2489 = vtanh.pop %v2487
    %v2490 = vtanh.pop %v2488
    %v2491 = vsub.f32 1.0, %v2474
    %v2492 = vsub.f32 1.0, %v2476
    %v2493 = vmul.f32 %v2491, %v2489
    %v2494 = vmul.f32 %v2492, %v2490
    %v2495 = vmul.f32 %v2474, 0.0
    %v2496 = vmul.f32 %v2476, 0.0
    %v2497 = vadd.f32 %v2493, %v2495
    %v2498 = vadd.f32 %v2494, %v2496
    %v2499 = vpack.c.bf16 %v2498, %v2497
    %v2500 = vld [vmem:[#allocation2 + $0x30] sm:$0xff]
    %v2501 = vld [vmem:[#allocation2 + $0x38] sm:$0xff]
    %v2502 = vld [vmem:[#allocation2 + $0x40] sm:$0xff]
    %v2503 = vld [vmem:[#allocation2 + $0x48] sm:$0xff]
    %v2504 = vld [vmem:[#allocation2 + $0x50] sm:$0xff]
    %v2505 = vld [vmem:[#allocation2 + $0x58] sm:$0xff]
    %2506 = vmatprep.subr.bf16.mxu0 %v2318
    %2507 = vmatpush1.bf16.msra.mxu0 %v2317
    %2508 = vmatprep.subr.bf16.mxu0 %v2321
    %2509 = vmatpush1.bf16.msra.mxu0 %v2320
    %2510 = vmatprep.subr.bf16.mxu0 %v2324
    %2511 = vmatpush1.bf16.msra.mxu0 %v2323
    %2512 = vmatprep.subr.bf16.mxu0 %v2327
    %2513 = vmatpush1.bf16.msra.mxu0 %v2326
    %2514 = vmatprep.subr.bf16.mxu0 %v2330
    %2515 = vmatpush1.bf16.msra.mxu0 %v2329
    %2516 = vmatprep.subr.bf16.mxu0 %v2333
    %2517 = vmatpush1.bf16.msra.mxu0 %v2332
    %2518 = vmatprep.subr.bf16.mxu0 %v2336
    %2519 = vmatpush1.bf16.msra.mxu0 %v2335
    %2520 = vmatprep.subr.bf16.mxu0 %v2339
    %2521 = vmatpush1.bf16.msra.mxu0 %v2338
    %2522 = vmatprep.subr.bf16.mxu0 0
    %2523 = vmatpush1.bf16.msra.mxu0 0
    %2524 = vmatprep.subr.bf16.mxu0 0
    %2525 = vmatpush1.bf16.msra.mxu0 0
    %2526 = vmatprep.subr.bf16.mxu0 0
    %2527 = vmatpush1.bf16.msra.mxu0 0
    %2528 = vmatprep.subr.bf16.mxu0 0
    %2529 = vmatpush1.bf16.msra.mxu0 0
    %2530 = vmatprep.subr.bf16.mxu0 0
    %2531 = vmatpush1.bf16.msra.mxu0 0
    %2532 = vmatprep.subr.bf16.mxu0 0
    %2533 = vmatpush1.bf16.msra.mxu0 0
    %2534 = vmatprep.subr.bf16.mxu0 0
    %2535 = vmatpush1.bf16.msra.mxu0 0
    %2536 = vmatprep.subr.bf16.mxu0 0
    %2537 = vmatpush1.bf16.msra.mxu0 0
    %2538 = vmatprep.mubr.bf16.mxu0 0
    %2539 = vmatmul.mubr.bf16.gmra.mrb[0].mxu0 %v2499
    %v2540 = vpop.f32.mrb[0].mxu0
    %v2541 = vadd.f32 0.0, %v2540
    %v2542 = vpop.f32.mrb[0].mxu0
    %v2543 = vadd.f32 0.0, %v2542
    %v2544 = vpop.f32.mrb[0].mxu0
    %v2545 = vadd.f32 0.0, %v2544
    %v2546 = vpop.f32.mrb[0].mxu0
    %v2547 = vadd.f32 0.0, %v2546
    %2548 = vdwg.mxu0
    %2549 = vmatprep.subr.bf16.mxu0 0
    %2550 = vmatpush1.bf16.msra.mxu0 %v2319
    %2551 = vmatprep.subr.bf16.mxu0 0
    %2552 = vmatpush1.bf16.msra.mxu0 %v2322
    %2553 = vmatprep.subr.bf16.mxu0 0
    %2554 = vmatpush1.bf16.msra.mxu0 %v2325
    %2555 = vmatprep.subr.bf16.mxu0 0
    %2556 = vmatpush1.bf16.msra.mxu0 %v2328
    %2557 = vmatprep.subr.bf16.mxu0 0
    %2558 = vmatpush1.bf16.msra.mxu0 %v2331
    %2559 = vmatprep.subr.bf16.mxu0 0
    %2560 = vmatpush1.bf16.msra.mxu0 %v2334
    %2561 = vmatprep.subr.bf16.mxu0 0
    %2562 = vmatpush1.bf16.msra.mxu0 %v2337
    %2563 = vmatprep.subr.bf16.mxu0 0
    %2564 = vmatpush1.bf16.msra.mxu0 %v2340
    %2565 = vmatprep.subr.bf16.mxu0 0
    %2566 = vmatpush1.bf16.msra.mxu0 0
    %2567 = vmatprep.subr.bf16.mxu0 0
    %2568 = vmatpush1.bf16.msra.mxu0 0
    %2569 = vmatprep.subr.bf16.mxu0 0
    %2570 = vmatpush1.bf16.msra.mxu0 0
    %2571 = vmatprep.subr.bf16.mxu0 0
    %2572 = vmatpush1.bf16.msra.mxu0 0
    %2573 = vmatprep.subr.bf16.mxu0 0
    %2574 = vmatpush1.bf16.msra.mxu0 0
    %2575 = vmatprep.subr.bf16.mxu0 0
    %2576 = vmatpush1.bf16.msra.mxu0 0
    %2577 = vmatprep.subr.bf16.mxu0 0
    %2578 = vmatpush1.bf16.msra.mxu0 0
    %2579 = vmatprep.subr.bf16.mxu0 0
    %2580 = vmatpush1.bf16.msra.mxu0 0
    %2581 = vmatprep.mubr.bf16.mxu0 0
    %2582 = vmatmul.mubr.bf16.gmra.mrb[0].mxu0 %v2499
    %v2583 = vpop.f32.mrb[0].mxu0
    %v2584 = vadd.f32 0.0, %v2583
    %v2585 = vpop.f32.mrb[0].mxu0
    %v2586 = vpop.f32.mrb[0].mxu0
    %v2587 = vadd.f32 0.0, %v2586
    %v2588 = vpop.f32.mrb[0].mxu0
    %2589 = vdwg.mxu0
    %v2590 = vadd.f32 %v2500, %v2541
    %v2591 = vadd.f32 %v2503, %v2545
    %v2592 = vxor.u32 %v2590, 2147483648
    %v2593 = vxor.u32 %v2591, 2147483648
    %v2594 = vmul.f32 %v2592, 1.442695
    %v2595 = vpow.pop %v2594
    %v2596 = vmul.f32 %v2593, 1.442695
    %v2597 = vpow.pop %v2596
    %v2598 = vadd.f32 %v2595, 1.0
    %v2599 = vadd.f32 %v2597, 1.0
    %v2600 = vrcp.pop %v2598
    %v2601 = vmul.f32 1.0, %v2600
    %v2602 = vrcp.pop %v2599
    %v2603 = vmul.f32 1.0, %v2602
    %v2604 = vadd.f32 %v2501, %v2543
    %v2605 = vadd.f32 %v2504, %v2547
    %v2606 = vxor.u32 %v2604, 2147483648
    %v2607 = vxor.u32 %v2605, 2147483648
    %v2608 = vmul.f32 %v2606, 1.442695
    %v2609 = vpow.pop %v2608
    %v2610 = vmul.f32 %v2607, 1.442695
    %v2611 = vpow.pop %v2610
    %v2612 = vadd.f32 %v2609, 1.0
    %v2613 = vadd.f32 %v2611, 1.0
    %v2614 = vrcp.pop %v2612
    %v2615 = vmul.f32 1.0, %v2614
    %v2616 = vrcp.pop %v2613
    %v2617 = vmul.f32 1.0, %v2616
    %v2618 = vadd.f32 %v2584, %v2481
    %v2619 = vadd.f32 %v2587, %v2481
    %v2620 = vmul.f32 %v2601, %v2618
    %v2621 = vmul.f32 %v2603, %v2619
    %v2622 = vadd.f32 %v2502, %v2620
    %v2623 = vadd.f32 %v2505, %v2621
    %v2624 = vtanh.pop %v2622
    %v2625 = vtanh.pop %v2623
    %v2626 = vsub.f32 1.0, %v2615
    %v2627 = vsub.f32 1.0, %v2617
    %v2628 = vmul.f32 %v2626, %v2624
    %v2629 = vmul.f32 %v2627, %v2625
    %v2630 = vmul.f32 %v2615, %v2497
    %v2631 = vmul.f32 %v2617, %v2498
    %v2632 = vadd.f32 %v2628, %v2630
    %v2633 = vadd.f32 %v2629, %v2631
    %v2634 = vpack.c.bf16 %v2633, %v2632
    %v2635 = vld [vmem:[#allocation2 + $0x60] sm:$0xff]
    %v2636 = vld [vmem:[#allocation2 + $0x68] sm:$0xff]
    %v2637 = vld [vmem:[#allocation2 + $0x70] sm:$0xff]
    %v2638 = vld [vmem:[#allocation2 + $0x78] sm:$0xff]
    %v2639 = vld [vmem:[#allocation2 + $0x80] sm:$0xff]
    %v2640 = vld [vmem:[#allocation2 + $0x88] sm:$0xff]
    %2641 = vmatprep.subr.bf16.mxu0 %v2318
    %2642 = vmatpush1.bf16.msra.mxu0 %v2317
    %2643 = vmatprep.subr.bf16.mxu0 %v2321
    %2644 = vmatpush1.bf16.msra.mxu0 %v2320
    %2645 = vmatprep.subr.bf16.mxu0 %v2324
    %2646 = vmatpush1.bf16.msra.mxu0 %v2323
    %2647 = vmatprep.subr.bf16.mxu0 %v2327
    %2648 = vmatpush1.bf16.msra.mxu0 %v2326
    %2649 = vmatprep.subr.bf16.mxu0 %v2330
    %2650 = vmatpush1.bf16.msra.mxu0 %v2329
    %2651 = vmatprep.subr.bf16.mxu0 %v2333
    %2652 = vmatpush1.bf16.msra.mxu0 %v2332
    %2653 = vmatprep.subr.bf16.mxu0 %v2336
    %2654 = vmatpush1.bf16.msra.mxu0 %v2335
    %2655 = vmatprep.subr.bf16.mxu0 %v2339
    %2656 = vmatpush1.bf16.msra.mxu0 %v2338
    %2657 = vmatprep.subr.bf16.mxu0 0
    %2658 = vmatpush1.bf16.msra.mxu0 0
    %2659 = vmatprep.subr.bf16.mxu0 0
    %2660 = vmatpush1.bf16.msra.mxu0 0
    %2661 = vmatprep.subr.bf16.mxu0 0
    %2662 = vmatpush1.bf16.msra.mxu0 0
    %2663 = vmatprep.subr.bf16.mxu0 0
    %2664 = vmatpush1.bf16.msra.mxu0 0
    %2665 = vmatprep.subr.bf16.mxu0 0
    %2666 = vmatpush1.bf16.msra.mxu0 0
    %2667 = vmatprep.subr.bf16.mxu0 0
    %2668 = vmatpush1.bf16.msra.mxu0 0
    %2669 = vmatprep.subr.bf16.mxu0 0
    %2670 = vmatpush1.bf16.msra.mxu0 0
    %2671 = vmatprep.subr.bf16.mxu0 0
    %2672 = vmatpush1.bf16.msra.mxu0 0
    %2673 = vmatprep.mubr.bf16.mxu0 0
    %2674 = vmatmul.mubr.bf16.gmra.mrb[0].mxu0 %v2634
    %v2675 = vpop.f32.mrb[0].mxu0
    %v2676 = vadd.f32 0.0, %v2675
    %v2677 = vpop.f32.mrb[0].mxu0
    %v2678 = vadd.f32 0.0, %v2677
    %v2679 = vpop.f32.mrb[0].mxu0
    %v2680 = vadd.f32 0.0, %v2679
    %v2681 = vpop.f32.mrb[0].mxu0
    %v2682 = vadd.f32 0.0, %v2681
    %2683 = vdwg.mxu0
    %2684 = vmatprep.subr.bf16.mxu0 0
    %2685 = vmatpush1.bf16.msra.mxu0 %v2319
    %2686 = vmatprep.subr.bf16.mxu0 0
    %2687 = vmatpush1.bf16.msra.mxu0 %v2322
    %2688 = vmatprep.subr.bf16.mxu0 0
    %2689 = vmatpush1.bf16.msra.mxu0 %v2325
    %2690 = vmatprep.subr.bf16.mxu0 0
    %2691 = vmatpush1.bf16.msra.mxu0 %v2328
    %2692 = vmatprep.subr.bf16.mxu0 0
    %2693 = vmatpush1.bf16.msra.mxu0 %v2331
    %2694 = vmatprep.subr.bf16.mxu0 0
    %2695 = vmatpush1.bf16.msra.mxu0 %v2334
    %2696 = vmatprep.subr.bf16.mxu0 0
    %2697 = vmatpush1.bf16.msra.mxu0 %v2337
    %2698 = vmatprep.subr.bf16.mxu0 0
    %2699 = vmatpush1.bf16.msra.mxu0 %v2340
    %2700 = vmatprep.subr.bf16.mxu0 0
    %2701 = vmatpush1.bf16.msra.mxu0 0
    %2702 = vmatprep.subr.bf16.mxu0 0
    %2703 = vmatpush1.bf16.msra.mxu0 0
    %2704 = vmatprep.subr.bf16.mxu0 0
    %2705 = vmatpush1.bf16.msra.mxu0 0
    %2706 = vmatprep.subr.bf16.mxu0 0
    %2707 = vmatpush1.bf16.msra.mxu0 0
    %2708 = vmatprep.subr.bf16.mxu0 0
    %2709 = vmatpush1.bf16.msra.mxu0 0
    %2710 = vmatprep.subr.bf16.mxu0 0
    %2711 = vmatpush1.bf16.msra.mxu0 0
    %2712 = vmatprep.subr.bf16.mxu0 0
    %2713 = vmatpush1.bf16.msra.mxu0 0
    %2714 = vmatprep.subr.bf16.mxu0 0
    %2715 = vmatpush1.bf16.msra.mxu0 0
    %2716 = vmatprep.mubr.bf16.mxu0 0
    %2717 = vmatmul.mubr.bf16.gmra.mrb[0].mxu0 %v2634
    %v2718 = vpop.f32.mrb[0].mxu0
    %v2719 = vadd.f32 0.0, %v2718
    %v2720 = vpop.f32.mrb[0].mxu0
    %v2721 = vpop.f32.mrb[0].mxu0
    %v2722 = vadd.f32 0.0, %v2721
    %v2723 = vpop.f32.mrb[0].mxu0
    %2724 = vdwg.mxu0
    %v2725 = vadd.f32 %v2635, %v2676
    %v2726 = vadd.f32 %v2638, %v2680
    %v2727 = vxor.u32 %v2725, 2147483648
    %v2728 = vxor.u32 %v2726, 2147483648
    %v2729 = vmul.f32 %v2727, 1.442695
    %v2730 = vpow.pop %v2729
    %v2731 = vmul.f32 %v2728, 1.442695
    %v2732 = vpow.pop %v2731
    %v2733 = vadd.f32 %v2730, 1.0
    %v2734 = vadd.f32 %v2732, 1.0
    %v2735 = vrcp.pop %v2733
    %v2736 = vmul.f32 1.0, %v2735
    %v2737 = vrcp.pop %v2734
    %v2738 = vmul.f32 1.0, %v2737
    %v2739 = vadd.f32 %v2636, %v2678
    %v2740 = vadd.f32 %v2639, %v2682
    %v2741 = vxor.u32 %v2739, 2147483648
    %v2742 = vxor.u32 %v2740, 2147483648
    %v2743 = vmul.f32 %v2741, 1.442695
    %v2744 = vpow.pop %v2743
    %v2745 = vmul.f32 %v2742, 1.442695
    %v2746 = vpow.pop %v2745
    %v2747 = vadd.f32 %v2744, 1.0
    %v2748 = vadd.f32 %v2746, 1.0
    %v2749 = vrcp.pop %v2747
    %v2750 = vmul.f32 1.0, %v2749
    %v2751 = vrcp.pop %v2748
    %v2752 = vmul.f32 1.0, %v2751
    %v2753 = vadd.f32 %v2719, %v2481
    %v2754 = vadd.f32 %v2722, %v2481
    %v2755 = vmul.f32 %v2736, %v2753
    %v2756 = vmul.f32 %v2738, %v2754
    %v2757 = vadd.f32 %v2637, %v2755
    %v2758 = vadd.f32 %v2640, %v2756
    %v2759 = vtanh.pop %v2757
    %v2760 = vtanh.pop %v2758
    %v2761 = vsub.f32 1.0, %v2750
    %v2762 = vsub.f32 1.0, %v2752
    %v2763 = vmul.f32 %v2761, %v2759
    %v2764 = vmul.f32 %v2762, %v2760
    %v2765 = vmul.f32 %v2750, %v2632
    %v2766 = vmul.f32 %v2752, %v2633
    %v2767 = vadd.f32 %v2763, %v2765
    %v2768 = vadd.f32 %v2764, %v2766
    %v2769 = vpack.c.bf16 %v2768, %v2767
    %v2770 = vld [vmem:[#allocation2 + $0x90] sm:$0xff]
    %v2771 = vld [vmem:[#allocation2 + $0x98] sm:$0xff]
    %v2772 = vld [vmem:[#allocation2 + $0xa0] sm:$0xff]
    %v2773 = vld [vmem:[#allocation2 + $0xa8] sm:$0xff]
    %v2774 = vld [vmem:[#allocation2 + $0xb0] sm:$0xff]
    %v2775 = vld [vmem:[#allocation2 + $0xb8] sm:$0xff]
    %2776 = vmatprep.subr.bf16.mxu0 %v2318
    %2777 = vmatpush1.bf16.msra.mxu0 %v2317
    %2778 = vmatprep.subr.bf16.mxu0 %v2321
    %2779 = vmatpush1.bf16.msra.mxu0 %v2320
    %2780 = vmatprep.subr.bf16.mxu0 %v2324
    %2781 = vmatpush1.bf16.msra.mxu0 %v2323
    %2782 = vmatprep.subr.bf16.mxu0 %v2327
    %2783 = vmatpush1.bf16.msra.mxu0 %v2326
    %2784 = vmatprep.subr.bf16.mxu0 %v2330
    %2785 = vmatpush1.bf16.msra.mxu0 %v2329
    %2786 = vmatprep.subr.bf16.mxu0 %v2333
    %2787 = vmatpush1.bf16.msra.mxu0 %v2332
    %2788 = vmatprep.subr.bf16.mxu0 %v2336
    %2789 = vmatpush1.bf16.msra.mxu0 %v2335
    %2790 = vmatprep.subr.bf16.mxu0 %v2339
    %2791 = vmatpush1.bf16.msra.mxu0 %v2338
    %2792 = vmatprep.subr.bf16.mxu0 0
    %2793 = vmatpush1.bf16.msra.mxu0 0
    %2794 = vmatprep.subr.bf16.mxu0 0
    %2795 = vmatpush1.bf16.msra.mxu0 0
    %2796 = vmatprep.subr.bf16.mxu0 0
    %2797 = vmatpush1.bf16.msra.mxu0 0
    %2798 = vmatprep.subr.bf16.mxu0 0
    %2799 = vmatpush1.bf16.msra.mxu0 0
    %2800 = vmatprep.subr.bf16.mxu0 0
    %2801 = vmatpush1.bf16.msra.mxu0 0
    %2802 = vmatprep.subr.bf16.mxu0 0
    %2803 = vmatpush1.bf16.msra.mxu0 0
    %2804 = vmatprep.subr.bf16.mxu0 0
    %2805 = vmatpush1.bf16.msra.mxu0 0
    %2806 = vmatprep.subr.bf16.mxu0 0
    %2807 = vmatpush1.bf16.msra.mxu0 0
    %2808 = vmatprep.mubr.bf16.mxu0 0
    %2809 = vmatmul.mubr.bf16.gmra.mrb[0].mxu0 %v2769
    %v2810 = vpop.f32.mrb[0].mxu0
    %v2811 = vadd.f32 0.0, %v2810
    %v2812 = vpop.f32.mrb[0].mxu0
    %v2813 = vadd.f32 0.0, %v2812
    %v2814 = vpop.f32.mrb[0].mxu0
    %v2815 = vadd.f32 0.0, %v2814
    %v2816 = vpop.f32.mrb[0].mxu0
    %v2817 = vadd.f32 0.0, %v2816
    %2818 = vdwg.mxu0
    %2819 = vmatprep.subr.bf16.mxu0 0
    %2820 = vmatpush1.bf16.msra.mxu0 %v2319
    %2821 = vmatprep.subr.bf16.mxu0 0
    %2822 = vmatpush1.bf16.msra.mxu0 %v2322
    %2823 = vmatprep.subr.bf16.mxu0 0
    %2824 = vmatpush1.bf16.msra.mxu0 %v2325
    %2825 = vmatprep.subr.bf16.mxu0 0
    %2826 = vmatpush1.bf16.msra.mxu0 %v2328
    %2827 = vmatprep.subr.bf16.mxu0 0
    %2828 = vmatpush1.bf16.msra.mxu0 %v2331
    %2829 = vmatprep.subr.bf16.mxu0 0
    %2830 = vmatpush1.bf16.msra.mxu0 %v2334
    %2831 = vmatprep.subr.bf16.mxu0 0
    %2832 = vmatpush1.bf16.msra.mxu0 %v2337
    %2833 = vmatprep.subr.bf16.mxu0 0
    %2834 = vmatpush1.bf16.msra.mxu0 %v2340
    %2835 = vmatprep.subr.bf16.mxu0 0
    %2836 = vmatpush1.bf16.msra.mxu0 0
    %2837 = vmatprep.subr.bf16.mxu0 0
    %2838 = vmatpush1.bf16.msra.mxu0 0
    %2839 = vmatprep.subr.bf16.mxu0 0
    %2840 = vmatpush1.bf16.msra.mxu0 0
    %2841 = vmatprep.subr.bf16.mxu0 0
    %2842 = vmatpush1.bf16.msra.mxu0 0
    %2843 = vmatprep.subr.bf16.mxu0 0
    %2844 = vmatpush1.bf16.msra.mxu0 0
    %2845 = vmatprep.subr.bf16.mxu0 0
    %2846 = vmatpush1.bf16.msra.mxu0 0
    %2847 = vmatprep.subr.bf16.mxu0 0
    %2848 = vmatpush1.bf16.msra.mxu0 0
    %2849 = vmatprep.subr.bf16.mxu0 0
    %2850 = vmatpush1.bf16.msra.mxu0 0
    %2851 = vmatprep.mubr.bf16.mxu0 0
    %2852 = vmatmul.mubr.bf16.gmra.mrb[0].mxu0 %v2769
    %v2853 = vpop.f32.mrb[0].mxu0
    %v2854 = vadd.f32 0.0, %v2853
    %v2855 = vpop.f32.mrb[0].mxu0
    %v2856 = vpop.f32.mrb[0].mxu0
    %v2857 = vadd.f32 0.0, %v2856
    %v2858 = vpop.f32.mrb[0].mxu0
    %2859 = vdwg.mxu0
    %v2860 = vadd.f32 %v2770, %v2811
    %v2861 = vadd.f32 %v2773, %v2815
    %v2862 = vxor.u32 %v2860, 2147483648
    %v2863 = vxor.u32 %v2861, 2147483648
    %v2864 = vmul.f32 %v2862, 1.442695
    %v2865 = vpow.pop %v2864
    %v2866 = vmul.f32 %v2863, 1.442695
    %v2867 = vpow.pop %v2866
    %v2868 = vadd.f32 %v2865, 1.0
    %v2869 = vadd.f32 %v2867, 1.0
    %v2870 = vrcp.pop %v2868
    %v2871 = vmul.f32 1.0, %v2870
    %v2872 = vrcp.pop %v2869
    %v2873 = vmul.f32 1.0, %v2872
    %v2874 = vadd.f32 %v2771, %v2813
    %v2875 = vadd.f32 %v2774, %v2817
    %v2876 = vxor.u32 %v2874, 2147483648
    %v2877 = vxor.u32 %v2875, 2147483648
    %v2878 = vmul.f32 %v2876, 1.442695
    %v2879 = vpow.pop %v2878
    %v2880 = vmul.f32 %v2877, 1.442695
    %v2881 = vpow.pop %v2880
    %v2882 = vadd.f32 %v2879, 1.0
    %v2883 = vadd.f32 %v2881, 1.0
    %v2884 = vrcp.pop %v2882
    %v2885 = vmul.f32 1.0, %v2884
    %v2886 = vrcp.pop %v2883
    %v2887 = vmul.f32 1.0, %v2886
    %v2888 = vadd.f32 %v2854, %v2481
    %v2889 = vadd.f32 %v2857, %v2481
    %v2890 = vmul.f32 %v2871, %v2888
    %v2891 = vmul.f32 %v2873, %v2889
    %v2892 = vadd.f32 %v2772, %v2890
    %v2893 = vadd.f32 %v2775, %v2891
    %v2894 = vtanh.pop %v2892
    %v2895 = vtanh.pop %v2893
    %v2896 = vsub.f32 1.0, %v2885
    %v2897 = vsub.f32 1.0, %v2887
    %v2898 = vmul.f32 %v2896, %v2894
    %v2899 = vmul.f32 %v2897, %v2895
    %v2900 = vmul.f32 %v2885, %v2767
    %v2901 = vmul.f32 %v2887, %v2768
    %v2902 = vadd.f32 %v2898, %v2900
    %v2903 = vadd.f32 %v2899, %v2901
    %v2904 = vpack.c.bf16 %v2903, %v2902
    %v2905 = vld [vmem:[#allocation2 + $0xc0] sm:$0xff]
    %v2906 = vld [vmem:[#allocation2 + $0xc8] sm:$0xff]
    %v2907 = vld [vmem:[#allocation2 + $0xd0] sm:$0xff]
    %v2908 = vld [vmem:[#allocation2 + $0xd8] sm:$0xff]
    %v2909 = vld [vmem:[#allocation2 + $0xe0] sm:$0xff]
    %v2910 = vld [vmem:[#allocation2 + $0xe8] sm:$0xff]
    %2911 = vmatprep.subr.bf16.mxu0 %v2318
    %2912 = vmatpush1.bf16.msra.mxu0 %v2317
    %2913 = vmatprep.subr.bf16.mxu0 %v2321
    %2914 = vmatpush1.bf16.msra.mxu0 %v2320
    %2915 = vmatprep.subr.bf16.mxu0 %v2324
    %2916 = vmatpush1.bf16.msra.mxu0 %v2323
    %2917 = vmatprep.subr.bf16.mxu0 %v2327
    %2918 = vmatpush1.bf16.msra.mxu0 %v2326
    %2919 = vmatprep.subr.bf16.mxu0 %v2330
    %2920 = vmatpush1.bf16.msra.mxu0 %v2329
    %2921 = vmatprep.subr.bf16.mxu0 %v2333
    %2922 = vmatpush1.bf16.msra.mxu0 %v2332
    %2923 = vmatprep.subr.bf16.mxu0 %v2336
    %2924 = vmatpush1.bf16.msra.mxu0 %v2335
    %2925 = vmatprep.subr.bf16.mxu0 %v2339
    %2926 = vmatpush1.bf16.msra.mxu0 %v2338
    %2927 = vmatprep.subr.bf16.mxu0 0
    %2928 = vmatpush1.bf16.msra.mxu0 0
    %2929 = vmatprep.subr.bf16.mxu0 0
    %2930 = vmatpush1.bf16.msra.mxu0 0
    %2931 = vmatprep.subr.bf16.mxu0 0
    %2932 = vmatpush1.bf16.msra.mxu0 0
    %2933 = vmatprep.subr.bf16.mxu0 0
    %2934 = vmatpush1.bf16.msra.mxu0 0
    %2935 = vmatprep.subr.bf16.mxu0 0
    %2936 = vmatpush1.bf16.msra.mxu0 0
    %2937 = vmatprep.subr.bf16.mxu0 0
    %2938 = vmatpush1.bf16.msra.mxu0 0
    %2939 = vmatprep.subr.bf16.mxu0 0
    %2940 = vmatpush1.bf16.msra.mxu0 0
    %2941 = vmatprep.subr.bf16.mxu0 0
    %2942 = vmatpush1.bf16.msra.mxu0 0
    %2943 = vmatprep.mubr.bf16.mxu0 0
    %2944 = vmatmul.mubr.bf16.gmra.mrb[0].mxu0 %v2904
    %v2945 = vpop.f32.mrb[0].mxu0
    %v2946 = vadd.f32 0.0, %v2945
    %v2947 = vpop.f32.mrb[0].mxu0
    %v2948 = vadd.f32 0.0, %v2947
    %v2949 = vpop.f32.mrb[0].mxu0
    %v2950 = vadd.f32 0.0, %v2949
    %v2951 = vpop.f32.mrb[0].mxu0
    %v2952 = vadd.f32 0.0, %v2951
    %2953 = vdwg.mxu0
    %2954 = vmatprep.subr.bf16.mxu0 0
    %2955 = vmatpush1.bf16.msra.mxu0 %v2319
    %2956 = vmatprep.subr.bf16.mxu0 0
    %2957 = vmatpush1.bf16.msra.mxu0 %v2322
    %2958 = vmatprep.subr.bf16.mxu0 0
    %2959 = vmatpush1.bf16.msra.mxu0 %v2325
    %2960 = vmatprep.subr.bf16.mxu0 0
    %2961 = vmatpush1.bf16.msra.mxu0 %v2328
    %2962 = vmatprep.subr.bf16.mxu0 0
    %2963 = vmatpush1.bf16.msra.mxu0 %v2331
    %2964 = vmatprep.subr.bf16.mxu0 0
    %2965 = vmatpush1.bf16.msra.mxu0 %v2334
    %2966 = vmatprep.subr.bf16.mxu0 0
    %2967 = vmatpush1.bf16.msra.mxu0 %v2337
    %2968 = vmatprep.subr.bf16.mxu0 0
    %2969 = vmatpush1.bf16.msra.mxu0 %v2340
    %2970 = vmatprep.subr.bf16.mxu0 0
    %2971 = vmatpush1.bf16.msra.mxu0 0
    %2972 = vmatprep.subr.bf16.mxu0 0
    %2973 = vmatpush1.bf16.msra.mxu0 0
    %2974 = vmatprep.subr.bf16.mxu0 0
    %2975 = vmatpush1.bf16.msra.mxu0 0
    %2976 = vmatprep.subr.bf16.mxu0 0
    %2977 = vmatpush1.bf16.msra.mxu0 0
    %2978 = vmatprep.subr.bf16.mxu0 0
    %2979 = vmatpush1.bf16.msra.mxu0 0
    %2980 = vmatprep.subr.bf16.mxu0 0
    %2981 = vmatpush1.bf16.msra.mxu0 0
    %2982 = vmatprep.subr.bf16.mxu0 0
    %2983 = vmatpush1.bf16.msra.mxu0 0
    %2984 = vmatprep.subr.bf16.mxu0 0
    %2985 = vmatpush1.bf16.msra.mxu0 0
    %2986 = vmatprep.mubr.bf16.mxu0 0
    %2987 = vmatmul.mubr.bf16.gmra.mrb[0].mxu0 %v2904
    %v2988 = vpop.f32.mrb[0].mxu0
    %v2989 = vadd.f32 0.0, %v2988
    %v2990 = vpop.f32.mrb[0].mxu0
    %v2991 = vpop.f32.mrb[0].mxu0
    %v2992 = vadd.f32 0.0, %v2991
    %v2993 = vpop.f32.mrb[0].mxu0
    %2994 = vdwg.mxu0
    %v2995 = vadd.f32 %v2905, %v2946
    %v2996 = vadd.f32 %v2908, %v2950
    %v2997 = vxor.u32 %v2995, 2147483648
    %v2998 = vxor.u32 %v2996, 2147483648
    %v2999 = vmul.f32 %v2997, 1.442695
    %v3000 = vpow.pop %v2999
    %v3001 = vmul.f32 %v2998, 1.442695
    %v3002 = vpow.pop %v3001
    %v3003 = vadd.f32 %v3000, 1.0
    %v3004 = vadd.f32 %v3002, 1.0
    %v3005 = vrcp.pop %v3003
    %v3006 = vmul.f32 1.0, %v3005
    %v3007 = vrcp.pop %v3004
    %v3008 = vmul.f32 1.0, %v3007
    %v3009 = vadd.f32 %v2906, %v2948
    %v3010 = vadd.f32 %v2909, %v2952
    %v3011 = vxor.u32 %v3009, 2147483648
    %v3012 = vxor.u32 %v3010, 2147483648
    %v3013 = vmul.f32 %v3011, 1.442695
    %v3014 = vpow.pop %v3013
    %v3015 = vmul.f32 %v3012, 1.442695
    %v3016 = vpow.pop %v3015
    %v3017 = vadd.f32 %v3014, 1.0
    %v3018 = vadd.f32 %v3016, 1.0
    %v3019 = vrcp.pop %v3017
    %v3020 = vmul.f32 1.0, %v3019
    %v3021 = vrcp.pop %v3018
    %v3022 = vmul.f32 1.0, %v3021
    %v3023 = vadd.f32 %v2989, %v2481
    %v3024 = vadd.f32 %v2992, %v2481
    %v3025 = vmul.f32 %v3006, %v3023
    %v3026 = vmul.f32 %v3008, %v3024
    %v3027 = vadd.f32 %v2907, %v3025
    %v3028 = vadd.f32 %v2910, %v3026
    %v3029 = vtanh.pop %v3027
    %v3030 = vtanh.pop %v3028
    %v3031 = vsub.f32 1.0, %v3020
    %v3032 = vsub.f32 1.0, %v3022
    %v3033 = vmul.f32 %v3031, %v3029
    %v3034 = vmul.f32 %v3032, %v3030
    %v3035 = vmul.f32 %v3020, %v2902
    %v3036 = vmul.f32 %v3022, %v2903
    %v3037 = vadd.f32 %v3033, %v3035
    %v3038 = vadd.f32 %v3034, %v3036
    %v3039 = vpack.c.bf16 %v3038, %v3037
    %v3040 = vld [vmem:[#allocation2 + $0xf0] sm:$0xff]
    %v3041 = vld [vmem:[#allocation2 + $0xf8] sm:$0xff]
    %v3042 = vld [vmem:[#allocation2 + $0x100] sm:$0xff]
    %v3043 = vld [vmem:[#allocation2 + $0x108] sm:$0xff]
    %v3044 = vld [vmem:[#allocation2 + $0x110] sm:$0xff]
    %v3045 = vld [vmem:[#allocation2 + $0x118] sm:$0xff]
    %3046 = vmatprep.subr.bf16.mxu0 %v2318
    %3047 = vmatpush1.bf16.msra.mxu0 %v2317
    %3048 = vmatprep.subr.bf16.mxu0 %v2321
    %3049 = vmatpush1.bf16.msra.mxu0 %v2320
    %3050 = vmatprep.subr.bf16.mxu0 %v2324
    %3051 = vmatpush1.bf16.msra.mxu0 %v2323
    %3052 = vmatprep.subr.bf16.mxu0 %v2327
    %3053 = vmatpush1.bf16.msra.mxu0 %v2326
    %3054 = vmatprep.subr.bf16.mxu0 %v2330
    %3055 = vmatpush1.bf16.msra.mxu0 %v2329
    %3056 = vmatprep.subr.bf16.mxu0 %v2333
    %3057 = vmatpush1.bf16.msra.mxu0 %v2332
    %3058 = vmatprep.subr.bf16.mxu0 %v2336
    %3059 = vmatpush1.bf16.msra.mxu0 %v2335
    %3060 = vmatprep.subr.bf16.mxu0 %v2339
    %3061 = vmatpush1.bf16.msra.mxu0 %v2338
    %3062 = vmatprep.subr.bf16.mxu0 0
    %3063 = vmatpush1.bf16.msra.mxu0 0
    %3064 = vmatprep.subr.bf16.mxu0 0
    %3065 = vmatpush1.bf16.msra.mxu0 0
    %3066 = vmatprep.subr.bf16.mxu0 0
    %3067 = vmatpush1.bf16.msra.mxu0 0
    %3068 = vmatprep.subr.bf16.mxu0 0
    %3069 = vmatpush1.bf16.msra.mxu0 0
    %3070 = vmatprep.subr.bf16.mxu0 0
    %3071 = vmatpush1.bf16.msra.mxu0 0
    %3072 = vmatprep.subr.bf16.mxu0 0
    %3073 = vmatpush1.bf16.msra.mxu0 0
    %3074 = vmatprep.subr.bf16.mxu0 0
    %3075 = vmatpush1.bf16.msra.mxu0 0
    %3076 = vmatprep.subr.bf16.mxu0 0
    %3077 = vmatpush1.bf16.msra.mxu0 0
    %3078 = vmatprep.mubr.bf16.mxu0 0
    %3079 = vmatmul.mubr.bf16.gmra.mrb[0].mxu0 %v3039
    %v3080 = vpop.f32.mrb[0].mxu0
    %v3081 = vadd.f32 0.0, %v3080
    %v3082 = vpop.f32.mrb[0].mxu0
    %v3083 = vadd.f32 0.0, %v3082
    %v3084 = vpop.f32.mrb[0].mxu0
    %v3085 = vadd.f32 0.0, %v3084
    %v3086 = vpop.f32.mrb[0].mxu0
    %v3087 = vadd.f32 0.0, %v3086
    %3088 = vdwg.mxu0
    %3089 = vmatprep.subr.bf16.mxu0 0
    %3090 = vmatpush1.bf16.msra.mxu0 %v2319
    %3091 = vmatprep.subr.bf16.mxu0 0
    %3092 = vmatpush1.bf16.msra.mxu0 %v2322
    %3093 = vmatprep.subr.bf16.mxu0 0
    %3094 = vmatpush1.bf16.msra.mxu0 %v2325
    %3095 = vmatprep.subr.bf16.mxu0 0
    %3096 = vmatpush1.bf16.msra.mxu0 %v2328
    %3097 = vmatprep.subr.bf16.mxu0 0
    %3098 = vmatpush1.bf16.msra.mxu0 %v2331
    %3099 = vmatprep.subr.bf16.mxu0 0
    %3100 = vmatpush1.bf16.msra.mxu0 %v2334
    %3101 = vmatprep.subr.bf16.mxu0 0
    %3102 = vmatpush1.bf16.msra.mxu0 %v2337
    %3103 = vmatprep.subr.bf16.mxu0 0
    %3104 = vmatpush1.bf16.msra.mxu0 %v2340
    %3105 = vmatprep.subr.bf16.mxu0 0
    %3106 = vmatpush1.bf16.msra.mxu0 0
    %3107 = vmatprep.subr.bf16.mxu0 0
    %3108 = vmatpush1.bf16.msra.mxu0 0
    %3109 = vmatprep.subr.bf16.mxu0 0
    %3110 = vmatpush1.bf16.msra.mxu0 0
    %3111 = vmatprep.subr.bf16.mxu0 0
    %3112 = vmatpush1.bf16.msra.mxu0 0
    %3113 = vmatprep.subr.bf16.mxu0 0
    %3114 = vmatpush1.bf16.msra.mxu0 0
    %3115 = vmatprep.subr.bf16.mxu0 0
    %3116 = vmatpush1.bf16.msra.mxu0 0
    %3117 = vmatprep.subr.bf16.mxu0 0
    %3118 = vmatpush1.bf16.msra.mxu0 0
    %3119 = vmatprep.subr.bf16.mxu0 0
    %3120 = vmatpush1.bf16.msra.mxu0 0
    %3121 = vmatprep.mubr.bf16.mxu0 0
    %3122 = vmatmul.mubr.bf16.gmra.mrb[0].mxu0 %v3039
    %v3123 = vpop.f32.mrb[0].mxu0
    %v3124 = vadd.f32 0.0, %v3123
    %v3125 = vpop.f32.mrb[0].mxu0
    %v3126 = vpop.f32.mrb[0].mxu0
    %v3127 = vadd.f32 0.0, %v3126
    %v3128 = vpop.f32.mrb[0].mxu0
    %3129 = vdwg.mxu0
    %v3130 = vadd.f32 %v3040, %v3081
    %v3131 = vadd.f32 %v3043, %v3085
    %v3132 = vxor.u32 %v3130, 2147483648
    %v3133 = vxor.u32 %v3131, 2147483648
    %v3134 = vmul.f32 %v3132, 1.442695
    %v3135 = vpow.pop %v3134
    %v3136 = vmul.f32 %v3133, 1.442695
    %v3137 = vpow.pop %v3136
    %v3138 = vadd.f32 %v3135, 1.0
    %v3139 = vadd.f32 %v3137, 1.0
    %v3140 = vrcp.pop %v3138
    %v3141 = vmul.f32 1.0, %v3140
    %v3142 = vrcp.pop %v3139
    %v3143 = vmul.f32 1.0, %v3142
    %v3144 = vadd.f32 %v3041, %v3083
    %v3145 = vadd.f32 %v3044, %v3087
    %v3146 = vxor.u32 %v3144, 2147483648
    %v3147 = vxor.u32 %v3145, 2147483648
    %v3148 = vmul.f32 %v3146, 1.442695
    %v3149 = vpow.pop %v3148
    %v3150 = vmul.f32 %v3147, 1.442695
    %v3151 = vpow.pop %v3150
    %v3152 = vadd.f32 %v3149, 1.0
    %v3153 = vadd.f32 %v3151, 1.0
    %v3154 = vrcp.pop %v3152
    %v3155 = vmul.f32 1.0, %v3154
    %v3156 = vrcp.pop %v3153
    %v3157 = vmul.f32 1.0, %v3156
    %v3158 = vadd.f32 %v3124, %v2481
    %v3159 = vadd.f32 %v3127, %v2481
    %v3160 = vmul.f32 %v3141, %v3158
    %v3161 = vmul.f32 %v3143, %v3159
    %v3162 = vadd.f32 %v3042, %v3160
    %v3163 = vadd.f32 %v3045, %v3161
    %v3164 = vtanh.pop %v3162
    %v3165 = vtanh.pop %v3163
    %v3166 = vsub.f32 1.0, %v3155
    %v3167 = vsub.f32 1.0, %v3157
    %v3168 = vmul.f32 %v3166, %v3164
    %v3169 = vmul.f32 %v3167, %v3165
    %v3170 = vmul.f32 %v3155, %v3037
    %v3171 = vmul.f32 %v3157, %v3038
    %v3172 = vadd.f32 %v3168, %v3170
    %v3173 = vadd.f32 %v3169, %v3171
    %v3174 = vpack.c.bf16 %v3173, %v3172
    %v3175 = vld [vmem:[#allocation2 + $0x120] sm:$0xff]
    %v3176 = vld [vmem:[#allocation2 + $0x128] sm:$0xff]
    %v3177 = vld [vmem:[#allocation2 + $0x130] sm:$0xff]
    %v3178 = vld [vmem:[#allocation2 + $0x138] sm:$0xff]
    %v3179 = vld [vmem:[#allocation2 + $0x140] sm:$0xff]
    %v3180 = vld [vmem:[#allocation2 + $0x148] sm:$0xff]
    %3181 = vmatprep.subr.bf16.mxu0 %v2318
    %3182 = vmatpush1.bf16.msra.mxu0 %v2317
    %3183 = vmatprep.subr.bf16.mxu0 %v2321
    %3184 = vmatpush1.bf16.msra.mxu0 %v2320
    %3185 = vmatprep.subr.bf16.mxu0 %v2324
    %3186 = vmatpush1.bf16.msra.mxu0 %v2323
    %3187 = vmatprep.subr.bf16.mxu0 %v2327
    %3188 = vmatpush1.bf16.msra.mxu0 %v2326
    %3189 = vmatprep.subr.bf16.mxu0 %v2330
    %3190 = vmatpush1.bf16.msra.mxu0 %v2329
    %3191 = vmatprep.subr.bf16.mxu0 %v2333
    %3192 = vmatpush1.bf16.msra.mxu0 %v2332
    %3193 = vmatprep.subr.bf16.mxu0 %v2336
    %3194 = vmatpush1.bf16.msra.mxu0 %v2335
    %3195 = vmatprep.subr.bf16.mxu0 %v2339
    %3196 = vmatpush1.bf16.msra.mxu0 %v2338
    %3197 = vmatprep.subr.bf16.mxu0 0
    %3198 = vmatpush1.bf16.msra.mxu0 0
    %3199 = vmatprep.subr.bf16.mxu0 0
    %3200 = vmatpush1.bf16.msra.mxu0 0
    %3201 = vmatprep.subr.bf16.mxu0 0
    %3202 = vmatpush1.bf16.msra.mxu0 0
    %3203 = vmatprep.subr.bf16.mxu0 0
    %3204 = vmatpush1.bf16.msra.mxu0 0
    %3205 = vmatprep.subr.bf16.mxu0 0
    %3206 = vmatpush1.bf16.msra.mxu0 0
    %3207 = vmatprep.subr.bf16.mxu0 0
    %3208 = vmatpush1.bf16.msra.mxu0 0
    %3209 = vmatprep.subr.bf16.mxu0 0
    %3210 = vmatpush1.bf16.msra.mxu0 0
    %3211 = vmatprep.subr.bf16.mxu0 0
    %3212 = vmatpush1.bf16.msra.mxu0 0
    %3213 = vmatprep.mubr.bf16.mxu0 0
    %3214 = vmatmul.mubr.bf16.gmra.mrb[0].mxu0 %v3174
    %v3215 = vpop.f32.mrb[0].mxu0
    %v3216 = vadd.f32 0.0, %v3215
    %v3217 = vpop.f32.mrb[0].mxu0
    %v3218 = vadd.f32 0.0, %v3217
    %v3219 = vpop.f32.mrb[0].mxu0
    %v3220 = vadd.f32 0.0, %v3219
    %v3221 = vpop.f32.mrb[0].mxu0
    %v3222 = vadd.f32 0.0, %v3221
    %3223 = vdwg.mxu0
    %3224 = vmatprep.subr.bf16.mxu0 0
    %3225 = vmatpush1.bf16.msra.mxu0 %v2319
    %3226 = vmatprep.subr.bf16.mxu0 0
    %3227 = vmatpush1.bf16.msra.mxu0 %v2322
    %3228 = vmatprep.subr.bf16.mxu0 0
    %3229 = vmatpush1.bf16.msra.mxu0 %v2325
    %3230 = vmatprep.subr.bf16.mxu0 0
    %3231 = vmatpush1.bf16.msra.mxu0 %v2328
    %3232 = vmatprep.subr.bf16.mxu0 0
    %3233 = vmatpush1.bf16.msra.mxu0 %v2331
    %3234 = vmatprep.subr.bf16.mxu0 0
    %3235 = vmatpush1.bf16.msra.mxu0 %v2334
    %3236 = vmatprep.subr.bf16.mxu0 0
    %3237 = vmatpush1.bf16.msra.mxu0 %v2337
    %3238 = vmatprep.subr.bf16.mxu0 0
    %3239 = vmatpush1.bf16.msra.mxu0 %v2340
    %3240 = vmatprep.subr.bf16.mxu0 0
    %3241 = vmatpush1.bf16.msra.mxu0 0
    %3242 = vmatprep.subr.bf16.mxu0 0
    %3243 = vmatpush1.bf16.msra.mxu0 0
    %3244 = vmatprep.subr.bf16.mxu0 0
    %3245 = vmatpush1.bf16.msra.mxu0 0
    %3246 = vmatprep.subr.bf16.mxu0 0
    %3247 = vmatpush1.bf16.msra.mxu0 0
    %3248 = vmatprep.subr.bf16.mxu0 0
    %3249 = vmatpush1.bf16.msra.mxu0 0
    %3250 = vmatprep.subr.bf16.mxu0 0
    %3251 = vmatpush1.bf16.msra.mxu0 0
    %3252 = vmatprep.subr.bf16.mxu0 0
    %3253 = vmatpush1.bf16.msra.mxu0 0
    %3254 = vmatprep.subr.bf16.mxu0 0
    %3255 = vmatpush1.bf16.msra.mxu0 0
    %3256 = vmatprep.mubr.bf16.mxu0 0
    %3257 = vmatmul.mubr.bf16.gmra.mrb[0].mxu0 %v3174
    %v3258 = vpop.f32.mrb[0].mxu0
    %v3259 = vadd.f32 0.0, %v3258
    %v3260 = vpop.f32.mrb[0].mxu0
    %v3261 = vpop.f32.mrb[0].mxu0
    %v3262 = vadd.f32 0.0, %v3261
    %v3263 = vpop.f32.mrb[0].mxu0
    %3264 = vdwg.mxu0
    %v3265 = vadd.f32 %v3175, %v3216
    %v3266 = vadd.f32 %v3178, %v3220
    %v3267 = vxor.u32 %v3265, 2147483648
    %v3268 = vxor.u32 %v3266, 2147483648
    %v3269 = vmul.f32 %v3267, 1.442695
    %v3270 = vpow.pop %v3269
    %v3271 = vmul.f32 %v3268, 1.442695
    %v3272 = vpow.pop %v3271
    %v3273 = vadd.f32 %v3270, 1.0
    %v3274 = vadd.f32 %v3272, 1.0
    %v3275 = vrcp.pop %v3273
    %v3276 = vmul.f32 1.0, %v3275
    %v3277 = vrcp.pop %v3274
    %v3278 = vmul.f32 1.0, %v3277
    %v3279 = vadd.f32 %v3176, %v3218
    %v3280 = vadd.f32 %v3179, %v3222
    %v3281 = vxor.u32 %v3279, 2147483648
    %v3282 = vxor.u32 %v3280, 2147483648
    %v3283 = vmul.f32 %v3281, 1.442695
    %v3284 = vpow.pop %v3283
    %v3285 = vmul.f32 %v3282, 1.442695
    %v3286 = vpow.pop %v3285
    %v3287 = vadd.f32 %v3284, 1.0
    %v3288 = vadd.f32 %v3286, 1.0
    %v3289 = vrcp.pop %v3287
    %v3290 = vmul.f32 1.0, %v3289
    %v3291 = vrcp.pop %v3288
    %v3292 = vmul.f32 1.0, %v3291
    %v3293 = vadd.f32 %v3259, %v2481
    %v3294 = vadd.f32 %v3262, %v2481
    %v3295 = vmul.f32 %v3276, %v3293
    %v3296 = vmul.f32 %v3278, %v3294
    %v3297 = vadd.f32 %v3177, %v3295
    %v3298 = vadd.f32 %v3180, %v3296
    %v3299 = vtanh.pop %v3297
    %v3300 = vtanh.pop %v3298
    %v3301 = vsub.f32 1.0, %v3290
    %v3302 = vsub.f32 1.0, %v3292
    %v3303 = vmul.f32 %v3301, %v3299
    %v3304 = vmul.f32 %v3302, %v3300
    %v3305 = vmul.f32 %v3290, %v3172
    %v3306 = vmul.f32 %v3292, %v3173
    %v3307 = vadd.f32 %v3303, %v3305
    %v3308 = vadd.f32 %v3304, %v3306
    %v3309 = vpack.c.bf16 %v3308, %v3307
    %v3310 = vld [vmem:[#allocation2 + $0x150] sm:$0xff]
    %v3311 = vld [vmem:[#allocation2 + $0x158] sm:$0xff]
    %v3312 = vld [vmem:[#allocation2 + $0x160] sm:$0xff]
    %v3313 = vld [vmem:[#allocation2 + $0x168] sm:$0xff]
    %v3314 = vld [vmem:[#allocation2 + $0x170] sm:$0xff]
    %v3315 = vld [vmem:[#allocation2 + $0x178] sm:$0xff]
    %3316 = vmatprep.subr.bf16.mxu0 %v2318
    %3317 = vmatpush1.bf16.msra.mxu0 %v2317
    %3318 = vmatprep.subr.bf16.mxu0 %v2321
    %3319 = vmatpush1.bf16.msra.mxu0 %v2320
    %3320 = vmatprep.subr.bf16.mxu0 %v2324
    %3321 = vmatpush1.bf16.msra.mxu0 %v2323
    %3322 = vmatprep.subr.bf16.mxu0 %v2327
    %3323 = vmatpush1.bf16.msra.mxu0 %v2326
    %3324 = vmatprep.subr.bf16.mxu0 %v2330
    %3325 = vmatpush1.bf16.msra.mxu0 %v2329
    %3326 = vmatprep.subr.bf16.mxu0 %v2333
    %3327 = vmatpush1.bf16.msra.mxu0 %v2332
    %3328 = vmatprep.subr.bf16.mxu0 %v2336
    %3329 = vmatpush1.bf16.msra.mxu0 %v2335
    %3330 = vmatprep.subr.bf16.mxu0 %v2339
    %3331 = vmatpush1.bf16.msra.mxu0 %v2338
    %3332 = vmatprep.subr.bf16.mxu0 0
    %3333 = vmatpush1.bf16.msra.mxu0 0
    %3334 = vmatprep.subr.bf16.mxu0 0
    %3335 = vmatpush1.bf16.msra.mxu0 0
    %3336 = vmatprep.subr.bf16.mxu0 0
    %3337 = vmatpush1.bf16.msra.mxu0 0
    %3338 = vmatprep.subr.bf16.mxu0 0
    %3339 = vmatpush1.bf16.msra.mxu0 0
    %3340 = vmatprep.subr.bf16.mxu0 0
    %3341 = vmatpush1.bf16.msra.mxu0 0
    %3342 = vmatprep.subr.bf16.mxu0 0
    %3343 = vmatpush1.bf16.msra.mxu0 0
    %3344 = vmatprep.subr.bf16.mxu0 0
    %3345 = vmatpush1.bf16.msra.mxu0 0
    %3346 = vmatprep.subr.bf16.mxu0 0
    %3347 = vmatpush1.bf16.msra.mxu0 0
    %3348 = vmatprep.mubr.bf16.mxu0 0
    %3349 = vmatmul.mubr.bf16.gmra.mrb[0].mxu0 %v3309
    %v3350 = vpop.f32.mrb[0].mxu0
    %v3351 = vadd.f32 0.0, %v3350
    %v3352 = vpop.f32.mrb[0].mxu0
    %v3353 = vadd.f32 0.0, %v3352
    %v3354 = vpop.f32.mrb[0].mxu0
    %v3355 = vadd.f32 0.0, %v3354
    %v3356 = vpop.f32.mrb[0].mxu0
    %v3357 = vadd.f32 0.0, %v3356
    %3358 = vdwg.mxu0
    %3359 = vmatprep.subr.bf16.mxu0 0
    %3360 = vmatpush1.bf16.msra.mxu0 %v2319
    %3361 = vmatprep.subr.bf16.mxu0 0
    %3362 = vmatpush1.bf16.msra.mxu0 %v2322
    %3363 = vmatprep.subr.bf16.mxu0 0
    %3364 = vmatpush1.bf16.msra.mxu0 %v2325
    %3365 = vmatprep.subr.bf16.mxu0 0
    %3366 = vmatpush1.bf16.msra.mxu0 %v2328
    %3367 = vmatprep.subr.bf16.mxu0 0
    %3368 = vmatpush1.bf16.msra.mxu0 %v2331
    %3369 = vmatprep.subr.bf16.mxu0 0
    %3370 = vmatpush1.bf16.msra.mxu0 %v2334
    %3371 = vmatprep.subr.bf16.mxu0 0
    %3372 = vmatpush1.bf16.msra.mxu0 %v2337
    %3373 = vmatprep.subr.bf16.mxu0 0
    %3374 = vmatpush1.bf16.msra.mxu0 %v2340
    %3375 = vmatprep.subr.bf16.mxu0 0
    %3376 = vmatpush1.bf16.msra.mxu0 0
    %3377 = vmatprep.subr.bf16.mxu0 0
    %3378 = vmatpush1.bf16.msra.mxu0 0
    %3379 = vmatprep.subr.bf16.mxu0 0
    %3380 = vmatpush1.bf16.msra.mxu0 0
    %3381 = vmatprep.subr.bf16.mxu0 0
    %3382 = vmatpush1.bf16.msra.mxu0 0
    %3383 = vmatprep.subr.bf16.mxu0 0
    %3384 = vmatpush1.bf16.msra.mxu0 0
    %3385 = vmatprep.subr.bf16.mxu0 0
    %3386 = vmatpush1.bf16.msra.mxu0 0
    %3387 = vmatprep.subr.bf16.mxu0 0
    %3388 = vmatpush1.bf16.msra.mxu0 0
    %3389 = vmatprep.subr.bf16.mxu0 0
    %3390 = vmatpush1.bf16.msra.mxu0 0
    %3391 = vmatprep.mubr.bf16.mxu0 0
    %3392 = vmatmul.mubr.bf16.gmra.mrb[0].mxu0 %v3309
    %v3393 = vpop.f32.mrb[0].mxu0
    %v3394 = vadd.f32 0.0, %v3393
    %v3395 = vpop.f32.mrb[0].mxu0
    %v3396 = vpop.f32.mrb[0].mxu0
    %v3397 = vadd.f32 0.0, %v3396
    %v3398 = vpop.f32.mrb[0].mxu0
    %3399 = vdwg.mxu0
    %v3400 = vadd.f32 %v3310, %v3351
    %v3401 = vadd.f32 %v3313, %v3355
    %v3402 = vxor.u32 %v3400, 2147483648
    %v3403 = vxor.u32 %v3401, 2147483648
    %v3404 = vmul.f32 %v3402, 1.442695
    %v3405 = vpow.pop %v3404
    %v3406 = vmul.f32 %v3403, 1.442695
    %v3407 = vpow.pop %v3406
    %v3408 = vadd.f32 %v3405, 1.0
    %v3409 = vadd.f32 %v3407, 1.0
    %v3410 = vrcp.pop %v3408
    %v3411 = vmul.f32 1.0, %v3410
    %v3412 = vrcp.pop %v3409
    %v3413 = vmul.f32 1.0, %v3412
    %v3414 = vadd.f32 %v3311, %v3353
    %v3415 = vadd.f32 %v3314, %v3357
    %v3416 = vxor.u32 %v3414, 2147483648
    %v3417 = vxor.u32 %v3415, 2147483648
    %v3418 = vmul.f32 %v3416, 1.442695
    %v3419 = vpow.pop %v3418
    %v3420 = vmul.f32 %v3417, 1.442695
    %v3421 = vpow.pop %v3420
    %v3422 = vadd.f32 %v3419, 1.0
    %v3423 = vadd.f32 %v3421, 1.0
    %v3424 = vrcp.pop %v3422
    %v3425 = vmul.f32 1.0, %v3424
    %v3426 = vrcp.pop %v3423
    %v3427 = vmul.f32 1.0, %v3426
    %v3428 = vadd.f32 %v3394, %v2481
    %v3429 = vadd.f32 %v3397, %v2481
    %v3430 = vmul.f32 %v3411, %v3428
    %v3431 = vmul.f32 %v3413, %v3429
    %v3432 = vadd.f32 %v3312, %v3430
    %v3433 = vadd.f32 %v3315, %v3431
    %v3434 = vtanh.pop %v3432
    %v3435 = vtanh.pop %v3433
    %v3436 = vsub.f32 1.0, %v3425
    %v3437 = vsub.f32 1.0, %v3427
    %v3438 = vmul.f32 %v3436, %v3434
    %v3439 = vmul.f32 %v3437, %v3435
    %v3440 = vmul.f32 %v3425, %v3307
    %v3441 = vmul.f32 %v3427, %v3308
    %v3442 = vadd.f32 %v3438, %v3440
    %v3443 = vadd.f32 %v3439, %v3441
    %v3444 = vpack.c.bf16 %v3443, %v3442
    %v3445 = vld [vmem:[%s9] sm:$0xf]
    %v3446 = vld [vmem:[%s9 + $0x4] sm:$0xf]
    %v3447 = vld [vmem:[%s9 + $0x8] sm:$0xf]
    %v3448 = vld [vmem:[%s9 + $0xc] sm:$0xf]
    %v3449 = vld [vmem:[%s9 + $0x10] sm:$0xf]
    %v3450 = vld [vmem:[%s9 + $0x14] sm:$0xf]
    %v3451 = vld [vmem:[%s9 + $0x18] sm:$0xf]
    %v3452 = vld [vmem:[%s9 + $0x1c] sm:$0xf]
    %v3453 = vld [vmem:[%s9 + $0x20] sm:$0xf]
    %v3454 = vld [vmem:[%s9 + $0x24] sm:$0xf]
    %v3455 = vld [vmem:[%s9 + $0x28] sm:$0xf]
    %v3456 = vld [vmem:[%s9 + $0x2c] sm:$0xf]
    %v3457 = vld [vmem:[%s9 + $0x30] sm:$0xf]
    %v3458 = vld [vmem:[%s9 + $0x34] sm:$0xf]
    %v3459 = vld [vmem:[%s9 + $0x38] sm:$0xf]
    %v3460 = vld [vmem:[%s9 + $0x3c] sm:$0xf]
    %v3461 = vld [vmem:[%s10] sm:$0x1]
    %v3463 = vlaneseq
    %v3464 = vshrl.u32 %v3463, 7
    %v3465 = vsub.s32 0, %v3464
    %v3466 = vrot.slane %v3461, %v3465
    %v3484 = vunpack.c.l.b16 %v3445
    %v3485 = vunpack.c.l.b16 %v3446
    %v3486 = vunpack.c.l.b16 %v3447
    %v3487 = vunpack.c.l.b16 %v3448
    %v3488 = vunpack.c.l.b16 %v3449
    %v3489 = vunpack.c.l.b16 %v3450
    %v3490 = vunpack.c.l.b16 %v3451
    %v3491 = vunpack.c.l.b16 %v3452
    %v3492 = vunpack.c.l.b16 %v3453
    %v3493 = vunpack.c.l.b16 %v3454
    %v3494 = vunpack.c.l.b16 %v3455
    %v3495 = vunpack.c.l.b16 %v3456
    %v3496 = vunpack.c.l.b16 %v3457
    %v3497 = vunpack.c.l.b16 %v3458
    %v3498 = vunpack.c.l.b16 %v3459
    %v3499 = vunpack.c.l.b16 %v3460
    %v3500 = vpack.c.b16 %v3485, %v3484
    %v3501 = vpack.c.b16 %v3487, %v3486
    %v3502 = vpack.c.b16 %v3489, %v3488
    %v3503 = vpack.c.b16 %v3491, %v3490
    %v3504 = vpack.c.b16 %v3493, %v3492
    %v3505 = vpack.c.b16 %v3495, %v3494
    %v3506 = vpack.c.b16 %v3497, %v3496
    %v3507 = vpack.c.b16 %v3499, %v3498
    %3516 = vmatprep.subr.bf16.mxu0 0
    %3517 = vmatpush1.bf16.msra.mxu0 %v3500
    %3518 = vmatprep.subr.bf16.mxu0 0
    %3519 = vmatpush1.bf16.msra.mxu0 %v3501
    %3520 = vmatprep.subr.bf16.mxu0 0
    %3521 = vmatpush1.bf16.msra.mxu0 %v3502
    %3522 = vmatprep.subr.bf16.mxu0 0
    %3523 = vmatpush1.bf16.msra.mxu0 %v3503
    %3524 = vmatprep.subr.bf16.mxu0 0
    %3525 = vmatpush1.bf16.msra.mxu0 %v3504
    %3526 = vmatprep.subr.bf16.mxu0 0
    %3527 = vmatpush1.bf16.msra.mxu0 %v3505
    %3528 = vmatprep.subr.bf16.mxu0 0
    %3529 = vmatpush1.bf16.msra.mxu0 %v3506
    %3530 = vmatprep.subr.bf16.mxu0 0
    %3531 = vmatpush1.bf16.msra.mxu0 %v3507
    %3532 = vmatprep.subr.bf16.mxu0 0
    %3533 = vmatpush1.bf16.msra.mxu0 0
    %3534 = vmatprep.subr.bf16.mxu0 0
    %3535 = vmatpush1.bf16.msra.mxu0 0
    %3536 = vmatprep.subr.bf16.mxu0 0
    %3537 = vmatpush1.bf16.msra.mxu0 0
    %3538 = vmatprep.subr.bf16.mxu0 0
    %3539 = vmatpush1.bf16.msra.mxu0 0
    %3540 = vmatprep.subr.bf16.mxu0 0
    %3541 = vmatpush1.bf16.msra.mxu0 0
    %3542 = vmatprep.subr.bf16.mxu0 0
    %3543 = vmatpush1.bf16.msra.mxu0 0
    %3544 = vmatprep.subr.bf16.mxu0 0
    %3545 = vmatpush1.bf16.msra.mxu0 0
    %3546 = vmatprep.subr.bf16.mxu0 0
    %3547 = vmatpush1.bf16.msra.mxu0 0
    %3548 = vmatprep.mubr.bf16.mxu0 0
    %3549 = vmatmul.mubr.bf16.gmra.mrb[0].mxu0 %v3444
    %v3550 = vpop.f32.mrb[0].mxu0
    %v3551 = vadd.f32 %v3466, %v3550
    %v3552 = vpop.f32.mrb[0].mxu0
    %v3553 = vpop.f32.mrb[0].mxu0
    %v3554 = vadd.f32 %v3466, %v3553
    %v3555 = vpop.f32.mrb[0].mxu0
    %3556 = vdwg.mxu0
    %3557 = vst [vmem:[#allocation13] sm:$0xff] %v3551
    %3558 = vst [vmem:[#allocation13 + $0x8] sm:$0xff] %v3554
    // Predicated region
    $region66: #{tpu_custom_call.1} parent=1 // pred_check
      _
    $region67: #{tpu_custom_call.1} parent=1 // pred_check_branch
      %3560 = sbr.rel (0) target = $region69
    $region68: #{tpu_custom_call.1} parent=1 // pred_region
      %s3562 = ssub.s32 256, 256
      %3563 = vsyncadd [#allocation6], %s3562
      %s3564 = sshll.u32 [#allocation13], 4
      %s3565 = int_to_ptr.vmem [resolvable:$true] %s3564
      %3570 = dma.vmem_to_hbm [thread:$0]  %s3565, 256, %s11, [#allocation6], 128, 128, 8
    $region69: #{tpu_custom_call.1} parent=1 // pred_fallthru
      _
    // Predicated region
    $region70: #{tpu_custom_call.1} parent=1 // pred_check
      _
    $region71: #{tpu_custom_call.1} parent=1 // pred_check_branch
      %3572 = sbr.rel (0) target = $region73
    $region72: #{tpu_custom_call.1} parent=1 // pred_region
      %3573 = dma.done [#allocation6], 256
    $region73: #{tpu_custom_call.1} parent=1 // pred_fallthru
      _
    %3574 = vsyncpa [#allocation5], 1
    %3575 = vsyncpa [#allocation8], 1
    %3576 = vsyncpa [#allocation11], 1
    %3577 = vsyncpa [#allocation6], 1

</llo_original>
